<compile_context>
chip_gen: v5e
topology: v5e:2x2
jax: 0.10.0
libtpu: 0.0.40
codegen_flags: <defaults>
</compile_context>

<pallas_src>
import functools

import numpy as np

import jax
import jax.numpy as jnp
from jax.experimental import pallas as pl
from jax.experimental.pallas import tpu as pltpu

EPS = 1e-5   # PyTorch BatchNorm2d default
LANE = 128   # TPU lane width


def _round_up(x, m):
    return (x + m - 1) // m * m


def _pick_row_tile(m, cap=1024):
    """Row tile for a flat (M, C) matmul pass.

    Prefers a clean divisor of M (no ragged tail).  If no reasonable divisor
    exists it falls back to `cap` with a cdiv grid + ragged last tile, so an
    unfriendly M (e.g. 8 * prime) cannot collapse the tile size (perf cliff).
    Granularity 16 keeps tiles sublane-aligned for both f32 and bf16.
    """
    cap = max(16, cap - cap % 16)
    if m <= cap:
        return m                       # single tile == full dim (always legal)
    for t in range(cap, 15, -16):
        if t >= cap // 2 and m % t == 0:
            return t                   # good divisor -> no ragged tail
    return cap                         # ragged last tile (OOB stores masked)


def _pick_strip_rows(ho, w, c1p, itemsize, target_bytes=2 * 1024 * 1024):
    """Output-row strip height for pass 2.

    Must divide Ho so the last strip's 2-row halo stays in bounds of y1.
    Capped by a per-strip VMEM budget and forced to give >= 2 strips per image
    when possible (pipelining / megacore sharding).
    """
    cap = max(1, min(ho, target_bytes // max(1, w * c1p * itemsize)))
    if ho > 1:
        cap = min(cap, max(1, ho // 2))
    for t in range(cap, 0, -1):
        if ho % t == 0:
            return t
    return 1


def _vmem_limit_bytes():
    # Per-generation scoped VMEM: ~3/4 of physical (96 MiB on v5e/v6e's
    # 128 MiB, 48 MiB on v7x's 64 MiB); conservative fallback if the query
    # API is unavailable.
    try:
        cap = int(pltpu.get_tpu_info().vmem_capacity_bytes)
    except Exception:
        cap = 64 * 1024 * 1024
    return min(cap * 3 // 4, 100 * 1024 * 1024)


# ---------------- Pass 1: conv1 (1x1 == 2-D matmul) + BN1 partial stats ------
def _conv1_stats_kernel(x_ref, w_ref, y_ref, st_ref, *, total_rows):
    # x_ref: [TM, Cin] (MXU dtype), w_ref: [Cin, C1p] (MXU dtype)
    # y_ref: [TM, C1p] (store dtype), st_ref: [1, 2, C1p] f32 (sum, sum-of-sq)
    tm = x_ref.shape[0]
    y = jnp.dot(x_ref[...], w_ref[...], preferred_element_type=jnp.float32)
    y_ref[...] = y.astype(y_ref.dtype)
    # Mask rows of a ragged last tile (cdiv grid) out of the BN1 batch stats.
    row = pl.program_id(0) * tm + jax.lax.broadcasted_iota(jnp.int32, (tm, 1), 0)
    yv = jnp.where(row < total_rows, y, 0.0)
    st_ref[0, 0:1, :] = jnp.sum(yv, axis=0, keepdims=True)
    st_ref[0, 1:2, :] = jnp.sum(yv * yv, axis=0, keepdims=True)


# ------ Pass 2: BN1 affine + ReLU + conv2 (9 shifted matmuls) + BN2 stats ----
def _bn1_relu_conv2_kernel(ym_ref, yh0_ref, yh1_ref, s1_ref, t1_ref, w2_ref,
                           z_ref, st_ref):
    # ym_ref : [1, TH, W, C1p]  output-row strip of y1        (store dtype)
    # yh0/yh1: [1, 1,  W, C1p]  2-row halo below the strip    (store dtype)
    # s1/t1  : [1, C1p] f32     BN1 scale / shift (global batch stats)
    # w2_ref : [3, 3, C1p, C2p] conv2 weights                 (MXU dtype)
    # z_ref  : [1, TH, Wo, C2p] conv2 output strip            (store dtype)
    # st_ref : [1, 2, C2p] f32  per-strip BN2 (sum, sum-of-squares)
    th, wo, c2p = z_ref.shape[1], z_ref.shape[2], z_ref.shape[3]
    a = jnp.concatenate([ym_ref[...], yh0_ref[...], yh1_ref[...]], axis=1)
    a = jnp.maximum(a.astype(jnp.float32) * s1_ref[...] + t1_ref[...], 0.0)
    a = a.astype(w2_ref.dtype)         # single cast to the MXU operand dtype
    # conv2 (3x3 VALID) as 9 shifted matmuls accumulated in f32 -- avoids the
    # materialized 9*C1-wide im2col temp and its concat/relayout traffic.
    acc = jnp.zeros((th, wo, c2p), jnp.float32)
    for kh in range(3):
        for kw in range(3):
            p = a[0, kh:kh + th, kw:kw + wo, :]          # [TH, Wo, C1p]
            acc += jnp.einsum('hwc,cd->hwd', p, w2_ref[kh, kw],
                              preferred_element_type=jnp.float32)
    z_ref[0] = acc.astype(z_ref.dtype)
    # BN2 partial stats from the f32 accumulator (not the bf16-stored output).
    st_ref[0, 0:1, :] = jnp.sum(acc, axis=(0, 1))[None, :]
    st_ref[0, 1:2, :] = jnp.sum(acc * acc, axis=(0, 1))[None, :]


# ---------------- Pass 3: conv3 (1x1, BN2 pre-folded) + final ReLU -----------
def _conv3_relu_kernel(z_ref, w_ref, b_ref, o_ref):
    # z_ref: [TM, C2p] (MXU dtype), w_ref: [C2p, Coutp] (MXU dtype, BN2 folded)
    # b_ref: [1, Coutp] f32, o_ref: [TM, Coutp] f32
    y = jnp.dot(z_ref[...], w_ref[...], preferred_element_type=jnp.float32)
    o_ref[...] = jnp.maximum(y + b_ref[...], 0.0).astype(o_ref.dtype)


@functools.partial(jax.jit, static_argnames=("strides", "mxu_dtype"))
def bottleneck_block_forward(x_nchw, params, strides=1, mxu_dtype=jnp.float32):
    """NCHW in / NCHW out.

    mxu_dtype=jnp.bfloat16 feeds bf16 MXU operands AND stores the inter-pass
    intermediates (y1, z2) in bf16 HBM; all BN statistics and elementwise math
    stay f32 (valid on v5e/v6e/v7x -- the MXU takes bf16 natively on all).
    """
    # TODO(synk): strides > 1 (downsampling conv1/conv2) not implemented.
    assert strides == 1, "only the stride-1 path is implemented"
    N, Cin, H, W = x_nchw.shape
    w1, b1, g1, be1, w2, b2, g2, be2, w3, b3 = params
    del b1, b2   # per-channel conv bias before training-mode BN cancels exactly

    C1, C2, Cout = w1.shape[0], w2.shape[0], w3.shape[0]
    Ho, Wo = H - 2, W - 2                       # conv2: 3x3, stride 1, VALID
    f32 = jnp.float32
    mxu = mxu_dtype                             # MXU operand dtype
    store = mxu                                 # HBM dtype of y1 / z2
    itemsize = np.dtype(mxu).itemsize

    # Lane-dense channel padding (multiples of 128).  No-op at real ResNet
    # channel counts; zero-padded channels stay exactly zero end-to-end
    # (padded gammas/betas/weights are zero => scale/shift zero).
    C1p, C2p, Coutp = (_round_up(c, LANE) for c in (C1, C2, Cout))

    def padc(a, axis, to):
        pad = [(0, 0)] * a.ndim
        pad[axis] = (0, to - a.shape[axis])
        return jnp.pad(a, pad)

    w1_k = padc(jnp.transpose(w1[:, :, 0, 0], (1, 0)).astype(f32), 1, C1p)
    w2_k = padc(padc(jnp.transpose(w2, (2, 3, 1, 0)).astype(f32), 2, C1p), 3, C2p)
    w3_k = padc(padc(jnp.transpose(w3[:, :, 0, 0], (1, 0)).astype(f32), 0, C2p),
                1, Coutp)
    g1p, be1p = padc(g1.astype(f32), 0, C1p), padc(be1.astype(f32), 0, C1p)
    g2p, be2p = padc(g2.astype(f32), 0, C2p), padc(be2.astype(f32), 0, C2p)
    b3p = padc(b3.astype(f32), 0, Coutp)

    # TODO(synk): fold this NCHW->NHWC layout change into pass 1 (in-kernel XLU
    # transpose) or keep the surrounding model NHWC end-to-end.
    x2d = jnp.transpose(x_nchw, (0, 2, 3, 1)).reshape(N * H * W, Cin).astype(mxu)

    vmem = _vmem_limit_bytes()

    def cparams(sems):
        return pltpu.CompilerParams(dimension_semantics=sems,
                                    vmem_limit_bytes=vmem)

    # ---------------- Pass 1: conv1 + BN1 partial stats ----------------------
    M = N * H * W
    TM = _pick_row_tile(M, cap=1024)
    n1 = pl.cdiv(M, TM)
    y1_2d, st1 = pl.pallas_call(
        functools.partial(_conv1_stats_kernel, total_rows=M),
        grid=(n1,),
        in_specs=[pl.BlockSpec((TM, Cin), lambda i: (i, 0)),
                  pl.BlockSpec((Cin, C1p), lambda i: (0, 0))],
        out_specs=(pl.BlockSpec((TM, C1p), lambda i: (i, 0)),
                   pl.BlockSpec((1, 2, C1p), lambda i: (i, 0, 0))),
        out_shape=(jax.ShapeDtypeStruct((M, C1p), store),
                   jax.ShapeDtypeStruct((n1, 2, C1p), f32)),
        compiler_params=cparams(("parallel",)),
    )(x2d, w1_k.astype(mxu))

    # Finalize BN1 from global batch stats (one-pass variance), O(C1) glue.
    sums1 = jnp.sum(st1, axis=0)
    mean1 = sums1[0] / M
    var1 = sums1[1] / M - mean1 * mean1
    s1 = g1p * jax.lax.rsqrt(var1 + EPS)
    t1 = be1p - mean1 * s1

    # ------------ Pass 2: BN1 affine + ReLU + conv2 + BN2 partial stats ------
    TH = _pick_strip_rows(Ho, W, C1p, itemsize)
    n_strips = Ho // TH
    y1_4d = y1_2d.reshape(N, H, W, C1p)
    z2, st2 = pl.pallas_call(
        _bn1_relu_conv2_kernel,
        grid=(N, n_strips),
        in_specs=[
            pl.BlockSpec((1, TH, W, C1p), lambda b, t: (b, t, 0, 0)),
            pl.BlockSpec((1, 1, W, C1p), lambda b, t: (b, (t + 1) * TH, 0, 0)),
            pl.BlockSpec((1, 1, W, C1p), lambda b, t: (b, (t + 1) * TH + 1, 0, 0)),
            pl.BlockSpec((1, C1p), lambda b, t: (0, 0)),
            pl.BlockSpec((1, C1p), lambda b, t: (0, 0)),
            pl.BlockSpec((3, 3, C1p, C2p), lambda b, t: (0, 0, 0, 0)),
        ],
        out_specs=(
            pl.BlockSpec((1, TH, Wo, C2p), lambda b, t: (b, t, 0, 0)),
            pl.BlockSpec((1, 2, C2p), lambda b, t: (b * n_strips + t, 0, 0)),
        ),
        out_shape=(jax.ShapeDtypeStruct((N, Ho, Wo, C2p), store),
                   jax.ShapeDtypeStruct((N * n_strips, 2, C2p), f32)),
        compiler_params=cparams(("parallel", "parallel")),
    )(y1_4d, y1_4d, y1_4d, s1.reshape(1, C1p), t1.reshape(1, C1p),
      w2_k.astype(mxu))

    # Finalize BN2 and fold it into conv3's weight / bias (O(C2*Cout) glue).
    M2 = N * Ho * Wo
    sums2 = jnp.sum(st2, axis=0)
    mean2 = sums2[0] / M2
    var2 = sums2[1] / M2 - mean2 * mean2
    s2 = g2p * jax.lax.rsqrt(var2 + EPS)
    t2 = be2p - mean2 * s2
    w3_f = (s2[:, None] * w3_k).astype(mxu)              # [C2p, Coutp]
    b3_f = (b3p + t2 @ w3_k).reshape(1, Coutp)           # stays f32

    # ---------------- Pass 3: conv3 (BN2 folded) + final ReLU ----------------
    TM3 = _pick_row_tile(M2, cap=1024)
    n3 = pl.cdiv(M2, TM3)
    out2d = pl.pallas_call(
        _conv3_relu_kernel,
        grid=(n3,),
        in_specs=[pl.BlockSpec((TM3, C2p), lambda i: (i, 0)),
                  pl.BlockSpec((C2p, Coutp), lambda i: (0, 0)),
                  pl.BlockSpec((1, Coutp), lambda i: (0, 0))],
        out_specs=pl.BlockSpec((TM3, Coutp), lambda i: (i, 0)),
        out_shape=jax.ShapeDtypeStruct((M2, Coutp), f32),
        compiler_params=cparams(("parallel",)),
    )(z2.reshape(M2, C2p), w3_f, b3_f)

    out = out2d.reshape(N, Ho, Wo, Coutp)[:, :, :, :Cout]
    return jnp.transpose(out, (0, 3, 1, 2))              # NHWC -> NCHW


# ---------------- pure-JAX reference (for correctness check) ----------------
def _ref_forward(x, params):
    w1, b1, g1, be1, w2, b2, g2, be2, w3, b3 = params

    def conv(x, w, b, stride):
        y = jax.lax.conv_general_dilated(
            x, w, (stride, stride), 'VALID',
            dimension_numbers=('NCHW', 'OIHW', 'NCHW'))
        return y + b[None, :, None, None]

    def bn(x, g, bta):
        mean = x.mean(axis=(0, 2, 3), keepdims=True)
        var = ((x - mean) ** 2).mean(axis=(0, 2, 3), keepdims=True)
        return (x - mean) / jnp.sqrt(var + EPS) * g[None, :, None, None] \
            + bta[None, :, None, None]

    y = jax.nn.relu(bn(conv(x, w1, b1, 1), g1, be1))
    y = bn(conv(y, w2, b2, 1), g2, be2)
    y = jax.nn.relu(conv(y, w3, b3, 1))
    return y


if __name__ == "__main__":
    # Module hyperparameters (small synthetic config).
    filters = 8
    first_num_filters = 4
    strides = 1
    C1 = first_num_filters * 2      # conv1 out = 8
    C2 = first_num_filters * 4      # conv2 out = 16
    Cout = filters                  # conv3 out = 8

    N, H, W = 2, 16, 16
    key = jax.random.PRNGKey(0)
    ks = jax.random.split(key, 12)

    x = jax.random.normal(ks[0], (N, filters, H, W), jnp.float32)

    # Deterministic synthetic parameters (PyTorch OIHW weight convention).
    params = (
        0.1 * jax.random.normal(ks[1], (C1, filters, 1, 1), jnp.float32),   # conv1 w
        0.1 * jax.random.normal(ks[2], (C1,), jnp.float32),                  # conv1 b
        1.0 + 0.1 * jax.random.normal(ks[3], (C1,), jnp.float32),            # bn1 gamma
        0.1 * jax.random.normal(ks[4], (C1,), jnp.float32),                  # bn1 beta
        0.1 * jax.random.normal(ks[5], (C2, C1, 3, 3), jnp.float32),         # conv2 w
        0.1 * jax.random.normal(ks[6], (C2,), jnp.float32),                  # conv2 b
        1.0 + 0.1 * jax.random.normal(ks[7], (C2,), jnp.float32),            # bn2 gamma
        0.1 * jax.random.normal(ks[8], (C2,), jnp.float32),                  # bn2 beta
        0.1 * jax.random.normal(ks[9], (Cout, C2, 1, 1), jnp.float32),       # conv3 w
        0.1 * jax.random.normal(ks[10], (Cout,), jnp.float32),               # conv3 b
    )

    ref = jax.block_until_ready(_ref_forward(x, params))

    # f32 MXU operands / f32 intermediates: strict check against the reference.
    out = jax.block_until_ready(
        bottleneck_block_forward(x, params, strides=strides,
                                 mxu_dtype=jnp.float32))
    assert out.shape == (N, Cout, H - 2, W - 2), out.shape
    assert jnp.allclose(out, ref, atol=1e-4, rtol=1e-4), \
        float(jnp.max(jnp.abs(out - ref)))

    # bf16 MXU operands + bf16 HBM intermediates (BN math stays f32).
    out_bf16 = jax.block_until_ready(
        bottleneck_block_forward(x, params, strides=strides,
                                 mxu_dtype=jnp.bfloat16))
    assert jnp.allclose(out_bf16, ref, atol=1e-1, rtol=1e-1), \
        float(jnp.max(jnp.abs(out_bf16 - ref)))

    print("KERNEL_OK")
</pallas_src>

<mosaic_0001>
module attributes {stable_mosaic.version = 11 : i64} {
  func.func @_conv1_stats_kernel(%arg0: i32, %arg1: memref<512x8xf32, #tpu.memory_space<vmem>>, %arg2: memref<8x128xf32, #tpu.memory_space<vmem>>, %arg3: memref<512x128xf32, #tpu.memory_space<vmem>>, %arg4: memref<1x2x128xf32, #tpu.memory_space<vmem>>) attributes {dimension_semantics = [#tpu.dimension_semantics<parallel>], iteration_bounds = array<i64: 1>, scalar_prefetch = 0 : i64, scratch_operands = 0 : i64, tpu.core_type = #tpu.core_type<tc>, window_params = [{transform_indices = @transform_0, window_bounds = array<i64: 512, 8>}, {pipeline_mode = #tpu.pipeline_mode<synchronous>, transform_indices = @transform_1, window_bounds = array<i64: 8, 128>}, {transform_indices = @transform_2, window_bounds = array<i64: 512, 128>}, {transform_indices = @transform_3, window_bounds = array<i64: 1, 2, 128>}]} {
    %c0 = arith.constant 0 : index
    %c0_0 = arith.constant 0 : index
    %0 = vector.load %arg1[%c0, %c0_0] : memref<512x8xf32, #tpu.memory_space<vmem>>, vector<512x8xf32>
    %c0_1 = arith.constant 0 : index
    %c0_2 = arith.constant 0 : index
    %1 = vector.load %arg2[%c0_1, %c0_2] : memref<8x128xf32, #tpu.memory_space<vmem>>, vector<8x128xf32>
    %cst = arith.constant dense<0.000000e+00> : vector<512x128xf32>
    %2 = tpu.matmul %0, %1, %cst {dimension_numbers = #tpu.dot_dimension_numbers<[1], [0], [0], [1], [0, 0, 1, 1], [], []>} : vector<512x8xf32>, vector<8x128xf32>, vector<512x128xf32> -> vector<512x128xf32>
    %c0_3 = arith.constant 0 : index
    %c0_4 = arith.constant 0 : index
    %3 = vector.load %arg3[%c0_3, %c0_4] : memref<512x128xf32, #tpu.memory_space<vmem>>, vector<512x128xf32>
    tpu.vector_store %arg3[%c0_3, %c0_4], %2 {strides = array<i32>} : memref<512x128xf32, #tpu.memory_space<vmem>>, vector<512x128xf32>,
    %c512_i32 = arith.constant 512 : i32
    %4 = arith.muli %arg0, %c512_i32 : i32
    %5 = tpu.iota {dimensions = array<i32: 0>} : vector<512x1xi32>
    %6 = vector.broadcast %4 : i32 to vector<512x1xi32>
    %7 = arith.addi %6, %5 : vector<512x1xi32>
    %c512_i32_5 = arith.constant 512 : i32
    %8 = vector.broadcast %c512_i32_5 : i32 to vector<512x1xi32>
    %9 = arith.cmpi slt, %7, %8 : vector<512x1xi32>
    %cst_6 = arith.constant 0.000000e+00 : f32
    %10 = vector.shape_cast %9 : vector<512x1xi1> to vector<512x1xi1>
    %11 = vector.broadcast %10 : vector<512x1xi1> to vector<512x128xi1>
    %12 = vector.broadcast %cst_6 : f32 to vector<512x128xf32>
    %13 = arith.select %11, %2, %12 : vector<512x128xi1>, vector<512x128xf32>
    %cst_7 = arith.constant dense<0.000000e+00> : vector<128xf32>
    %14 = vector.multi_reduction <add>, %13, %cst_7 [0] : vector<512x128xf32> to vector<128xf32>
    %15 = vector.shape_cast %14 : vector<128xf32> to vector<1x128xf32>
    %c0_8 = arith.constant 0 : index
    %c0_9 = arith.constant 0 : index
    %c0_10 = arith.constant 0 : index
    %16 = vector.load %arg4[%c0_8, %c0_9, %c0_10] : memref<1x2x128xf32, #tpu.memory_space<vmem>>, vector<1x1x128xf32>
    %17 = vector.shape_cast %16 : vector<1x1x128xf32> to vector<1x128xf32>
    %18 = vector.shape_cast %15 : vector<1x128xf32> to vector<1x1x128xf32>
    tpu.vector_store %arg4[%c0_8, %c0_9, %c0_10], %18 {strides = array<i32>} : memref<1x2x128xf32, #tpu.memory_space<vmem>>, vector<1x1x128xf32>,
    %19 = arith.mulf %13, %13 : vector<512x128xf32>
    %cst_11 = arith.constant dense<0.000000e+00> : vector<128xf32>
    %20 = vector.multi_reduction <add>, %19, %cst_11 [0] : vector<512x128xf32> to vector<128xf32>
    %21 = vector.shape_cast %20 : vector<128xf32> to vector<1x128xf32>
    %c0_12 = arith.constant 0 : index
    %c1 = arith.constant 1 : index
    %c0_13 = arith.constant 0 : index
    %22 = vector.load %arg4[%c0_12, %c1, %c0_13] : memref<1x2x128xf32, #tpu.memory_space<vmem>>, vector<1x1x128xf32>
    %23 = vector.shape_cast %22 : vector<1x1x128xf32> to vector<1x128xf32>
    %24 = vector.shape_cast %21 : vector<1x128xf32> to vector<1x1x128xf32>
    tpu.vector_store %arg4[%c0_12, %c1, %c0_13], %24 {strides = array<i32>} : memref<1x2x128xf32, #tpu.memory_space<vmem>>, vector<1x1x128xf32>,
    return
  }
  func.func @transform_0(%arg0: i32) -> (i32, i32) {
    %c0_i32 = arith.constant 0 : i32
    %c0_i32_0 = arith.constant 0 : i32
    return %arg0, %c0_i32 : i32, i32
  }
  func.func @transform_1(%arg0: i32) -> (i32, i32) {
    %c0_i32 = arith.constant 0 : i32
    %c0_i32_0 = arith.constant 0 : i32
    %c0_i32_1 = arith.constant 0 : i32
    return %c0_i32, %c0_i32_0 : i32, i32
  }
  func.func @transform_2(%arg0: i32) -> (i32, i32) {
    %c0_i32 = arith.constant 0 : i32
    %c0_i32_0 = arith.constant 0 : i32
    return %arg0, %c0_i32 : i32, i32
  }
  func.func @transform_3(%arg0: i32) -> (i32, i32, i32) {
    %c0_i32 = arith.constant 0 : i32
    %c0_i32_0 = arith.constant 0 : i32
    %c0_i32_1 = arith.constant 0 : i32
    return %arg0, %c0_i32, %c0_i32_0 : i32, i32, i32
  }
}

module attributes {stable_mosaic.version = 11 : i64} {
  func.func @_bn1_relu_conv2_kernel(%arg0: i32, %arg1: i32, %arg2: memref<1x7x16x128xf32, #tpu.memory_space<vmem>>, %arg3: memref<1x1x16x128xf32, #tpu.memory_space<vmem>>, %arg4: memref<1x1x16x128xf32, #tpu.memory_space<vmem>>, %arg5: memref<1x128xf32, #tpu.memory_space<vmem>>, %arg6: memref<1x128xf32, #tpu.memory_space<vmem>>, %arg7: memref<3x3x128x128xf32, #tpu.memory_space<vmem>>, %arg8: memref<1x7x14x128xf32, #tpu.memory_space<vmem>>, %arg9: memref<1x2x128xf32, #tpu.memory_space<vmem>>) attributes {dimension_semantics = [#tpu.dimension_semantics<parallel>, #tpu.dimension_semantics<parallel>], iteration_bounds = array<i64: 2, 2>, scalar_prefetch = 0 : i64, scratch_operands = 0 : i64, tpu.core_type = #tpu.core_type<tc>, window_params = [{transform_indices = @transform_0, window_bounds = array<i64: 1, 7, 16, 128>}, {transform_indices = @transform_1, window_bounds = array<i64: 1, 1, 16, 128>}, {transform_indices = @transform_2, window_bounds = array<i64: 1, 1, 16, 128>}, {pipeline_mode = #tpu.pipeline_mode<synchronous>, transform_indices = @transform_3, window_bounds = array<i64: 1, 128>}, {pipeline_mode = #tpu.pipeline_mode<synchronous>, transform_indices = @transform_4, window_bounds = array<i64: 1, 128>}, {pipeline_mode = #tpu.pipeline_mode<synchronous>, transform_indices = @transform_5, window_bounds = array<i64: 3, 3, 128, 128>}, {transform_indices = @transform_6, window_bounds = array<i64: 1, 7, 14, 128>}, {transform_indices = @transform_7, window_bounds = array<i64: 1, 2, 128>}]} {
    %c0 = arith.constant 0 : index
    %c0_0 = arith.constant 0 : index
    %c0_1 = arith.constant 0 : index
    %c0_2 = arith.constant 0 : index
    %0 = vector.load %arg2[%c0, %c0_0, %c0_1, %c0_2] : memref<1x7x16x128xf32, #tpu.memory_space<vmem>>, vector<1x7x16x128xf32>
    %c0_3 = arith.constant 0 : index
    %c0_4 = arith.constant 0 : index
    %c0_5 = arith.constant 0 : index
    %c0_6 = arith.constant 0 : index
    %1 = vector.load %arg3[%c0_3, %c0_4, %c0_5, %c0_6] : memref<1x1x16x128xf32, #tpu.memory_space<vmem>>, vector<1x1x16x128xf32>
    %c0_7 = arith.constant 0 : index
    %c0_8 = arith.constant 0 : index
    %c0_9 = arith.constant 0 : index
    %c0_10 = arith.constant 0 : index
    %2 = vector.load %arg4[%c0_7, %c0_8, %c0_9, %c0_10] : memref<1x1x16x128xf32, #tpu.memory_space<vmem>>, vector<1x1x16x128xf32>
    %3 = tpu.concatenate %0, %1, %2 in 1 : vector<1x7x16x128xf32>, vector<1x1x16x128xf32>, vector<1x1x16x128xf32> -> vector<1x9x16x128xf32>
    %c0_11 = arith.constant 0 : index
    %c0_12 = arith.constant 0 : index
    %4 = vector.load %arg5[%c0_11, %c0_12] : memref<1x128xf32, #tpu.memory_space<vmem>>, vector<1x128xf32>
    %5 = vector.shape_cast %4 : vector<1x128xf32> to vector<1x1x1x128xf32>
    %6 = vector.broadcast %5 : vector<1x1x1x128xf32> to vector<1x9x16x128xf32>
    %7 = arith.mulf %3, %6 : vector<1x9x16x128xf32>
    %c0_13 = arith.constant 0 : index
    %c0_14 = arith.constant 0 : index
    %8 = vector.load %arg6[%c0_13, %c0_14] : memref<1x128xf32, #tpu.memory_space<vmem>>, vector<1x128xf32>
    %9 = vector.shape_cast %8 : vector<1x128xf32> to vector<1x1x1x128xf32>
    %10 = vector.broadcast %9 : vector<1x1x1x128xf32> to vector<1x9x16x128xf32>
    %11 = arith.addf %7, %10 : vector<1x9x16x128xf32>
    %cst = arith.constant 0.000000e+00 : f32
    %12 = vector.broadcast %cst : f32 to vector<1x9x16x128xf32>
    %13 = arith.maximumf %11, %12 : vector<1x9x16x128xf32>
    %cst_15 = arith.constant 0.000000e+00 : f32
    %14 = vector.broadcast %cst_15 : f32 to vector<7x14x128xf32>
    %15 = vector.extract_strided_slice %13 {offsets = [0, 0, 0, 0], sizes = [1, 7, 14, 128], strides = [1, 1, 1, 1]} : vector<1x9x16x128xf32> to vector<1x7x14x128xf32>
    %16 = vector.shape_cast %15 : vector<1x7x14x128xf32> to vector<7x14x128xf32>
    %c0_16 = arith.constant 0 : index
    %c0_17 = arith.constant 0 : index
    %c0_18 = arith.constant 0 : index
    %c0_19 = arith.constant 0 : index
    %17 = vector.load %arg7[%c0_16, %c0_17, %c0_18, %c0_19] : memref<3x3x128x128xf32, #tpu.memory_space<vmem>>, vector<1x1x128x128xf32>
    %18 = vector.shape_cast %17 : vector<1x1x128x128xf32> to vector<128x128xf32>
    "tpu.trace_start"() <{level = 10 : i32, message = "hwc,cd->hwd"}> : () -> ()
    %cst_20 = arith.constant dense<0.000000e+00> : vector<7x14x128xf32>
    %19 = tpu.matmul %16, %18, %cst_20 {dimension_numbers = #tpu.dot_dimension_numbers<[2], [0], [0, 1], [1], [0, 0, 0, 1, 1, 1], [], []>} : vector<7x14x128xf32>, vector<128x128xf32>, vector<7x14x128xf32> -> vector<7x14x128xf32>
    "tpu.trace_stop"() : () -> ()
    %20 = arith.addf %14, %19 : vector<7x14x128xf32>
    %21 = vector.extract_strided_slice %13 {offsets = [0, 0, 1, 0], sizes = [1, 7, 14, 128], strides = [1, 1, 1, 1]} : vector<1x9x16x128xf32> to vector<1x7x14x128xf32>
    %22 = vector.shape_cast %21 : vector<1x7x14x128xf32> to vector<7x14x128xf32>
    %c0_21 = arith.constant 0 : index
    %c1 = arith.constant 1 : index
    %c0_22 = arith.constant 0 : index
    %c0_23 = arith.constant 0 : index
    %23 = vector.load %arg7[%c0_21, %c1, %c0_22, %c0_23] : memref<3x3x128x128xf32, #tpu.memory_space<vmem>>, vector<1x1x128x128xf32>
    %24 = vector.shape_cast %23 : vector<1x1x128x128xf32> to vector<128x128xf32>
    "tpu.trace_start"() <{level = 10 : i32, message = "hwc,cd->hwd"}> : () -> ()
    %cst_24 = arith.constant dense<0.000000e+00> : vector<7x14x128xf32>
    %25 = tpu.matmul %22, %24, %cst_24 {dimension_numbers = #tpu.dot_dimension_numbers<[2], [0], [0, 1], [1], [0, 0, 0, 1, 1, 1], [], []>} : vector<7x14x128xf32>, vector<128x128xf32>, vector<7x14x128xf32> -> vector<7x14x128xf32>
    "tpu.trace_stop"() : () -> ()
    %26 = arith.addf %20, %25 : vector<7x14x128xf32>
    %27 = vector.extract_strided_slice %13 {offsets = [0, 0, 2, 0], sizes = [1, 7, 14, 128], strides = [1, 1, 1, 1]} : vector<1x9x16x128xf32> to vector<1x7x14x128xf32>
    %28 = vector.shape_cast %27 : vector<1x7x14x128xf32> to vector<7x14x128xf32>
    %c0_25 = arith.constant 0 : index
    %c2 = arith.constant 2 : index
    %c0_26 = arith.constant 0 : index
    %c0_27 = arith.constant 0 : index
    %29 = vector.load %arg7[%c0_25, %c2, %c0_26, %c0_27] : memref<3x3x128x128xf32, #tpu.memory_space<vmem>>, vector<1x1x128x128xf32>
    %30 = vector.shape_cast %29 : vector<1x1x128x128xf32> to vector<128x128xf32>
    "tpu.trace_start"() <{level = 10 : i32, message = "hwc,cd->hwd"}> : () -> ()
    %cst_28 = arith.constant dense<0.000000e+00> : vector<7x14x128xf32>
    %31 = tpu.matmul %28, %30, %cst_28 {dimension_numbers = #tpu.dot_dimension_numbers<[2], [0], [0, 1], [1], [0, 0, 0, 1, 1, 1], [], []>} : vector<7x14x128xf32>, vector<128x128xf32>, vector<7x14x128xf32> -> vector<7x14x128xf32>
    "tpu.trace_stop"() : () -> ()
    %32 = arith.addf %26, %31 : vector<7x14x128xf32>
    %33 = vector.extract_strided_slice %13 {offsets = [0, 1, 0, 0], sizes = [1, 7, 14, 128], strides = [1, 1, 1, 1]} : vector<1x9x16x128xf32> to vector<1x7x14x128xf32>
    %34 = vector.shape_cast %33 : vector<1x7x14x128xf32> to vector<7x14x128xf32>
    %c1_29 = arith.constant 1 : index
    %c0_30 = arith.constant 0 : index
    %c0_31 = arith.constant 0 : index
    %c0_32 = arith.constant 0 : index
    %35 = vector.load %arg7[%c1_29, %c0_30, %c0_31, %c0_32] : memref<3x3x128x128xf32, #tpu.memory_space<vmem>>, vector<1x1x128x128xf32>
    %36 = vector.shape_cast %35 : vector<1x1x128x128xf32> to vector<128x128xf32>
    "tpu.trace_start"() <{level = 10 : i32, message = "hwc,cd->hwd"}> : () -> ()
    %cst_33 = arith.constant dense<0.000000e+00> : vector<7x14x128xf32>
    %37 = tpu.matmul %34, %36, %cst_33 {dimension_numbers = #tpu.dot_dimension_numbers<[2], [0], [0, 1], [1], [0, 0, 0, 1, 1, 1], [], []>} : vector<7x14x128xf32>, vector<128x128xf32>, vector<7x14x128xf32> -> vector<7x14x128xf32>
    "tpu.trace_stop"() : () -> ()
    %38 = arith.addf %32, %37 : vector<7x14x128xf32>
    %39 = vector.extract_strided_slice %13 {offsets = [0, 1, 1, 0], sizes = [1, 7, 14, 128], strides = [1, 1, 1, 1]} : vector<1x9x16x128xf32> to vector<1x7x14x128xf32>
    %40 = vector.shape_cast %39 : vector<1x7x14x128xf32> to vector<7x14x128xf32>
    %c1_34 = arith.constant 1 : index
    %c1_35 = arith.constant 1 : index
    %c0_36 = arith.constant 0 : index
    %c0_37 = arith.constant 0 : index
    %41 = vector.load %arg7[%c1_34, %c1_35, %c0_36, %c0_37] : memref<3x3x128x128xf32, #tpu.memory_space<vmem>>, vector<1x1x128x128xf32>
    %42 = vector.shape_cast %41 : vector<1x1x128x128xf32> to vector<128x128xf32>
    "tpu.trace_start"() <{level = 10 : i32, message = "hwc,cd->hwd"}> : () -> ()
    %cst_38 = arith.constant dense<0.000000e+00> : vector<7x14x128xf32>
    %43 = tpu.matmul %40, %42, %cst_38 {dimension_numbers = #tpu.dot_dimension_numbers<[2], [0], [0, 1], [1], [0, 0, 0, 1, 1, 1], [], []>} : vector<7x14x128xf32>, vector<128x128xf32>, vector<7x14x128xf32> -> vector<7x14x128xf32>
    "tpu.trace_stop"() : () -> ()
    %44 = arith.addf %38, %43 : vector<7x14x128xf32>
    %45 = vector.extract_strided_slice %13 {offsets = [0, 1, 2, 0], sizes = [1, 7, 14, 128], strides = [1, 1, 1, 1]} : vector<1x9x16x128xf32> to vector<1x7x14x128xf32>
    %46 = vector.shape_cast %45 : vector<1x7x14x128xf32> to vector<7x14x128xf32>
    %c1_39 = arith.constant 1 : index
    %c2_40 = arith.constant 2 : index
    %c0_41 = arith.constant 0 : index
    %c0_42 = arith.constant 0 : index
    %47 = vector.load %arg7[%c1_39, %c2_40, %c0_41, %c0_42] : memref<3x3x128x128xf32, #tpu.memory_space<vmem>>, vector<1x1x128x128xf32>
    %48 = vector.shape_cast %47 : vector<1x1x128x128xf32> to vector<128x128xf32>
    "tpu.trace_start"() <{level = 10 : i32, message = "hwc,cd->hwd"}> : () -> ()
    %cst_43 = arith.constant dense<0.000000e+00> : vector<7x14x128xf32>
    %49 = tpu.matmul %46, %48, %cst_43 {dimension_numbers = #tpu.dot_dimension_numbers<[2], [0], [0, 1], [1], [0, 0, 0, 1, 1, 1], [], []>} : vector<7x14x128xf32>, vector<128x128xf32>, vector<7x14x128xf32> -> vector<7x14x128xf32>
    "tpu.trace_stop"() : () -> ()
    %50 = arith.addf %44, %49 : vector<7x14x128xf32>
    %51 = vector.extract_strided_slice %13 {offsets = [0, 2, 0, 0], sizes = [1, 7, 14, 128], strides = [1, 1, 1, 1]} : vector<1x9x16x128xf32> to vector<1x7x14x128xf32>
    %52 = vector.shape_cast %51 : vector<1x7x14x128xf32> to vector<7x14x128xf32>
    %c2_44 = arith.constant 2 : index
    %c0_45 = arith.constant 0 : index
    %c0_46 = arith.constant 0 : index
    %c0_47 = arith.constant 0 : index
    %53 = vector.load %arg7[%c2_44, %c0_45, %c0_46, %c0_47] : memref<3x3x128x128xf32, #tpu.memory_space<vmem>>, vector<1x1x128x128xf32>
    %54 = vector.shape_cast %53 : vector<1x1x128x128xf32> to vector<128x128xf32>
    "tpu.trace_start"() <{level = 10 : i32, message = "hwc,cd->hwd"}> : () -> ()
    %cst_48 = arith.constant dense<0.000000e+00> : vector<7x14x128xf32>
    %55 = tpu.matmul %52, %54, %cst_48 {dimension_numbers = #tpu.dot_dimension_numbers<[2], [0], [0, 1], [1], [0, 0, 0, 1, 1, 1], [], []>} : vector<7x14x128xf32>, vector<128x128xf32>, vector<7x14x128xf32> -> vector<7x14x128xf32>
    "tpu.trace_stop"() : () -> ()
    %56 = arith.addf %50, %55 : vector<7x14x128xf32>
    %57 = vector.extract_strided_slice %13 {offsets = [0, 2, 1, 0], sizes = [1, 7, 14, 128], strides = [1, 1, 1, 1]} : vector<1x9x16x128xf32> to vector<1x7x14x128xf32>
    %58 = vector.shape_cast %57 : vector<1x7x14x128xf32> to vector<7x14x128xf32>
    %c2_49 = arith.constant 2 : index
    %c1_50 = arith.constant 1 : index
    %c0_51 = arith.constant 0 : index
    %c0_52 = arith.constant 0 : index
    %59 = vector.load %arg7[%c2_49, %c1_50, %c0_51, %c0_52] : memref<3x3x128x128xf32, #tpu.memory_space<vmem>>, vector<1x1x128x128xf32>
    %60 = vector.shape_cast %59 : vector<1x1x128x128xf32> to vector<128x128xf32>
    "tpu.trace_start"() <{level = 10 : i32, message = "hwc,cd->hwd"}> : () -> ()
    %cst_53 = arith.constant dense<0.000000e+00> : vector<7x14x128xf32>
    %61 = tpu.matmul %58, %60, %cst_53 {dimension_numbers = #tpu.dot_dimension_numbers<[2], [0], [0, 1], [1], [0, 0, 0, 1, 1, 1], [], []>} : vector<7x14x128xf32>, vector<128x128xf32>, vector<7x14x128xf32> -> vector<7x14x128xf32>
    "tpu.trace_stop"() : () -> ()
    %62 = arith.addf %56, %61 : vector<7x14x128xf32>
    %63 = vector.extract_strided_slice %13 {offsets = [0, 2, 2, 0], sizes = [1, 7, 14, 128], strides = [1, 1, 1, 1]} : vector<1x9x16x128xf32> to vector<1x7x14x128xf32>
    %64 = vector.shape_cast %63 : vector<1x7x14x128xf32> to vector<7x14x128xf32>
    %c2_54 = arith.constant 2 : index
    %c2_55 = arith.constant 2 : index
    %c0_56 = arith.constant 0 : index
    %c0_57 = arith.constant 0 : index
    %65 = vector.load %arg7[%c2_54, %c2_55, %c0_56, %c0_57] : memref<3x3x128x128xf32, #tpu.memory_space<vmem>>, vector<1x1x128x128xf32>
    %66 = vector.shape_cast %65 : vector<1x1x128x128xf32> to vector<128x128xf32>
    "tpu.trace_start"() <{level = 10 : i32, message = "hwc,cd->hwd"}> : () -> ()
    %cst_58 = arith.constant dense<0.000000e+00> : vector<7x14x128xf32>
    %67 = tpu.matmul %64, %66, %cst_58 {dimension_numbers = #tpu.dot_dimension_numbers<[2], [0], [0, 1], [1], [0, 0, 0, 1, 1, 1], [], []>} : vector<7x14x128xf32>, vector<128x128xf32>, vector<7x14x128xf32> -> vector<7x14x128xf32>
    "tpu.trace_stop"() : () -> ()
    %68 = arith.addf %62, %67 : vector<7x14x128xf32>
    %c0_59 = arith.constant 0 : index
    %c0_60 = arith.constant 0 : index
    %c0_61 = arith.constant 0 : index
    %c0_62 = arith.constant 0 : index
    %69 = vector.load %arg8[%c0_59, %c0_60, %c0_61, %c0_62] : memref<1x7x14x128xf32, #tpu.memory_space<vmem>>, vector<1x7x14x128xf32>
    %70 = vector.shape_cast %69 : vector<1x7x14x128xf32> to vector<7x14x128xf32>
    %71 = vector.shape_cast %68 : vector<7x14x128xf32> to vector<1x7x14x128xf32>
    tpu.vector_store %arg8[%c0_59, %c0_60, %c0_61, %c0_62], %71 {strides = array<i32>} : memref<1x7x14x128xf32, #tpu.memory_space<vmem>>, vector<1x7x14x128xf32>,
    %cst_63 = arith.constant dense<0.000000e+00> : vector<128xf32>
    %72 = vector.multi_reduction <add>, %68, %cst_63 [0, 1] : vector<7x14x128xf32> to vector<128xf32>
    %73 = vector.shape_cast %72 : vector<128xf32> to vector<1x128xf32>
    %c0_64 = arith.constant 0 : index
    %c0_65 = arith.constant 0 : index
    %c0_66 = arith.constant 0 : index
    %74 = vector.load %arg9[%c0_64, %c0_65, %c0_66] : memref<1x2x128xf32, #tpu.memory_space<vmem>>, vector<1x1x128xf32>
    %75 = vector.shape_cast %74 : vector<1x1x128xf32> to vector<1x128xf32>
    %76 = vector.shape_cast %73 : vector<1x128xf32> to vector<1x1x128xf32>
    tpu.vector_store %arg9[%c0_64, %c0_65, %c0_66], %76 {strides = array<i32>} : memref<1x2x128xf32, #tpu.memory_space<vmem>>, vector<1x1x128xf32>,
    %77 = arith.mulf %68, %68 : vector<7x14x128xf32>
    %cst_67 = arith.constant dense<0.000000e+00> : vector<128xf32>
    %78 = vector.multi_reduction <add>, %77, %cst_67 [0, 1] : vector<7x14x128xf32> to vector<128xf32>
    %79 = vector.shape_cast %78 : vector<128xf32> to vector<1x128xf32>
    %c0_68 = arith.constant 0 : index
    %c1_69 = arith.constant 1 : index
    %c0_70 = arith.constant 0 : index
    %80 = vector.load %arg9[%c0_68, %c1_69, %c0_70] : memref<1x2x128xf32, #tpu.memory_space<vmem>>, vector<1x1x128xf32>
    %81 = vector.shape_cast %80 : vector<1x1x128xf32> to vector<1x128xf32>
    %82 = vector.shape_cast %79 : vector<1x128xf32> to vector<1x1x128xf32>
    tpu.vector_store %arg9[%c0_68, %c1_69, %c0_70], %82 {strides = array<i32>} : memref<1x2x128xf32, #tpu.memory_space<vmem>>, vector<1x1x128xf32>,
    return
  }
  func.func @transform_0(%arg0: i32, %arg1: i32) -> (i32, i32, i32, i32) {
    %c0_i32 = arith.constant 0 : i32
    %c0_i32_0 = arith.constant 0 : i32
    %c0_i32_1 = arith.constant 0 : i32
    return %arg0, %arg1, %c0_i32, %c0_i32_0 : i32, i32, i32, i32
  }
  func.func @transform_1(%arg0: i32, %arg1: i32) -> (i32, i32, i32, i32) {
    %c1_i32 = arith.constant 1 : i32
    %0 = arith.addi %arg1, %c1_i32 : i32
    %c7_i32 = arith.constant 7 : i32
    %1 = arith.muli %0, %c7_i32 : i32
    %c0_i32 = arith.constant 0 : i32
    %c0_i32_0 = arith.constant 0 : i32
    %c0_i32_1 = arith.constant 0 : i32
    return %arg0, %1, %c0_i32, %c0_i32_0 : i32, i32, i32, i32
  }
  func.func @transform_2(%arg0: i32, %arg1: i32) -> (i32, i32, i32, i32) {
    %c1_i32 = arith.constant 1 : i32
    %0 = arith.addi %arg1, %c1_i32 : i32
    %c7_i32 = arith.constant 7 : i32
    %1 = arith.muli %0, %c7_i32 : i32
    %c1_i32_0 = arith.constant 1 : i32
    %2 = arith.addi %1, %c1_i32_0 : i32
    %c0_i32 = arith.constant 0 : i32
    %c0_i32_1 = arith.constant 0 : i32
    %c0_i32_2 = arith.constant 0 : i32
    return %arg0, %2, %c0_i32, %c0_i32_1 : i32, i32, i32, i32
  }
  func.func @transform_3(%arg0: i32, %arg1: i32) -> (i32, i32) {
    %c0_i32 = arith.constant 0 : i32
    %c0_i32_0 = arith.constant 0 : i32
    %c0_i32_1 = arith.constant 0 : i32
    return %c0_i32, %c0_i32_0 : i32, i32
  }
  func.func @transform_4(%arg0: i32, %arg1: i32) -> (i32, i32) {
    %c0_i32 = arith.constant 0 : i32
    %c0_i32_0 = arith.constant 0 : i32
    %c0_i32_1 = arith.constant 0 : i32
    return %c0_i32, %c0_i32_0 : i32, i32
  }
  func.func @transform_5(%arg0: i32, %arg1: i32) -> (i32, i32, i32, i32) {
    %c0_i32 = arith.constant 0 : i32
    %c0_i32_0 = arith.constant 0 : i32
    %c0_i32_1 = arith.constant 0 : i32
    %c0_i32_2 = arith.constant 0 : i32
    %c0_i32_3 = arith.constant 0 : i32
    return %c0_i32, %c0_i32_0, %c0_i32_1, %c0_i32_2 : i32, i32, i32, i32
  }
  func.func @transform_6(%arg0: i32, %arg1: i32) -> (i32, i32, i32, i32) {
    %c0_i32 = arith.constant 0 : i32
    %c0_i32_0 = arith.constant 0 : i32
    %c0_i32_1 = arith.constant 0 : i32
    return %arg0, %arg1, %c0_i32, %c0_i32_0 : i32, i32, i32, i32
  }
  func.func @transform_7(%arg0: i32, %arg1: i32) -> (i32, i32, i32) {
    %c2_i32 = arith.constant 2 : i32
    %0 = arith.muli %arg0, %c2_i32 : i32
    %1 = arith.addi %0, %arg1 : i32
    %c0_i32 = arith.constant 0 : i32
    %c0_i32_0 = arith.constant 0 : i32
    %c0_i32_1 = arith.constant 0 : i32
    return %1, %c0_i32, %c0_i32_0 : i32, i32, i32
  }
}

module attributes {stable_mosaic.version = 11 : i64} {
  func.func @_conv3_relu_kernel(%arg0: i32, %arg1: memref<392x128xf32, #tpu.memory_space<vmem>>, %arg2: memref<128x128xf32, #tpu.memory_space<vmem>>, %arg3: memref<1x128xf32, #tpu.memory_space<vmem>>, %arg4: memref<392x128xf32, #tpu.memory_space<vmem>>) attributes {dimension_semantics = [#tpu.dimension_semantics<parallel>], iteration_bounds = array<i64: 1>, scalar_prefetch = 0 : i64, scratch_operands = 0 : i64, tpu.core_type = #tpu.core_type<tc>, window_params = [{transform_indices = @transform_0, window_bounds = array<i64: 392, 128>}, {pipeline_mode = #tpu.pipeline_mode<synchronous>, transform_indices = @transform_1, window_bounds = array<i64: 128, 128>}, {pipeline_mode = #tpu.pipeline_mode<synchronous>, transform_indices = @transform_2, window_bounds = array<i64: 1, 128>}, {transform_indices = @transform_3, window_bounds = array<i64: 392, 128>}]} {
    %c0 = arith.constant 0 : index
    %c0_0 = arith.constant 0 : index
    %0 = vector.load %arg1[%c0, %c0_0] : memref<392x128xf32, #tpu.memory_space<vmem>>, vector<392x128xf32>
    %c0_1 = arith.constant 0 : index
    %c0_2 = arith.constant 0 : index
    %1 = vector.load %arg2[%c0_1, %c0_2] : memref<128x128xf32, #tpu.memory_space<vmem>>, vector<128x128xf32>
    %cst = arith.constant dense<0.000000e+00> : vector<392x128xf32>
    %2 = tpu.matmul %0, %1, %cst {dimension_numbers = #tpu.dot_dimension_numbers<[1], [0], [0], [1], [0, 0, 1, 1], [], []>} : vector<392x128xf32>, vector<128x128xf32>, vector<392x128xf32> -> vector<392x128xf32>
    %c0_3 = arith.constant 0 : index
    %c0_4 = arith.constant 0 : index
    %3 = vector.load %arg3[%c0_3, %c0_4] : memref<1x128xf32, #tpu.memory_space<vmem>>, vector<1x128xf32>
    %4 = vector.broadcast %3 : vector<1x128xf32> to vector<392x128xf32>
    %5 = arith.addf %2, %4 : vector<392x128xf32>
    %cst_5 = arith.constant 0.000000e+00 : f32
    %6 = vector.broadcast %cst_5 : f32 to vector<392x128xf32>
    %7 = arith.maximumf %5, %6 : vector<392x128xf32>
    %c0_6 = arith.constant 0 : index
    %c0_7 = arith.constant 0 : index
    %8 = vector.load %arg4[%c0_6, %c0_7] : memref<392x128xf32, #tpu.memory_space<vmem>>, vector<392x128xf32>
    tpu.vector_store %arg4[%c0_6, %c0_7], %7 {strides = array<i32>} : memref<392x128xf32, #tpu.memory_space<vmem>>, vector<392x128xf32>,
    return
  }
  func.func @transform_0(%arg0: i32) -> (i32, i32) {
    %c0_i32 = arith.constant 0 : i32
    %c0_i32_0 = arith.constant 0 : i32
    return %arg0, %c0_i32 : i32, i32
  }
  func.func @transform_1(%arg0: i32) -> (i32, i32) {
    %c0_i32 = arith.constant 0 : i32
    %c0_i32_0 = arith.constant 0 : i32
    %c0_i32_1 = arith.constant 0 : i32
    return %c0_i32, %c0_i32_0 : i32, i32
  }
  func.func @transform_2(%arg0: i32) -> (i32, i32) {
    %c0_i32 = arith.constant 0 : i32
    %c0_i32_0 = arith.constant 0 : i32
    %c0_i32_1 = arith.constant 0 : i32
    return %c0_i32, %c0_i32_0 : i32, i32
  }
  func.func @transform_3(%arg0: i32) -> (i32, i32) {
    %c0_i32 = arith.constant 0 : i32
    %c0_i32_0 = arith.constant 0 : i32
    return %arg0, %c0_i32 : i32, i32
  }
}

</mosaic_0001>

<llo_original>
// kernel: bottleneck_block_forward.3
$region0: #{bottleneck_block_forward.3}
  #allocation0 [shape = 'u32[]', space=smem, size = 0x4, offset = 0x4, fixed_abs, tag = 'smem constant byte address 0x4 - core index']
  #allocation1 [shape = 'u32[72,128]{1,0:T(1,128)}', space=vmem, size = 0x9000, scoped, tag = 'internal scratch']
  %s0 = inlined_call_operand.vmem [shape: f32[512,8], index: 0, kind: input, shape index: {}]
  %s1 = inlined_call_operand.vmem [shape: f32[8,128], index: 1, kind: input, shape index: {}]
  %s2 = inlined_call_operand.vmem [shape: f32[512,128], index: 2, kind: output, shape index: {0}]
  %s3 = inlined_call_operand.vmem [shape: f32[1,2,128], index: 3, kind: output, shape index: {1}]
  %4 = xla_tuple %s2, %s3
  %s5 = sld [smem:[#allocation0]]
  $region26: #{bottleneck_block_forward.3} parent=0
    _
  %s7 = ssub.s32 1, %s5
  %s8 = scalar_select 0, %s7, %s5
  // Predicated region
  $region2: #{bottleneck_block_forward.3} parent=0 // pred_check
    _
  $region3: #{bottleneck_block_forward.3} parent=0 // pred_check_branch
    %10 = sbr.rel (0) target = $region5
  $region4: #{bottleneck_block_forward.3} parent=0 // pred_region
    _
  $region5: #{bottleneck_block_forward.3} parent=0 // pred_fallthru
    _
  // Predicated region
  $region6: #{bottleneck_block_forward.3} parent=0 // pred_check
    _
  $region7: #{bottleneck_block_forward.3} parent=0 // pred_check_branch
    %12 = sbr.rel (0) target = $region9
  $region8: #{bottleneck_block_forward.3} parent=0 // pred_region
    _
  $region9: #{bottleneck_block_forward.3} parent=0 // pred_fallthru
    _
  %v13 = vld [vmem:[%s0] sm:$0xff]
  %v14 = vld [vmem:[%s0 + $0x8] sm:$0xff]
  %v15 = vld [vmem:[%s0 + $0x10] sm:$0xff]
  %v16 = vld [vmem:[%s0 + $0x18] sm:$0xff]
  %v17 = vld [vmem:[%s0 + $0x20] sm:$0xff]
  %v18 = vld [vmem:[%s0 + $0x28] sm:$0xff]
  %v19 = vld [vmem:[%s0 + $0x30] sm:$0xff]
  %v20 = vld [vmem:[%s0 + $0x38] sm:$0xff]
  %v21 = vld [vmem:[%s0 + $0x40] sm:$0xff]
  %v22 = vld [vmem:[%s0 + $0x48] sm:$0xff]
  %v23 = vld [vmem:[%s0 + $0x50] sm:$0xff]
  %v24 = vld [vmem:[%s0 + $0x58] sm:$0xff]
  %v25 = vld [vmem:[%s0 + $0x60] sm:$0xff]
  %v26 = vld [vmem:[%s0 + $0x68] sm:$0xff]
  %v27 = vld [vmem:[%s0 + $0x70] sm:$0xff]
  %v28 = vld [vmem:[%s0 + $0x78] sm:$0xff]
  %v29 = vld [vmem:[%s0 + $0x80] sm:$0xff]
  %v30 = vld [vmem:[%s0 + $0x88] sm:$0xff]
  %v31 = vld [vmem:[%s0 + $0x90] sm:$0xff]
  %v32 = vld [vmem:[%s0 + $0x98] sm:$0xff]
  %v33 = vld [vmem:[%s0 + $0xa0] sm:$0xff]
  %v34 = vld [vmem:[%s0 + $0xa8] sm:$0xff]
  %v35 = vld [vmem:[%s0 + $0xb0] sm:$0xff]
  %v36 = vld [vmem:[%s0 + $0xb8] sm:$0xff]
  %v37 = vld [vmem:[%s0 + $0xc0] sm:$0xff]
  %v38 = vld [vmem:[%s0 + $0xc8] sm:$0xff]
  %v39 = vld [vmem:[%s0 + $0xd0] sm:$0xff]
  %v40 = vld [vmem:[%s0 + $0xd8] sm:$0xff]
  %v41 = vld [vmem:[%s0 + $0xe0] sm:$0xff]
  %v42 = vld [vmem:[%s0 + $0xe8] sm:$0xff]
  %v43 = vld [vmem:[%s0 + $0xf0] sm:$0xff]
  %v44 = vld [vmem:[%s0 + $0xf8] sm:$0xff]
  %v45 = vld [vmem:[%s0 + $0x100] sm:$0xff]
  %v46 = vld [vmem:[%s0 + $0x108] sm:$0xff]
  %v47 = vld [vmem:[%s0 + $0x110] sm:$0xff]
  %v48 = vld [vmem:[%s0 + $0x118] sm:$0xff]
  %v49 = vld [vmem:[%s0 + $0x120] sm:$0xff]
  %v50 = vld [vmem:[%s0 + $0x128] sm:$0xff]
  %v51 = vld [vmem:[%s0 + $0x130] sm:$0xff]
  %v52 = vld [vmem:[%s0 + $0x138] sm:$0xff]
  %v53 = vld [vmem:[%s0 + $0x140] sm:$0xff]
  %v54 = vld [vmem:[%s0 + $0x148] sm:$0xff]
  %v55 = vld [vmem:[%s0 + $0x150] sm:$0xff]
  %v56 = vld [vmem:[%s0 + $0x158] sm:$0xff]
  %v57 = vld [vmem:[%s0 + $0x160] sm:$0xff]
  %v58 = vld [vmem:[%s0 + $0x168] sm:$0xff]
  %v59 = vld [vmem:[%s0 + $0x170] sm:$0xff]
  %v60 = vld [vmem:[%s0 + $0x178] sm:$0xff]
  %v61 = vld [vmem:[%s0 + $0x180] sm:$0xff]
  %v62 = vld [vmem:[%s0 + $0x188] sm:$0xff]
  %v63 = vld [vmem:[%s0 + $0x190] sm:$0xff]
  %v64 = vld [vmem:[%s0 + $0x198] sm:$0xff]
  %v65 = vld [vmem:[%s0 + $0x1a0] sm:$0xff]
  %v66 = vld [vmem:[%s0 + $0x1a8] sm:$0xff]
  %v67 = vld [vmem:[%s0 + $0x1b0] sm:$0xff]
  %v68 = vld [vmem:[%s0 + $0x1b8] sm:$0xff]
  %v69 = vld [vmem:[%s0 + $0x1c0] sm:$0xff]
  %v70 = vld [vmem:[%s0 + $0x1c8] sm:$0xff]
  %v71 = vld [vmem:[%s0 + $0x1d0] sm:$0xff]
  %v72 = vld [vmem:[%s0 + $0x1d8] sm:$0xff]
  %v73 = vld [vmem:[%s0 + $0x1e0] sm:$0xff]
  %v74 = vld [vmem:[%s0 + $0x1e8] sm:$0xff]
  %v75 = vld [vmem:[%s0 + $0x1f0] sm:$0xff]
  %v76 = vld [vmem:[%s0 + $0x1f8] sm:$0xff]
  %v77 = vld [vmem:[%s1] sm:$0xff]
  %vm78 = vcmask 64512
  %v80 = vsel %vm78, %v13, 0
  %v83 = vsel %vm78, %v14, 0
  %v86 = vsel %vm78, %v15, 0
  %v89 = vsel %vm78, %v16, 0
  %v92 = vsel %vm78, %v17, 0
  %v95 = vsel %vm78, %v18, 0
  %v98 = vsel %vm78, %v19, 0
  %v101 = vsel %vm78, %v20, 0
  %v104 = vsel %vm78, %v21, 0
  %v107 = vsel %vm78, %v22, 0
  %v110 = vsel %vm78, %v23, 0
  %v113 = vsel %vm78, %v24, 0
  %v116 = vsel %vm78, %v25, 0
  %v119 = vsel %vm78, %v26, 0
  %v122 = vsel %vm78, %v27, 0
  %v125 = vsel %vm78, %v28, 0
  %v128 = vsel %vm78, %v29, 0
  %v131 = vsel %vm78, %v30, 0
  %v134 = vsel %vm78, %v31, 0
  %v137 = vsel %vm78, %v32, 0
  %v140 = vsel %vm78, %v33, 0
  %v143 = vsel %vm78, %v34, 0
  %v146 = vsel %vm78, %v35, 0
  %v149 = vsel %vm78, %v36, 0
  %v152 = vsel %vm78, %v37, 0
  %v155 = vsel %vm78, %v38, 0
  %v158 = vsel %vm78, %v39, 0
  %v161 = vsel %vm78, %v40, 0
  %v164 = vsel %vm78, %v41, 0
  %v167 = vsel %vm78, %v42, 0
  %v170 = vsel %vm78, %v43, 0
  %v173 = vsel %vm78, %v44, 0
  %v176 = vsel %vm78, %v45, 0
  %v179 = vsel %vm78, %v46, 0
  %v182 = vsel %vm78, %v47, 0
  %v185 = vsel %vm78, %v48, 0
  %v188 = vsel %vm78, %v49, 0
  %v191 = vsel %vm78, %v50, 0
  %v194 = vsel %vm78, %v51, 0
  %v197 = vsel %vm78, %v52, 0
  %v200 = vsel %vm78, %v53, 0
  %v203 = vsel %vm78, %v54, 0
  %v206 = vsel %vm78, %v55, 0
  %v209 = vsel %vm78, %v56, 0
  %v212 = vsel %vm78, %v57, 0
  %v215 = vsel %vm78, %v58, 0
  %v218 = vsel %vm78, %v59, 0
  %v221 = vsel %vm78, %v60, 0
  %v224 = vsel %vm78, %v61, 0
  %v227 = vsel %vm78, %v62, 0
  %v230 = vsel %vm78, %v63, 0
  %v233 = vsel %vm78, %v64, 0
  %v236 = vsel %vm78, %v65, 0
  %v239 = vsel %vm78, %v66, 0
  %v242 = vsel %vm78, %v67, 0
  %v245 = vsel %vm78, %v68, 0
  %v248 = vsel %vm78, %v69, 0
  %v251 = vsel %vm78, %v70, 0
  %v254 = vsel %vm78, %v71, 0
  %v257 = vsel %vm78, %v72, 0
  %v260 = vsel %vm78, %v73, 0
  %v263 = vsel %vm78, %v74, 0
  %v266 = vsel %vm78, %v75, 0
  %v269 = vsel %vm78, %v76, 0
  %271 = vmatpush.msra.mxu0 0.0
  %272 = vmatpush.msra.mxu0 0.0
  %273 = vmatpush.msra.mxu0 0.0
  %274 = vmatpush.msra.mxu0 0.0
  %275 = vmatpush.msra.mxu0 0.0
  %276 = vmatpush.msra.mxu0 0.0
  %277 = vmatpush.msra.mxu0 0.0
  %278 = vmatpush.msra.mxu0 0.0
  %279 = vmatpush.msra.mxu0 0.0
  %280 = vmatpush.msra.mxu0 0.0
  %281 = vmatpush.msra.mxu0 0.0
  %282 = vmatpush.msra.mxu0 0.0
  %283 = vmatpush.msra.mxu0 0.0
  %284 = vmatpush.msra.mxu0 0.0
  %285 = vmatpush.msra.mxu0 0.0
  %286 = vmatpush.msra.mxu0 %v77
  %287 = vmatmul.f32.gmra.mxu0 %v80
  %v288 = vpop.f32.mrf.mxu0
  %v289 = vadd.f32 0.0, %v288
  %290 = vmatmul.f32.gmra.mxu0 %v83
  %v291 = vpop.f32.mrf.mxu0
  %v292 = vadd.f32 0.0, %v291
  %293 = vmatmul.f32.gmra.mxu0 %v86
  %v294 = vpop.f32.mrf.mxu0
  %v295 = vadd.f32 0.0, %v294
  %296 = vmatmul.f32.gmra.mxu0 %v89
  %v297 = vpop.f32.mrf.mxu0
  %v298 = vadd.f32 0.0, %v297
  %299 = vmatmul.f32.gmra.mxu0 %v92
  %v300 = vpop.f32.mrf.mxu0
  %v301 = vadd.f32 0.0, %v300
  %302 = vmatmul.f32.gmra.mxu0 %v95
  %v303 = vpop.f32.mrf.mxu0
  %v304 = vadd.f32 0.0, %v303
  %305 = vmatmul.f32.gmra.mxu0 %v98
  %v306 = vpop.f32.mrf.mxu0
  %v307 = vadd.f32 0.0, %v306
  %308 = vmatmul.f32.gmra.mxu0 %v101
  %v309 = vpop.f32.mrf.mxu0
  %v310 = vadd.f32 0.0, %v309
  %311 = vmatmul.f32.gmra.mxu0 %v104
  %v312 = vpop.f32.mrf.mxu0
  %v313 = vadd.f32 0.0, %v312
  %314 = vmatmul.f32.gmra.mxu0 %v107
  %v315 = vpop.f32.mrf.mxu0
  %v316 = vadd.f32 0.0, %v315
  %317 = vmatmul.f32.gmra.mxu0 %v110
  %v318 = vpop.f32.mrf.mxu0
  %v319 = vadd.f32 0.0, %v318
  %320 = vmatmul.f32.gmra.mxu0 %v113
  %v321 = vpop.f32.mrf.mxu0
  %v322 = vadd.f32 0.0, %v321
  %323 = vmatmul.f32.gmra.mxu0 %v116
  %v324 = vpop.f32.mrf.mxu0
  %v325 = vadd.f32 0.0, %v324
  %326 = vmatmul.f32.gmra.mxu0 %v119
  %v327 = vpop.f32.mrf.mxu0
  %v328 = vadd.f32 0.0, %v327
  %329 = vmatmul.f32.gmra.mxu0 %v122
  %v330 = vpop.f32.mrf.mxu0
  %v331 = vadd.f32 0.0, %v330
  %332 = vmatmul.f32.gmra.mxu0 %v125
  %v333 = vpop.f32.mrf.mxu0
  %v334 = vadd.f32 0.0, %v333
  %335 = vmatmul.f32.gmra.mxu0 %v128
  %v336 = vpop.f32.mrf.mxu0
  %v337 = vadd.f32 0.0, %v336
  %338 = vmatmul.f32.gmra.mxu0 %v131
  %v339 = vpop.f32.mrf.mxu0
  %v340 = vadd.f32 0.0, %v339
  %341 = vmatmul.f32.gmra.mxu0 %v134
  %v342 = vpop.f32.mrf.mxu0
  %v343 = vadd.f32 0.0, %v342
  %344 = vmatmul.f32.gmra.mxu0 %v137
  %v345 = vpop.f32.mrf.mxu0
  %v346 = vadd.f32 0.0, %v345
  %347 = vmatmul.f32.gmra.mxu0 %v140
  %v348 = vpop.f32.mrf.mxu0
  %v349 = vadd.f32 0.0, %v348
  %350 = vmatmul.f32.gmra.mxu0 %v143
  %v351 = vpop.f32.mrf.mxu0
  %v352 = vadd.f32 0.0, %v351
  %353 = vmatmul.f32.gmra.mxu0 %v146
  %v354 = vpop.f32.mrf.mxu0
  %v355 = vadd.f32 0.0, %v354
  %356 = vmatmul.f32.gmra.mxu0 %v149
  %v357 = vpop.f32.mrf.mxu0
  %v358 = vadd.f32 0.0, %v357
  %359 = vmatmul.f32.gmra.mxu0 %v152
  %v360 = vpop.f32.mrf.mxu0
  %v361 = vadd.f32 0.0, %v360
  %362 = vmatmul.f32.gmra.mxu0 %v155
  %v363 = vpop.f32.mrf.mxu0
  %v364 = vadd.f32 0.0, %v363
  %365 = vmatmul.f32.gmra.mxu0 %v158
  %v366 = vpop.f32.mrf.mxu0
  %v367 = vadd.f32 0.0, %v366
  %368 = vmatmul.f32.gmra.mxu0 %v161
  %v369 = vpop.f32.mrf.mxu0
  %v370 = vadd.f32 0.0, %v369
  %371 = vmatmul.f32.gmra.mxu0 %v164
  %v372 = vpop.f32.mrf.mxu0
  %v373 = vadd.f32 0.0, %v372
  %374 = vmatmul.f32.gmra.mxu0 %v167
  %v375 = vpop.f32.mrf.mxu0
  %v376 = vadd.f32 0.0, %v375
  %377 = vmatmul.f32.gmra.mxu0 %v170
  %v378 = vpop.f32.mrf.mxu0
  %v379 = vadd.f32 0.0, %v378
  %380 = vmatmul.f32.gmra.mxu0 %v173
  %v381 = vpop.f32.mrf.mxu0
  %v382 = vadd.f32 0.0, %v381
  %383 = vmatmul.f32.gmra.mxu0 %v176
  %v384 = vpop.f32.mrf.mxu0
  %v385 = vadd.f32 0.0, %v384
  %386 = vmatmul.f32.gmra.mxu0 %v179
  %v387 = vpop.f32.mrf.mxu0
  %v388 = vadd.f32 0.0, %v387
  %389 = vmatmul.f32.gmra.mxu0 %v182
  %v390 = vpop.f32.mrf.mxu0
  %v391 = vadd.f32 0.0, %v390
  %392 = vmatmul.f32.gmra.mxu0 %v185
  %v393 = vpop.f32.mrf.mxu0
  %v394 = vadd.f32 0.0, %v393
  %395 = vmatmul.f32.gmra.mxu0 %v188
  %v396 = vpop.f32.mrf.mxu0
  %v397 = vadd.f32 0.0, %v396
  %398 = vmatmul.f32.gmra.mxu0 %v191
  %v399 = vpop.f32.mrf.mxu0
  %v400 = vadd.f32 0.0, %v399
  %401 = vmatmul.f32.gmra.mxu0 %v194
  %v402 = vpop.f32.mrf.mxu0
  %v403 = vadd.f32 0.0, %v402
  %404 = vmatmul.f32.gmra.mxu0 %v197
  %v405 = vpop.f32.mrf.mxu0
  %v406 = vadd.f32 0.0, %v405
  %407 = vmatmul.f32.gmra.mxu0 %v200
  %v408 = vpop.f32.mrf.mxu0
  %v409 = vadd.f32 0.0, %v408
  %410 = vmatmul.f32.gmra.mxu0 %v203
  %v411 = vpop.f32.mrf.mxu0
  %v412 = vadd.f32 0.0, %v411
  %413 = vmatmul.f32.gmra.mxu0 %v206
  %v414 = vpop.f32.mrf.mxu0
  %v415 = vadd.f32 0.0, %v414
  %416 = vmatmul.f32.gmra.mxu0 %v209
  %v417 = vpop.f32.mrf.mxu0
  %v418 = vadd.f32 0.0, %v417
  %419 = vmatmul.f32.gmra.mxu0 %v212
  %v420 = vpop.f32.mrf.mxu0
  %v421 = vadd.f32 0.0, %v420
  %422 = vmatmul.f32.gmra.mxu0 %v215
  %v423 = vpop.f32.mrf.mxu0
  %v424 = vadd.f32 0.0, %v423
  %425 = vmatmul.f32.gmra.mxu0 %v218
  %v426 = vpop.f32.mrf.mxu0
  %v427 = vadd.f32 0.0, %v426
  %428 = vmatmul.f32.gmra.mxu0 %v221
  %v429 = vpop.f32.mrf.mxu0
  %v430 = vadd.f32 0.0, %v429
  %431 = vmatmul.f32.gmra.mxu0 %v224
  %v432 = vpop.f32.mrf.mxu0
  %v433 = vadd.f32 0.0, %v432
  %434 = vmatmul.f32.gmra.mxu0 %v227
  %v435 = vpop.f32.mrf.mxu0
  %v436 = vadd.f32 0.0, %v435
  %437 = vmatmul.f32.gmra.mxu0 %v230
  %v438 = vpop.f32.mrf.mxu0
  %v439 = vadd.f32 0.0, %v438
  %440 = vmatmul.f32.gmra.mxu0 %v233
  %v441 = vpop.f32.mrf.mxu0
  %v442 = vadd.f32 0.0, %v441
  %443 = vmatmul.f32.gmra.mxu0 %v236
  %v444 = vpop.f32.mrf.mxu0
  %v445 = vadd.f32 0.0, %v444
  %446 = vmatmul.f32.gmra.mxu0 %v239
  %v447 = vpop.f32.mrf.mxu0
  %v448 = vadd.f32 0.0, %v447
  %449 = vmatmul.f32.gmra.mxu0 %v242
  %v450 = vpop.f32.mrf.mxu0
  %v451 = vadd.f32 0.0, %v450
  %452 = vmatmul.f32.gmra.mxu0 %v245
  %v453 = vpop.f32.mrf.mxu0
  %v454 = vadd.f32 0.0, %v453
  %455 = vmatmul.f32.gmra.mxu0 %v248
  %v456 = vpop.f32.mrf.mxu0
  %v457 = vadd.f32 0.0, %v456
  %458 = vmatmul.f32.gmra.mxu0 %v251
  %v459 = vpop.f32.mrf.mxu0
  %v460 = vadd.f32 0.0, %v459
  %461 = vmatmul.f32.gmra.mxu0 %v254
  %v462 = vpop.f32.mrf.mxu0
  %v463 = vadd.f32 0.0, %v462
  %464 = vmatmul.f32.gmra.mxu0 %v257
  %v465 = vpop.f32.mrf.mxu0
  %v466 = vadd.f32 0.0, %v465
  %467 = vmatmul.f32.gmra.mxu0 %v260
  %v468 = vpop.f32.mrf.mxu0
  %v469 = vadd.f32 0.0, %v468
  %470 = vmatmul.f32.gmra.mxu0 %v263
  %v471 = vpop.f32.mrf.mxu0
  %v472 = vadd.f32 0.0, %v471
  %473 = vmatmul.f32.gmra.mxu0 %v266
  %v474 = vpop.f32.mrf.mxu0
  %v475 = vadd.f32 0.0, %v474
  %476 = vmatmul.f32.gmra.mxu0 %v269
  %v477 = vpop.f32.mrf.mxu0
  %v478 = vadd.f32 0.0, %v477
  %479 = vdwg.mxu0
  %480 = vst [vmem:[%s2] sm:$0xff] %v289
  %481 = vst [vmem:[%s2 + $0x8] sm:$0xff] %v292
  %482 = vst [vmem:[%s2 + $0x10] sm:$0xff] %v295
  %483 = vst [vmem:[%s2 + $0x18] sm:$0xff] %v298
  %484 = vst [vmem:[%s2 + $0x20] sm:$0xff] %v301
  %485 = vst [vmem:[%s2 + $0x28] sm:$0xff] %v304
  %486 = vst [vmem:[%s2 + $0x30] sm:$0xff] %v307
  %487 = vst [vmem:[%s2 + $0x38] sm:$0xff] %v310
  %488 = vst [vmem:[%s2 + $0x40] sm:$0xff] %v313
  %489 = vst [vmem:[%s2 + $0x48] sm:$0xff] %v316
  %490 = vst [vmem:[%s2 + $0x50] sm:$0xff] %v319
  %491 = vst [vmem:[%s2 + $0x58] sm:$0xff] %v322
  %492 = vst [vmem:[%s2 + $0x60] sm:$0xff] %v325
  %493 = vst [vmem:[%s2 + $0x68] sm:$0xff] %v328
  %494 = vst [vmem:[%s2 + $0x70] sm:$0xff] %v331
  %495 = vst [vmem:[%s2 + $0x78] sm:$0xff] %v334
  %496 = vst [vmem:[%s2 + $0x80] sm:$0xff] %v337
  %497 = vst [vmem:[%s2 + $0x88] sm:$0xff] %v340
  %498 = vst [vmem:[%s2 + $0x90] sm:$0xff] %v343
  %499 = vst [vmem:[%s2 + $0x98] sm:$0xff] %v346
  %500 = vst [vmem:[%s2 + $0xa0] sm:$0xff] %v349
  %501 = vst [vmem:[%s2 + $0xa8] sm:$0xff] %v352
  %502 = vst [vmem:[%s2 + $0xb0] sm:$0xff] %v355
  %503 = vst [vmem:[%s2 + $0xb8] sm:$0xff] %v358
  %504 = vst [vmem:[%s2 + $0xc0] sm:$0xff] %v361
  %505 = vst [vmem:[%s2 + $0xc8] sm:$0xff] %v364
  %506 = vst [vmem:[%s2 + $0xd0] sm:$0xff] %v367
  %507 = vst [vmem:[%s2 + $0xd8] sm:$0xff] %v370
  %508 = vst [vmem:[%s2 + $0xe0] sm:$0xff] %v373
  %509 = vst [vmem:[%s2 + $0xe8] sm:$0xff] %v376
  %510 = vst [vmem:[%s2 + $0xf0] sm:$0xff] %v379
  %511 = vst [vmem:[%s2 + $0xf8] sm:$0xff] %v382
  %512 = vst [vmem:[%s2 + $0x100] sm:$0xff] %v385
  %513 = vst [vmem:[%s2 + $0x108] sm:$0xff] %v388
  %514 = vst [vmem:[%s2 + $0x110] sm:$0xff] %v391
  %515 = vst [vmem:[%s2 + $0x118] sm:$0xff] %v394
  %516 = vst [vmem:[%s2 + $0x120] sm:$0xff] %v397
  %517 = vst [vmem:[%s2 + $0x128] sm:$0xff] %v400
  %518 = vst [vmem:[%s2 + $0x130] sm:$0xff] %v403
  %519 = vst [vmem:[%s2 + $0x138] sm:$0xff] %v406
  %520 = vst [vmem:[%s2 + $0x140] sm:$0xff] %v409
  %521 = vst [vmem:[%s2 + $0x148] sm:$0xff] %v412
  %522 = vst [vmem:[%s2 + $0x150] sm:$0xff] %v415
  %523 = vst [vmem:[%s2 + $0x158] sm:$0xff] %v418
  %524 = vst [vmem:[%s2 + $0x160] sm:$0xff] %v421
  %525 = vst [vmem:[%s2 + $0x168] sm:$0xff] %v424
  %526 = vst [vmem:[%s2 + $0x170] sm:$0xff] %v427
  %527 = vst [vmem:[%s2 + $0x178] sm:$0xff] %v430
  %528 = vst [vmem:[%s2 + $0x180] sm:$0xff] %v433
  %529 = vst [vmem:[%s2 + $0x188] sm:$0xff] %v436
  %530 = vst [vmem:[%s2 + $0x190] sm:$0xff] %v439
  %531 = vst [vmem:[%s2 + $0x198] sm:$0xff] %v442
  %532 = vst [vmem:[%s2 + $0x1a0] sm:$0xff] %v445
  %533 = vst [vmem:[%s2 + $0x1a8] sm:$0xff] %v448
  %534 = vst [vmem:[%s2 + $0x1b0] sm:$0xff] %v451
  %535 = vst [vmem:[%s2 + $0x1b8] sm:$0xff] %v454
  %536 = vst [vmem:[%s2 + $0x1c0] sm:$0xff] %v457
  %537 = vst [vmem:[%s2 + $0x1c8] sm:$0xff] %v460
  %538 = vst [vmem:[%s2 + $0x1d0] sm:$0xff] %v463
  %539 = vst [vmem:[%s2 + $0x1d8] sm:$0xff] %v466
  %540 = vst [vmem:[%s2 + $0x1e0] sm:$0xff] %v469
  %541 = vst [vmem:[%s2 + $0x1e8] sm:$0xff] %v472
  %542 = vst [vmem:[%s2 + $0x1f0] sm:$0xff] %v475
  %543 = vst [vmem:[%s2 + $0x1f8] sm:$0xff] %v478
  %s544 = smul.u32 0, 512
  %v545 = vlaneseq
  %v546 = vshrl.u32 %v545, 7
  %v547 = vadd.s32 %v546, 8
  %v548 = vadd.s32 %v546, 16
  %v549 = vadd.s32 %v546, 24
  %v550 = vadd.s32 %v546, 32
  %v551 = vadd.s32 %v546, 40
  %v552 = vadd.s32 %v546, 48
  %v553 = vadd.s32 %v546, 56
  %v554 = vadd.s32 %v546, 64
  %v555 = vadd.s32 %v546, 72
  %v556 = vadd.s32 %v546, 80
  %v557 = vadd.s32 %v546, 88
  %v558 = vadd.s32 %v546, 96
  %v559 = vadd.s32 %v546, 104
  %v560 = vadd.s32 %v546, 112
  %v561 = vadd.s32 %v546, 120
  %v562 = vadd.s32 %v546, 128
  %v563 = vadd.s32 %v546, 136
  %v564 = vadd.s32 %v546, 144
  %v565 = vadd.s32 %v546, 152
  %v566 = vadd.s32 %v546, 160
  %v567 = vadd.s32 %v546, 168
  %v568 = vadd.s32 %v546, 176
  %v569 = vadd.s32 %v546, 184
  %v570 = vadd.s32 %v546, 192
  %v571 = vadd.s32 %v546, 200
  %v572 = vadd.s32 %v546, 208
  %v573 = vadd.s32 %v546, 216
  %v574 = vadd.s32 %v546, 224
  %v575 = vadd.s32 %v546, 232
  %v576 = vadd.s32 %v546, 240
  %v577 = vadd.s32 %v546, 248
  %v578 = vadd.s32 %v546, 256
  %v579 = vadd.s32 %v546, 264
  %v580 = vadd.s32 %v546, 272
  %v581 = vadd.s32 %v546, 280
  %v582 = vadd.s32 %v546, 288
  %v583 = vadd.s32 %v546, 296
  %v584 = vadd.s32 %v546, 304
  %v585 = vadd.s32 %v546, 312
  %v586 = vadd.s32 %v546, 320
  %v587 = vadd.s32 %v546, 328
  %v588 = vadd.s32 %v546, 336
  %v589 = vadd.s32 %v546, 344
  %v590 = vadd.s32 %v546, 352
  %v591 = vadd.s32 %v546, 360
  %v592 = vadd.s32 %v546, 368
  %v593 = vadd.s32 %v546, 376
  %v594 = vadd.s32 %v546, 384
  %v595 = vadd.s32 %v546, 392
  %v596 = vadd.s32 %v546, 400
  %v597 = vadd.s32 %v546, 408
  %v598 = vadd.s32 %v546, 416
  %v599 = vadd.s32 %v546, 424
  %v600 = vadd.s32 %v546, 432
  %v601 = vadd.s32 %v546, 440
  %v602 = vadd.s32 %v546, 448
  %v603 = vadd.s32 %v546, 456
  %v604 = vadd.s32 %v546, 464
  %v605 = vadd.s32 %v546, 472
  %v606 = vadd.s32 %v546, 480
  %v607 = vadd.s32 %v546, 488
  %v608 = vadd.s32 %v546, 496
  %v609 = vadd.s32 %v546, 504
  %v610 = vstv %s544
  %v611 = vadd.s32 %v610, %v546
  %v612 = vadd.s32 %v610, %v547
  %v613 = vadd.s32 %v610, %v548
  %v614 = vadd.s32 %v610, %v549
  %v615 = vadd.s32 %v610, %v550
  %v616 = vadd.s32 %v610, %v551
  %v617 = vadd.s32 %v610, %v552
  %v618 = vadd.s32 %v610, %v553
  %v619 = vadd.s32 %v610, %v554
  %v620 = vadd.s32 %v610, %v555
  %v621 = vadd.s32 %v610, %v556
  %v622 = vadd.s32 %v610, %v557
  %v623 = vadd.s32 %v610, %v558
  %v624 = vadd.s32 %v610, %v559
  %v625 = vadd.s32 %v610, %v560
  %v626 = vadd.s32 %v610, %v561
  %v627 = vadd.s32 %v610, %v562
  %v628 = vadd.s32 %v610, %v563
  %v629 = vadd.s32 %v610, %v564
  %v630 = vadd.s32 %v610, %v565
  %v631 = vadd.s32 %v610, %v566
  %v632 = vadd.s32 %v610, %v567
  %v633 = vadd.s32 %v610, %v568
  %v634 = vadd.s32 %v610, %v569
  %v635 = vadd.s32 %v610, %v570
  %v636 = vadd.s32 %v610, %v571
  %v637 = vadd.s32 %v610, %v572
  %v638 = vadd.s32 %v610, %v573
  %v639 = vadd.s32 %v610, %v574
  %v640 = vadd.s32 %v610, %v575
  %v641 = vadd.s32 %v610, %v576
  %v642 = vadd.s32 %v610, %v577
  %v643 = vadd.s32 %v610, %v578
  %v644 = vadd.s32 %v610, %v579
  %v645 = vadd.s32 %v610, %v580
  %v646 = vadd.s32 %v610, %v581
  %v647 = vadd.s32 %v610, %v582
  %v648 = vadd.s32 %v610, %v583
  %v649 = vadd.s32 %v610, %v584
  %v650 = vadd.s32 %v610, %v585
  %v651 = vadd.s32 %v610, %v586
  %v652 = vadd.s32 %v610, %v587
  %v653 = vadd.s32 %v610, %v588
  %v654 = vadd.s32 %v610, %v589
  %v655 = vadd.s32 %v610, %v590
  %v656 = vadd.s32 %v610, %v591
  %v657 = vadd.s32 %v610, %v592
  %v658 = vadd.s32 %v610, %v593
  %v659 = vadd.s32 %v610, %v594
  %v660 = vadd.s32 %v610, %v595
  %v661 = vadd.s32 %v610, %v596
  %v662 = vadd.s32 %v610, %v597
  %v663 = vadd.s32 %v610, %v598
  %v664 = vadd.s32 %v610, %v599
  %v665 = vadd.s32 %v610, %v600
  %v666 = vadd.s32 %v610, %v601
  %v667 = vadd.s32 %v610, %v602
  %v668 = vadd.s32 %v610, %v603
  %v669 = vadd.s32 %v610, %v604
  %v670 = vadd.s32 %v610, %v605
  %v671 = vadd.s32 %v610, %v606
  %v672 = vadd.s32 %v610, %v607
  %v673 = vadd.s32 %v610, %v608
  %v674 = vadd.s32 %v610, %v609
  %vm675 = vcmp.lt.s32.totalorder %v611, 512
  %vm676 = vcmp.lt.s32.totalorder %v612, 512
  %vm677 = vcmp.lt.s32.totalorder %v613, 512
  %vm678 = vcmp.lt.s32.totalorder %v614, 512
  %vm679 = vcmp.lt.s32.totalorder %v615, 512
  %vm680 = vcmp.lt.s32.totalorder %v616, 512
  %vm681 = vcmp.lt.s32.totalorder %v617, 512
  %vm682 = vcmp.lt.s32.totalorder %v618, 512
  %vm683 = vcmp.lt.s32.totalorder %v619, 512
  %vm684 = vcmp.lt.s32.totalorder %v620, 512
  %vm685 = vcmp.lt.s32.totalorder %v621, 512
  %vm686 = vcmp.lt.s32.totalorder %v622, 512
  %vm687 = vcmp.lt.s32.totalorder %v623, 512
  %vm688 = vcmp.lt.s32.totalorder %v624, 512
  %vm689 = vcmp.lt.s32.totalorder %v625, 512
  %vm690 = vcmp.lt.s32.totalorder %v626, 512
  %vm691 = vcmp.lt.s32.totalorder %v627, 512
  %vm692 = vcmp.lt.s32.totalorder %v628, 512
  %vm693 = vcmp.lt.s32.totalorder %v629, 512
  %vm694 = vcmp.lt.s32.totalorder %v630, 512
  %vm695 = vcmp.lt.s32.totalorder %v631, 512
  %vm696 = vcmp.lt.s32.totalorder %v632, 512
  %vm697 = vcmp.lt.s32.totalorder %v633, 512
  %vm698 = vcmp.lt.s32.totalorder %v634, 512
  %vm699 = vcmp.lt.s32.totalorder %v635, 512
  %vm700 = vcmp.lt.s32.totalorder %v636, 512
  %vm701 = vcmp.lt.s32.totalorder %v637, 512
  %vm702 = vcmp.lt.s32.totalorder %v638, 512
  %vm703 = vcmp.lt.s32.totalorder %v639, 512
  %vm704 = vcmp.lt.s32.totalorder %v640, 512
  %vm705 = vcmp.lt.s32.totalorder %v641, 512
  %vm706 = vcmp.lt.s32.totalorder %v642, 512
  %vm707 = vcmp.lt.s32.totalorder %v643, 512
  %vm708 = vcmp.lt.s32.totalorder %v644, 512
  %vm709 = vcmp.lt.s32.totalorder %v645, 512
  %vm710 = vcmp.lt.s32.totalorder %v646, 512
  %vm711 = vcmp.lt.s32.totalorder %v647, 512
  %vm712 = vcmp.lt.s32.totalorder %v648, 512
  %vm713 = vcmp.lt.s32.totalorder %v649, 512
  %vm714 = vcmp.lt.s32.totalorder %v650, 512
  %vm715 = vcmp.lt.s32.totalorder %v651, 512
  %vm716 = vcmp.lt.s32.totalorder %v652, 512
  %vm717 = vcmp.lt.s32.totalorder %v653, 512
  %vm718 = vcmp.lt.s32.totalorder %v654, 512
  %vm719 = vcmp.lt.s32.totalorder %v655, 512
  %vm720 = vcmp.lt.s32.totalorder %v656, 512
  %vm721 = vcmp.lt.s32.totalorder %v657, 512
  %vm722 = vcmp.lt.s32.totalorder %v658, 512
  %vm723 = vcmp.lt.s32.totalorder %v659, 512
  %vm724 = vcmp.lt.s32.totalorder %v660, 512
  %vm725 = vcmp.lt.s32.totalorder %v661, 512
  %vm726 = vcmp.lt.s32.totalorder %v662, 512
  %vm727 = vcmp.lt.s32.totalorder %v663, 512
  %vm728 = vcmp.lt.s32.totalorder %v664, 512
  %vm729 = vcmp.lt.s32.totalorder %v665, 512
  %vm730 = vcmp.lt.s32.totalorder %v666, 512
  %vm731 = vcmp.lt.s32.totalorder %v667, 512
  %vm732 = vcmp.lt.s32.totalorder %v668, 512
  %vm733 = vcmp.lt.s32.totalorder %v669, 512
  %vm734 = vcmp.lt.s32.totalorder %v670, 512
  %vm735 = vcmp.lt.s32.totalorder %v671, 512
  %vm736 = vcmp.lt.s32.totalorder %v672, 512
  %vm737 = vcmp.lt.s32.totalorder %v673, 512
  %vm738 = vcmp.lt.s32.totalorder %v674, 512
  %v739 = vsel %vm675, 1, 0
  %v740 = vsel %vm676, 1, 0
  %v741 = vsel %vm677, 1, 0
  %v742 = vsel %vm678, 1, 0
  %v743 = vsel %vm679, 1, 0
  %v744 = vsel %vm680, 1, 0
  %v745 = vsel %vm681, 1, 0
  %v746 = vsel %vm682, 1, 0
  %v747 = vsel %vm683, 1, 0
  %v748 = vsel %vm684, 1, 0
  %v749 = vsel %vm685, 1, 0
  %v750 = vsel %vm686, 1, 0
  %v751 = vsel %vm687, 1, 0
  %v752 = vsel %vm688, 1, 0
  %v753 = vsel %vm689, 1, 0
  %v754 = vsel %vm690, 1, 0
  %v755 = vsel %vm691, 1, 0
  %v756 = vsel %vm692, 1, 0
  %v757 = vsel %vm693, 1, 0
  %v758 = vsel %vm694, 1, 0
  %v759 = vsel %vm695, 1, 0
  %v760 = vsel %vm696, 1, 0
  %v761 = vsel %vm697, 1, 0
  %v762 = vsel %vm698, 1, 0
  %v763 = vsel %vm699, 1, 0
  %v764 = vsel %vm700, 1, 0
  %v765 = vsel %vm701, 1, 0
  %v766 = vsel %vm702, 1, 0
  %v767 = vsel %vm703, 1, 0
  %v768 = vsel %vm704, 1, 0
  %v769 = vsel %vm705, 1, 0
  %v770 = vsel %vm706, 1, 0
  %v771 = vsel %vm707, 1, 0
  %v772 = vsel %vm708, 1, 0
  %v773 = vsel %vm709, 1, 0
  %v774 = vsel %vm710, 1, 0
  %v775 = vsel %vm711, 1, 0
  %v776 = vsel %vm712, 1, 0
  %v777 = vsel %vm713, 1, 0
  %v778 = vsel %vm714, 1, 0
  %v779 = vsel %vm715, 1, 0
  %v780 = vsel %vm716, 1, 0
  %v781 = vsel %vm717, 1, 0
  %v782 = vsel %vm718, 1, 0
  %v783 = vsel %vm719, 1, 0
  %v784 = vsel %vm720, 1, 0
  %v785 = vsel %vm721, 1, 0
  %v786 = vsel %vm722, 1, 0
  %v787 = vsel %vm723, 1, 0
  %v788 = vsel %vm724, 1, 0
  %v789 = vsel %vm725, 1, 0
  %v790 = vsel %vm726, 1, 0
  %v791 = vsel %vm727, 1, 0
  %v792 = vsel %vm728, 1, 0
  %v793 = vsel %vm729, 1, 0
  %v794 = vsel %vm730, 1, 0
  %v795 = vsel %vm731, 1, 0
  %v796 = vsel %vm732, 1, 0
  %v797 = vsel %vm733, 1, 0
  %v798 = vsel %vm734, 1, 0
  %v799 = vsel %vm735, 1, 0
  %v800 = vsel %vm736, 1, 0
  %v801 = vsel %vm737, 1, 0
  %v802 = vsel %vm738, 1, 0
  %vm803 = vcmp.eq.s32.totalorder %v739, 1
  %vm804 = vcmp.eq.s32.totalorder %v740, 1
  %vm805 = vcmp.eq.s32.totalorder %v741, 1
  %vm806 = vcmp.eq.s32.totalorder %v742, 1
  %vm807 = vcmp.eq.s32.totalorder %v743, 1
  %vm808 = vcmp.eq.s32.totalorder %v744, 1
  %vm809 = vcmp.eq.s32.totalorder %v745, 1
  %vm810 = vcmp.eq.s32.totalorder %v746, 1
  %vm811 = vcmp.eq.s32.totalorder %v747, 1
  %vm812 = vcmp.eq.s32.totalorder %v748, 1
  %vm813 = vcmp.eq.s32.totalorder %v749, 1
  %vm814 = vcmp.eq.s32.totalorder %v750, 1
  %vm815 = vcmp.eq.s32.totalorder %v751, 1
  %vm816 = vcmp.eq.s32.totalorder %v752, 1
  %vm817 = vcmp.eq.s32.totalorder %v753, 1
  %vm818 = vcmp.eq.s32.totalorder %v754, 1
  %vm819 = vcmp.eq.s32.totalorder %v755, 1
  %vm820 = vcmp.eq.s32.totalorder %v756, 1
  %vm821 = vcmp.eq.s32.totalorder %v757, 1
  %vm822 = vcmp.eq.s32.totalorder %v758, 1
  %vm823 = vcmp.eq.s32.totalorder %v759, 1
  %vm824 = vcmp.eq.s32.totalorder %v760, 1
  %vm825 = vcmp.eq.s32.totalorder %v761, 1
  %vm826 = vcmp.eq.s32.totalorder %v762, 1
  %vm827 = vcmp.eq.s32.totalorder %v763, 1
  %vm828 = vcmp.eq.s32.totalorder %v764, 1
  %vm829 = vcmp.eq.s32.totalorder %v765, 1
  %vm830 = vcmp.eq.s32.totalorder %v766, 1
  %vm831 = vcmp.eq.s32.totalorder %v767, 1
  %vm832 = vcmp.eq.s32.totalorder %v768, 1
  %vm833 = vcmp.eq.s32.totalorder %v769, 1
  %vm834 = vcmp.eq.s32.totalorder %v770, 1
  %vm835 = vcmp.eq.s32.totalorder %v771, 1
  %vm836 = vcmp.eq.s32.totalorder %v772, 1
  %vm837 = vcmp.eq.s32.totalorder %v773, 1
  %vm838 = vcmp.eq.s32.totalorder %v774, 1
  %vm839 = vcmp.eq.s32.totalorder %v775, 1
  %vm840 = vcmp.eq.s32.totalorder %v776, 1
  %vm841 = vcmp.eq.s32.totalorder %v777, 1
  %vm842 = vcmp.eq.s32.totalorder %v778, 1
  %vm843 = vcmp.eq.s32.totalorder %v779, 1
  %vm844 = vcmp.eq.s32.totalorder %v780, 1
  %vm845 = vcmp.eq.s32.totalorder %v781, 1
  %vm846 = vcmp.eq.s32.totalorder %v782, 1
  %vm847 = vcmp.eq.s32.totalorder %v783, 1
  %vm848 = vcmp.eq.s32.totalorder %v784, 1
  %vm849 = vcmp.eq.s32.totalorder %v785, 1
  %vm850 = vcmp.eq.s32.totalorder %v786, 1
  %vm851 = vcmp.eq.s32.totalorder %v787, 1
  %vm852 = vcmp.eq.s32.totalorder %v788, 1
  %vm853 = vcmp.eq.s32.totalorder %v789, 1
  %vm854 = vcmp.eq.s32.totalorder %v790, 1
  %vm855 = vcmp.eq.s32.totalorder %v791, 1
  %vm856 = vcmp.eq.s32.totalorder %v792, 1
  %vm857 = vcmp.eq.s32.totalorder %v793, 1
  %vm858 = vcmp.eq.s32.totalorder %v794, 1
  %vm859 = vcmp.eq.s32.totalorder %v795, 1
  %vm860 = vcmp.eq.s32.totalorder %v796, 1
  %vm861 = vcmp.eq.s32.totalorder %v797, 1
  %vm862 = vcmp.eq.s32.totalorder %v798, 1
  %vm863 = vcmp.eq.s32.totalorder %v799, 1
  %vm864 = vcmp.eq.s32.totalorder %v800, 1
  %vm865 = vcmp.eq.s32.totalorder %v801, 1
  %vm866 = vcmp.eq.s32.totalorder %v802, 1
  %v867 = vsel %vm803, %v289, 0.0
  %v868 = vsel %vm804, %v292, 0.0
  %v869 = vsel %vm805, %v295, 0.0
  %v870 = vsel %vm806, %v298, 0.0
  %v871 = vsel %vm807, %v301, 0.0
  %v872 = vsel %vm808, %v304, 0.0
  %v873 = vsel %vm809, %v307, 0.0
  %v874 = vsel %vm810, %v310, 0.0
  %v875 = vsel %vm811, %v313, 0.0
  %v876 = vsel %vm812, %v316, 0.0
  %v877 = vsel %vm813, %v319, 0.0
  %v878 = vsel %vm814, %v322, 0.0
  %v879 = vsel %vm815, %v325, 0.0
  %v880 = vsel %vm816, %v328, 0.0
  %v881 = vsel %vm817, %v331, 0.0
  %v882 = vsel %vm818, %v334, 0.0
  %v883 = vsel %vm819, %v337, 0.0
  %v884 = vsel %vm820, %v340, 0.0
  %v885 = vsel %vm821, %v343, 0.0
  %v886 = vsel %vm822, %v346, 0.0
  %v887 = vsel %vm823, %v349, 0.0
  %v888 = vsel %vm824, %v352, 0.0
  %v889 = vsel %vm825, %v355, 0.0
  %v890 = vsel %vm826, %v358, 0.0
  %v891 = vsel %vm827, %v361, 0.0
  %v892 = vsel %vm828, %v364, 0.0
  %v893 = vsel %vm829, %v367, 0.0
  %v894 = vsel %vm830, %v370, 0.0
  %v895 = vsel %vm831, %v373, 0.0
  %v896 = vsel %vm832, %v376, 0.0
  %v897 = vsel %vm833, %v379, 0.0
  %v898 = vsel %vm834, %v382, 0.0
  %v899 = vsel %vm835, %v385, 0.0
  %v900 = vsel %vm836, %v388, 0.0
  %v901 = vsel %vm837, %v391, 0.0
  %v902 = vsel %vm838, %v394, 0.0
  %v903 = vsel %vm839, %v397, 0.0
  %v904 = vsel %vm840, %v400, 0.0
  %v905 = vsel %vm841, %v403, 0.0
  %v906 = vsel %vm842, %v406, 0.0
  %v907 = vsel %vm843, %v409, 0.0
  %v908 = vsel %vm844, %v412, 0.0
  %v909 = vsel %vm845, %v415, 0.0
  %v910 = vsel %vm846, %v418, 0.0
  %v911 = vsel %vm847, %v421, 0.0
  %v912 = vsel %vm848, %v424, 0.0
  %v913 = vsel %vm849, %v427, 0.0
  %v914 = vsel %vm850, %v430, 0.0
  %v915 = vsel %vm851, %v433, 0.0
  %v916 = vsel %vm852, %v436, 0.0
  %v917 = vsel %vm853, %v439, 0.0
  %v918 = vsel %vm854, %v442, 0.0
  %v919 = vsel %vm855, %v445, 0.0
  %v920 = vsel %vm856, %v448, 0.0
  %v921 = vsel %vm857, %v451, 0.0
  %v922 = vsel %vm858, %v454, 0.0
  %v923 = vsel %vm859, %v457, 0.0
  %v924 = vsel %vm860, %v460, 0.0
  %v925 = vsel %vm861, %v463, 0.0
  %v926 = vsel %vm862, %v466, 0.0
  %v927 = vsel %vm863, %v469, 0.0
  %v928 = vsel %vm864, %v472, 0.0
  %v929 = vsel %vm865, %v475, 0.0
  %v930 = vsel %vm866, %v478, 0.0
  %v931 = vadd.f32 %v867, %v868
  %v932 = vadd.f32 %v931, %v869
  %v933 = vadd.f32 %v932, %v870
  %v934 = vadd.f32 %v933, %v871
  %v935 = vadd.f32 %v934, %v872
  %v936 = vadd.f32 %v935, %v873
  %v937 = vadd.f32 %v936, %v874
  %v938 = vadd.f32 %v937, %v875
  %v939 = vadd.f32 %v938, %v876
  %v940 = vadd.f32 %v939, %v877
  %v941 = vadd.f32 %v940, %v878
  %v942 = vadd.f32 %v941, %v879
  %v943 = vadd.f32 %v942, %v880
  %v944 = vadd.f32 %v943, %v881
  %v945 = vadd.f32 %v944, %v882
  %v946 = vadd.f32 %v945, %v883
  %v947 = vadd.f32 %v946, %v884
  %v948 = vadd.f32 %v947, %v885
  %v949 = vadd.f32 %v948, %v886
  %v950 = vadd.f32 %v949, %v887
  %v951 = vadd.f32 %v950, %v888
  %v952 = vadd.f32 %v951, %v889
  %v953 = vadd.f32 %v952, %v890
  %v954 = vadd.f32 %v953, %v891
  %v955 = vadd.f32 %v954, %v892
  %v956 = vadd.f32 %v955, %v893
  %v957 = vadd.f32 %v956, %v894
  %v958 = vadd.f32 %v957, %v895
  %v959 = vadd.f32 %v958, %v896
  %v960 = vadd.f32 %v959, %v897
  %v961 = vadd.f32 %v960, %v898
  %v962 = vadd.f32 %v961, %v899
  %v963 = vadd.f32 %v962, %v900
  %v964 = vadd.f32 %v963, %v901
  %v965 = vadd.f32 %v964, %v902
  %v966 = vadd.f32 %v965, %v903
  %v967 = vadd.f32 %v966, %v904
  %v968 = vadd.f32 %v967, %v905
  %v969 = vadd.f32 %v968, %v906
  %v970 = vadd.f32 %v969, %v907
  %v971 = vadd.f32 %v970, %v908
  %v972 = vadd.f32 %v971, %v909
  %v973 = vadd.f32 %v972, %v910
  %v974 = vadd.f32 %v973, %v911
  %v975 = vadd.f32 %v974, %v912
  %v976 = vadd.f32 %v975, %v913
  %v977 = vadd.f32 %v976, %v914
  %v978 = vadd.f32 %v977, %v915
  %v979 = vadd.f32 %v978, %v916
  %v980 = vadd.f32 %v979, %v917
  %v981 = vadd.f32 %v980, %v918
  %v982 = vadd.f32 %v981, %v919
  %v983 = vadd.f32 %v982, %v920
  %v984 = vadd.f32 %v983, %v921
  %v985 = vadd.f32 %v984, %v922
  %v986 = vadd.f32 %v985, %v923
  %v987 = vadd.f32 %v986, %v924
  %v988 = vadd.f32 %v987, %v925
  %v989 = vadd.f32 %v988, %v926
  %v990 = vadd.f32 %v989, %v927
  %v991 = vadd.f32 %v990, %v928
  %v992 = vadd.f32 %v991, %v929
  %v993 = vadd.f32 %v992, %v930
  %v994 = vrot.slane %v993, 4
  %v995 = vadd.f32 %v993, %v994
  %v996 = vrot.slane %v995, 2
  %v997 = vadd.f32 %v995, %v996
  %v998 = vrot.slane %v997, 1
  %v999 = vadd.f32 %v997, %v998
  %1000 = vst [vmem:[%s3] sm:$0x1] %v999
  %v1001 = vmul.f32 %v867, %v867
  %v1002 = vmul.f32 %v868, %v868
  %v1003 = vmul.f32 %v869, %v869
  %v1004 = vmul.f32 %v870, %v870
  %v1005 = vmul.f32 %v871, %v871
  %v1006 = vmul.f32 %v872, %v872
  %v1007 = vmul.f32 %v873, %v873
  %v1008 = vmul.f32 %v874, %v874
  %v1009 = vmul.f32 %v875, %v875
  %v1010 = vmul.f32 %v876, %v876
  %v1011 = vmul.f32 %v877, %v877
  %v1012 = vmul.f32 %v878, %v878
  %v1013 = vmul.f32 %v879, %v879
  %v1014 = vmul.f32 %v880, %v880
  %v1015 = vmul.f32 %v881, %v881
  %v1016 = vmul.f32 %v882, %v882
  %v1017 = vmul.f32 %v883, %v883
  %v1018 = vmul.f32 %v884, %v884
  %v1019 = vmul.f32 %v885, %v885
  %v1020 = vmul.f32 %v886, %v886
  %v1021 = vmul.f32 %v887, %v887
  %v1022 = vmul.f32 %v888, %v888
  %v1023 = vmul.f32 %v889, %v889
  %v1024 = vmul.f32 %v890, %v890
  %v1025 = vmul.f32 %v891, %v891
  %v1026 = vmul.f32 %v892, %v892
  %v1027 = vmul.f32 %v893, %v893
  %v1028 = vmul.f32 %v894, %v894
  %v1029 = vmul.f32 %v895, %v895
  %v1030 = vmul.f32 %v896, %v896
  %v1031 = vmul.f32 %v897, %v897
  %v1032 = vmul.f32 %v898, %v898
  %v1033 = vmul.f32 %v899, %v899
  %v1034 = vmul.f32 %v900, %v900
  %v1035 = vmul.f32 %v901, %v901
  %v1036 = vmul.f32 %v902, %v902
  %v1037 = vmul.f32 %v903, %v903
  %v1038 = vmul.f32 %v904, %v904
  %v1039 = vmul.f32 %v905, %v905
  %v1040 = vmul.f32 %v906, %v906
  %v1041 = vmul.f32 %v907, %v907
  %v1042 = vmul.f32 %v908, %v908
  %v1043 = vmul.f32 %v909, %v909
  %v1044 = vmul.f32 %v910, %v910
  %v1045 = vmul.f32 %v911, %v911
  %v1046 = vmul.f32 %v912, %v912
  %v1047 = vmul.f32 %v913, %v913
  %v1048 = vmul.f32 %v914, %v914
  %v1049 = vmul.f32 %v915, %v915
  %v1050 = vmul.f32 %v916, %v916
  %v1051 = vmul.f32 %v917, %v917
  %v1052 = vmul.f32 %v918, %v918
  %v1053 = vmul.f32 %v919, %v919
  %v1054 = vmul.f32 %v920, %v920
  %v1055 = vmul.f32 %v921, %v921
  %v1056 = vmul.f32 %v922, %v922
  %v1057 = vmul.f32 %v923, %v923
  %v1058 = vmul.f32 %v924, %v924
  %v1059 = vmul.f32 %v925, %v925
  %v1060 = vmul.f32 %v926, %v926
  %v1061 = vmul.f32 %v927, %v927
  %v1062 = vmul.f32 %v928, %v928
  %v1063 = vmul.f32 %v929, %v929
  %v1064 = vmul.f32 %v930, %v930
  %v1065 = vadd.f32 %v1001, %v1002
  %v1066 = vadd.f32 %v1065, %v1003
  %v1067 = vadd.f32 %v1066, %v1004
  %v1068 = vadd.f32 %v1067, %v1005
  %v1069 = vadd.f32 %v1068, %v1006
  %v1070 = vadd.f32 %v1069, %v1007
  %v1071 = vadd.f32 %v1070, %v1008
  %v1072 = vadd.f32 %v1071, %v1009
  %v1073 = vadd.f32 %v1072, %v1010
  %v1074 = vadd.f32 %v1073, %v1011
  %v1075 = vadd.f32 %v1074, %v1012
  %v1076 = vadd.f32 %v1075, %v1013
  %v1077 = vadd.f32 %v1076, %v1014
  %v1078 = vadd.f32 %v1077, %v1015
  %v1079 = vadd.f32 %v1078, %v1016
  %v1080 = vadd.f32 %v1079, %v1017
  %v1081 = vadd.f32 %v1080, %v1018
  %v1082 = vadd.f32 %v1081, %v1019
  %v1083 = vadd.f32 %v1082, %v1020
  %v1084 = vadd.f32 %v1083, %v1021
  %v1085 = vadd.f32 %v1084, %v1022
  %v1086 = vadd.f32 %v1085, %v1023
  %v1087 = vadd.f32 %v1086, %v1024
  %v1088 = vadd.f32 %v1087, %v1025
  %v1089 = vadd.f32 %v1088, %v1026
  %v1090 = vadd.f32 %v1089, %v1027
  %v1091 = vadd.f32 %v1090, %v1028
  %v1092 = vadd.f32 %v1091, %v1029
  %v1093 = vadd.f32 %v1092, %v1030
  %v1094 = vadd.f32 %v1093, %v1031
  %v1095 = vadd.f32 %v1094, %v1032
  %v1096 = vadd.f32 %v1095, %v1033
  %v1097 = vadd.f32 %v1096, %v1034
  %v1098 = vadd.f32 %v1097, %v1035
  %v1099 = vadd.f32 %v1098, %v1036
  %v1100 = vadd.f32 %v1099, %v1037
  %v1101 = vadd.f32 %v1100, %v1038
  %v1102 = vadd.f32 %v1101, %v1039
  %v1103 = vadd.f32 %v1102, %v1040
  %v1104 = vadd.f32 %v1103, %v1041
  %v1105 = vadd.f32 %v1104, %v1042
  %v1106 = vadd.f32 %v1105, %v1043
  %v1107 = vadd.f32 %v1106, %v1044
  %v1108 = vadd.f32 %v1107, %v1045
  %v1109 = vadd.f32 %v1108, %v1046
  %v1110 = vadd.f32 %v1109, %v1047
  %v1111 = vadd.f32 %v1110, %v1048
  %v1112 = vadd.f32 %v1111, %v1049
  %v1113 = vadd.f32 %v1112, %v1050
  %v1114 = vadd.f32 %v1113, %v1051
  %v1115 = vadd.f32 %v1114, %v1052
  %v1116 = vadd.f32 %v1115, %v1053
  %v1117 = vadd.f32 %v1116, %v1054
  %v1118 = vadd.f32 %v1117, %v1055
  %v1119 = vadd.f32 %v1118, %v1056
  %v1120 = vadd.f32 %v1119, %v1057
  %v1121 = vadd.f32 %v1120, %v1058
  %v1122 = vadd.f32 %v1121, %v1059
  %v1123 = vadd.f32 %v1122, %v1060
  %v1124 = vadd.f32 %v1123, %v1061
  %v1125 = vadd.f32 %v1124, %v1062
  %v1126 = vadd.f32 %v1125, %v1063
  %v1127 = vadd.f32 %v1126, %v1064
  %v1128 = vrot.slane %v1127, 4
  %v1129 = vadd.f32 %v1127, %v1128
  %v1130 = vrot.slane %v1129, 2
  %v1131 = vadd.f32 %v1129, %v1130
  %v1132 = vrot.slane %v1131, 1
  %v1133 = vadd.f32 %v1131, %v1132
  %1134 = vst [vmem:[%s3 + $0x1] sm:$0x1] %v1133
  // Predicated region
  $region10: #{bottleneck_block_forward.3} parent=0 // pred_check
    _
  $region11: #{bottleneck_block_forward.3} parent=0 // pred_check_branch
    %1136 = sbr.rel (0) target = $region13
  $region12: #{bottleneck_block_forward.3} parent=0 // pred_region
    _
  $region13: #{bottleneck_block_forward.3} parent=0 // pred_fallthru
    _
  // Predicated region
  $region14: #{bottleneck_block_forward.3} parent=0 // pred_check
    _
  $region15: #{bottleneck_block_forward.3} parent=0 // pred_check_branch
    %1138 = sbr.rel (0) target = $region17
  $region16: #{bottleneck_block_forward.3} parent=0 // pred_region
    _
  $region17: #{bottleneck_block_forward.3} parent=0 // pred_fallthru
    _
  // Predicated region
  $region18: #{bottleneck_block_forward.3} parent=0 // pred_check
    _
  $region19: #{bottleneck_block_forward.3} parent=0 // pred_check_branch
    %1140 = sbr.rel (0) target = $region21
  $region20: #{bottleneck_block_forward.3} parent=0 // pred_region
    _
  $region21: #{bottleneck_block_forward.3} parent=0 // pred_fallthru
    _
  // Predicated region
  $region22: #{bottleneck_block_forward.3} parent=0 // pred_check
    _
  $region23: #{bottleneck_block_forward.3} parent=0 // pred_check_branch
    %1142 = sbr.rel (0) target = $region25
  $region24: #{bottleneck_block_forward.3} parent=0 // pred_region
    _
  $region25: #{bottleneck_block_forward.3} parent=0 // pred_fallthru
    _

// kernel: bottleneck_block_forward.5
$region0: #{bottleneck_block_forward.5}
  #allocation0 [shape = 'u32[]', space=smem, size = 0x4, offset = 0x4, fixed_abs, tag = 'smem constant byte address 0x4 - core index']
  #allocation1 [shape = 'u32[72,128]{1,0:T(1,128)}', space=vmem, size = 0x9000, scoped, tag = 'internal scratch']
  %s0 = inlined_call_operand.vmem [shape: f32[392,128], index: 0, kind: input, shape index: {}]
  %s1 = inlined_call_operand.vmem [shape: f32[128,128], index: 1, kind: input, shape index: {}]
  %s2 = inlined_call_operand.vmem [shape: f32[1,128], index: 2, kind: input, shape index: {}]
  %s3 = inlined_call_operand.vmem [shape: f32[392,128], index: 3, kind: output, shape index: {}]
  %s4 = sld [smem:[#allocation0]]
  $region22: #{bottleneck_block_forward.5} parent=0
    _
  %s6 = ssub.s32 1, %s4
  %s7 = scalar_select 0, %s6, %s4
  // Predicated region
  $region2: #{bottleneck_block_forward.5} parent=0 // pred_check
    _
  $region3: #{bottleneck_block_forward.5} parent=0 // pred_check_branch
    %9 = sbr.rel (0) target = $region5
  $region4: #{bottleneck_block_forward.5} parent=0 // pred_region
    _
  $region5: #{bottleneck_block_forward.5} parent=0 // pred_fallthru
    _
  // Predicated region
  $region6: #{bottleneck_block_forward.5} parent=0 // pred_check
    _
  $region7: #{bottleneck_block_forward.5} parent=0 // pred_check_branch
    %11 = sbr.rel (0) target = $region9
  $region8: #{bottleneck_block_forward.5} parent=0 // pred_region
    _
  $region9: #{bottleneck_block_forward.5} parent=0 // pred_fallthru
    _
  // Predicated region
  $region10: #{bottleneck_block_forward.5} parent=0 // pred_check
    _
  $region11: #{bottleneck_block_forward.5} parent=0 // pred_check_branch
    %13 = sbr.rel (0) target = $region13
  $region12: #{bottleneck_block_forward.5} parent=0 // pred_region
    _
  $region13: #{bottleneck_block_forward.5} parent=0 // pred_fallthru
    _
  %v14 = vld [vmem:[%s0] sm:$0xff]
  %v15 = vld [vmem:[%s0 + $0x8] sm:$0xff]
  %v16 = vld [vmem:[%s0 + $0x10] sm:$0xff]
  %v17 = vld [vmem:[%s0 + $0x18] sm:$0xff]
  %v18 = vld [vmem:[%s0 + $0x20] sm:$0xff]
  %v19 = vld [vmem:[%s0 + $0x28] sm:$0xff]
  %v20 = vld [vmem:[%s0 + $0x30] sm:$0xff]
  %v21 = vld [vmem:[%s0 + $0x38] sm:$0xff]
  %v22 = vld [vmem:[%s0 + $0x40] sm:$0xff]
  %v23 = vld [vmem:[%s0 + $0x48] sm:$0xff]
  %v24 = vld [vmem:[%s0 + $0x50] sm:$0xff]
  %v25 = vld [vmem:[%s0 + $0x58] sm:$0xff]
  %v26 = vld [vmem:[%s0 + $0x60] sm:$0xff]
  %v27 = vld [vmem:[%s0 + $0x68] sm:$0xff]
  %v28 = vld [vmem:[%s0 + $0x70] sm:$0xff]
  %v29 = vld [vmem:[%s0 + $0x78] sm:$0xff]
  %v30 = vld [vmem:[%s0 + $0x80] sm:$0xff]
  %v31 = vld [vmem:[%s0 + $0x88] sm:$0xff]
  %v32 = vld [vmem:[%s0 + $0x90] sm:$0xff]
  %v33 = vld [vmem:[%s0 + $0x98] sm:$0xff]
  %v34 = vld [vmem:[%s0 + $0xa0] sm:$0xff]
  %v35 = vld [vmem:[%s0 + $0xa8] sm:$0xff]
  %v36 = vld [vmem:[%s0 + $0xb0] sm:$0xff]
  %v37 = vld [vmem:[%s0 + $0xb8] sm:$0xff]
  %v38 = vld [vmem:[%s0 + $0xc0] sm:$0xff]
  %v39 = vld [vmem:[%s0 + $0xc8] sm:$0xff]
  %v40 = vld [vmem:[%s0 + $0xd0] sm:$0xff]
  %v41 = vld [vmem:[%s0 + $0xd8] sm:$0xff]
  %v42 = vld [vmem:[%s0 + $0xe0] sm:$0xff]
  %v43 = vld [vmem:[%s0 + $0xe8] sm:$0xff]
  %v44 = vld [vmem:[%s0 + $0xf0] sm:$0xff]
  %v45 = vld [vmem:[%s0 + $0xf8] sm:$0xff]
  %v46 = vld [vmem:[%s0 + $0x100] sm:$0xff]
  %v47 = vld [vmem:[%s0 + $0x108] sm:$0xff]
  %v48 = vld [vmem:[%s0 + $0x110] sm:$0xff]
  %v49 = vld [vmem:[%s0 + $0x118] sm:$0xff]
  %v50 = vld [vmem:[%s0 + $0x120] sm:$0xff]
  %v51 = vld [vmem:[%s0 + $0x128] sm:$0xff]
  %v52 = vld [vmem:[%s0 + $0x130] sm:$0xff]
  %v53 = vld [vmem:[%s0 + $0x138] sm:$0xff]
  %v54 = vld [vmem:[%s0 + $0x140] sm:$0xff]
  %v55 = vld [vmem:[%s0 + $0x148] sm:$0xff]
  %v56 = vld [vmem:[%s0 + $0x150] sm:$0xff]
  %v57 = vld [vmem:[%s0 + $0x158] sm:$0xff]
  %v58 = vld [vmem:[%s0 + $0x160] sm:$0xff]
  %v59 = vld [vmem:[%s0 + $0x168] sm:$0xff]
  %v60 = vld [vmem:[%s0 + $0x170] sm:$0xff]
  %v61 = vld [vmem:[%s0 + $0x178] sm:$0xff]
  %v62 = vld [vmem:[%s0 + $0x180] sm:$0xff]
  %v63 = vld [vmem:[%s1] sm:$0xff]
  %v64 = vld [vmem:[%s1 + $0x8] sm:$0xff]
  %v65 = vld [vmem:[%s1 + $0x10] sm:$0xff]
  %v66 = vld [vmem:[%s1 + $0x18] sm:$0xff]
  %v67 = vld [vmem:[%s1 + $0x20] sm:$0xff]
  %v68 = vld [vmem:[%s1 + $0x28] sm:$0xff]
  %v69 = vld [vmem:[%s1 + $0x30] sm:$0xff]
  %v70 = vld [vmem:[%s1 + $0x38] sm:$0xff]
  %v71 = vld [vmem:[%s1 + $0x40] sm:$0xff]
  %v72 = vld [vmem:[%s1 + $0x48] sm:$0xff]
  %v73 = vld [vmem:[%s1 + $0x50] sm:$0xff]
  %v74 = vld [vmem:[%s1 + $0x58] sm:$0xff]
  %v75 = vld [vmem:[%s1 + $0x60] sm:$0xff]
  %v76 = vld [vmem:[%s1 + $0x68] sm:$0xff]
  %v77 = vld [vmem:[%s1 + $0x70] sm:$0xff]
  %v78 = vld [vmem:[%s1 + $0x78] sm:$0xff]
  %v79 = vld [vmem:[%s2] sm:$0x1]
  %v81 = vperm.slane %v79, 0
  %83 = vmatpush.msra.mxu0 %v78
  %84 = vmatpush.msra.mxu0 %v77
  %85 = vmatpush.msra.mxu0 %v76
  %86 = vmatpush.msra.mxu0 %v75
  %87 = vmatpush.msra.mxu0 %v74
  %88 = vmatpush.msra.mxu0 %v73
  %89 = vmatpush.msra.mxu0 %v72
  %90 = vmatpush.msra.mxu0 %v71
  %91 = vmatpush.msra.mxu0 %v70
  %92 = vmatpush.msra.mxu0 %v69
  %93 = vmatpush.msra.mxu0 %v68
  %94 = vmatpush.msra.mxu0 %v67
  %95 = vmatpush.msra.mxu0 %v66
  %96 = vmatpush.msra.mxu0 %v65
  %97 = vmatpush.msra.mxu0 %v64
  %98 = vmatpush.msra.mxu0 %v63
  %99 = vmatmul.f32.gmra.mxu0 %v14
  %v100 = vpop.f32.mrf.mxu0
  %v101 = vadd.f32 %v81, %v100
  %102 = vmatmul.f32.gmra.mxu0 %v15
  %v103 = vpop.f32.mrf.mxu0
  %v104 = vadd.f32 %v81, %v103
  %105 = vmatmul.f32.gmra.mxu0 %v16
  %v106 = vpop.f32.mrf.mxu0
  %v107 = vadd.f32 %v81, %v106
  %108 = vmatmul.f32.gmra.mxu0 %v17
  %v109 = vpop.f32.mrf.mxu0
  %v110 = vadd.f32 %v81, %v109
  %111 = vmatmul.f32.gmra.mxu0 %v18
  %v112 = vpop.f32.mrf.mxu0
  %v113 = vadd.f32 %v81, %v112
  %114 = vmatmul.f32.gmra.mxu0 %v19
  %v115 = vpop.f32.mrf.mxu0
  %v116 = vadd.f32 %v81, %v115
  %117 = vmatmul.f32.gmra.mxu0 %v20
  %v118 = vpop.f32.mrf.mxu0
  %v119 = vadd.f32 %v81, %v118
  %120 = vmatmul.f32.gmra.mxu0 %v21
  %v121 = vpop.f32.mrf.mxu0
  %v122 = vadd.f32 %v81, %v121
  %123 = vmatmul.f32.gmra.mxu0 %v22
  %v124 = vpop.f32.mrf.mxu0
  %v125 = vadd.f32 %v81, %v124
  %126 = vmatmul.f32.gmra.mxu0 %v23
  %v127 = vpop.f32.mrf.mxu0
  %v128 = vadd.f32 %v81, %v127
  %129 = vmatmul.f32.gmra.mxu0 %v24
  %v130 = vpop.f32.mrf.mxu0
  %v131 = vadd.f32 %v81, %v130
  %132 = vmatmul.f32.gmra.mxu0 %v25
  %v133 = vpop.f32.mrf.mxu0
  %v134 = vadd.f32 %v81, %v133
  %135 = vmatmul.f32.gmra.mxu0 %v26
  %v136 = vpop.f32.mrf.mxu0
  %v137 = vadd.f32 %v81, %v136
  %138 = vmatmul.f32.gmra.mxu0 %v27
  %v139 = vpop.f32.mrf.mxu0
  %v140 = vadd.f32 %v81, %v139
  %141 = vmatmul.f32.gmra.mxu0 %v28
  %v142 = vpop.f32.mrf.mxu0
  %v143 = vadd.f32 %v81, %v142
  %144 = vmatmul.f32.gmra.mxu0 %v29
  %v145 = vpop.f32.mrf.mxu0
  %v146 = vadd.f32 %v81, %v145
  %147 = vmatmul.f32.gmra.mxu0 %v30
  %v148 = vpop.f32.mrf.mxu0
  %v149 = vadd.f32 %v81, %v148
  %150 = vmatmul.f32.gmra.mxu0 %v31
  %v151 = vpop.f32.mrf.mxu0
  %v152 = vadd.f32 %v81, %v151
  %153 = vmatmul.f32.gmra.mxu0 %v32
  %v154 = vpop.f32.mrf.mxu0
  %v155 = vadd.f32 %v81, %v154
  %156 = vmatmul.f32.gmra.mxu0 %v33
  %v157 = vpop.f32.mrf.mxu0
  %v158 = vadd.f32 %v81, %v157
  %159 = vmatmul.f32.gmra.mxu0 %v34
  %v160 = vpop.f32.mrf.mxu0
  %v161 = vadd.f32 %v81, %v160
  %162 = vmatmul.f32.gmra.mxu0 %v35
  %v163 = vpop.f32.mrf.mxu0
  %v164 = vadd.f32 %v81, %v163
  %165 = vmatmul.f32.gmra.mxu0 %v36
  %v166 = vpop.f32.mrf.mxu0
  %v167 = vadd.f32 %v81, %v166
  %168 = vmatmul.f32.gmra.mxu0 %v37
  %v169 = vpop.f32.mrf.mxu0
  %v170 = vadd.f32 %v81, %v169
  %171 = vmatmul.f32.gmra.mxu0 %v38
  %v172 = vpop.f32.mrf.mxu0
  %v173 = vadd.f32 %v81, %v172
  %174 = vmatmul.f32.gmra.mxu0 %v39
  %v175 = vpop.f32.mrf.mxu0
  %v176 = vadd.f32 %v81, %v175
  %177 = vmatmul.f32.gmra.mxu0 %v40
  %v178 = vpop.f32.mrf.mxu0
  %v179 = vadd.f32 %v81, %v178
  %180 = vmatmul.f32.gmra.mxu0 %v41
  %v181 = vpop.f32.mrf.mxu0
  %v182 = vadd.f32 %v81, %v181
  %183 = vmatmul.f32.gmra.mxu0 %v42
  %v184 = vpop.f32.mrf.mxu0
  %v185 = vadd.f32 %v81, %v184
  %186 = vmatmul.f32.gmra.mxu0 %v43
  %v187 = vpop.f32.mrf.mxu0
  %v188 = vadd.f32 %v81, %v187
  %189 = vmatmul.f32.gmra.mxu0 %v44
  %v190 = vpop.f32.mrf.mxu0
  %v191 = vadd.f32 %v81, %v190
  %192 = vmatmul.f32.gmra.mxu0 %v45
  %v193 = vpop.f32.mrf.mxu0
  %v194 = vadd.f32 %v81, %v193
  %195 = vmatmul.f32.gmra.mxu0 %v46
  %v196 = vpop.f32.mrf.mxu0
  %v197 = vadd.f32 %v81, %v196
  %198 = vmatmul.f32.gmra.mxu0 %v47
  %v199 = vpop.f32.mrf.mxu0
  %v200 = vadd.f32 %v81, %v199
  %201 = vmatmul.f32.gmra.mxu0 %v48
  %v202 = vpop.f32.mrf.mxu0
  %v203 = vadd.f32 %v81, %v202
  %204 = vmatmul.f32.gmra.mxu0 %v49
  %v205 = vpop.f32.mrf.mxu0
  %v206 = vadd.f32 %v81, %v205
  %207 = vmatmul.f32.gmra.mxu0 %v50
  %v208 = vpop.f32.mrf.mxu0
  %v209 = vadd.f32 %v81, %v208
  %210 = vmatmul.f32.gmra.mxu0 %v51
  %v211 = vpop.f32.mrf.mxu0
  %v212 = vadd.f32 %v81, %v211
  %213 = vmatmul.f32.gmra.mxu0 %v52
  %v214 = vpop.f32.mrf.mxu0
  %v215 = vadd.f32 %v81, %v214
  %216 = vmatmul.f32.gmra.mxu0 %v53
  %v217 = vpop.f32.mrf.mxu0
  %v218 = vadd.f32 %v81, %v217
  %219 = vmatmul.f32.gmra.mxu0 %v54
  %v220 = vpop.f32.mrf.mxu0
  %v221 = vadd.f32 %v81, %v220
  %222 = vmatmul.f32.gmra.mxu0 %v55
  %v223 = vpop.f32.mrf.mxu0
  %v224 = vadd.f32 %v81, %v223
  %225 = vmatmul.f32.gmra.mxu0 %v56
  %v226 = vpop.f32.mrf.mxu0
  %v227 = vadd.f32 %v81, %v226
  %228 = vmatmul.f32.gmra.mxu0 %v57
  %v229 = vpop.f32.mrf.mxu0
  %v230 = vadd.f32 %v81, %v229
  %231 = vmatmul.f32.gmra.mxu0 %v58
  %v232 = vpop.f32.mrf.mxu0
  %v233 = vadd.f32 %v81, %v232
  %234 = vmatmul.f32.gmra.mxu0 %v59
  %v235 = vpop.f32.mrf.mxu0
  %v236 = vadd.f32 %v81, %v235
  %237 = vmatmul.f32.gmra.mxu0 %v60
  %v238 = vpop.f32.mrf.mxu0
  %v239 = vadd.f32 %v81, %v238
  %240 = vmatmul.f32.gmra.mxu0 %v61
  %v241 = vpop.f32.mrf.mxu0
  %v242 = vadd.f32 %v81, %v241
  %243 = vmatmul.f32.gmra.mxu0 %v62
  %v244 = vpop.f32.mrf.mxu0
  %v245 = vadd.f32 %v81, %v244
  %246 = vdwg.mxu0
  %v247 = vmax.f32 %v101, 0.0
  %v248 = vmax.f32 %v104, 0.0
  %v249 = vmax.f32 %v107, 0.0
  %v250 = vmax.f32 %v110, 0.0
  %v251 = vmax.f32 %v113, 0.0
  %v252 = vmax.f32 %v116, 0.0
  %v253 = vmax.f32 %v119, 0.0
  %v254 = vmax.f32 %v122, 0.0
  %v255 = vmax.f32 %v125, 0.0
  %v256 = vmax.f32 %v128, 0.0
  %v257 = vmax.f32 %v131, 0.0
  %v258 = vmax.f32 %v134, 0.0
  %v259 = vmax.f32 %v137, 0.0
  %v260 = vmax.f32 %v140, 0.0
  %v261 = vmax.f32 %v143, 0.0
  %v262 = vmax.f32 %v146, 0.0
  %v263 = vmax.f32 %v149, 0.0
  %v264 = vmax.f32 %v152, 0.0
  %v265 = vmax.f32 %v155, 0.0
  %v266 = vmax.f32 %v158, 0.0
  %v267 = vmax.f32 %v161, 0.0
  %v268 = vmax.f32 %v164, 0.0
  %v269 = vmax.f32 %v167, 0.0
  %v270 = vmax.f32 %v170, 0.0
  %v271 = vmax.f32 %v173, 0.0
  %v272 = vmax.f32 %v176, 0.0
  %v273 = vmax.f32 %v179, 0.0
  %v274 = vmax.f32 %v182, 0.0
  %v275 = vmax.f32 %v185, 0.0
  %v276 = vmax.f32 %v188, 0.0
  %v277 = vmax.f32 %v191, 0.0
  %v278 = vmax.f32 %v194, 0.0
  %v279 = vmax.f32 %v197, 0.0
  %v280 = vmax.f32 %v200, 0.0
  %v281 = vmax.f32 %v203, 0.0
  %v282 = vmax.f32 %v206, 0.0
  %v283 = vmax.f32 %v209, 0.0
  %v284 = vmax.f32 %v212, 0.0
  %v285 = vmax.f32 %v215, 0.0
  %v286 = vmax.f32 %v218, 0.0
  %v287 = vmax.f32 %v221, 0.0
  %v288 = vmax.f32 %v224, 0.0
  %v289 = vmax.f32 %v227, 0.0
  %v290 = vmax.f32 %v230, 0.0
  %v291 = vmax.f32 %v233, 0.0
  %v292 = vmax.f32 %v236, 0.0
  %v293 = vmax.f32 %v239, 0.0
  %v294 = vmax.f32 %v242, 0.0
  %v295 = vmax.f32 %v245, 0.0
  %296 = vst [vmem:[%s3] sm:$0xff] %v247
  %297 = vst [vmem:[%s3 + $0x8] sm:$0xff] %v248
  %298 = vst [vmem:[%s3 + $0x10] sm:$0xff] %v249
  %299 = vst [vmem:[%s3 + $0x18] sm:$0xff] %v250
  %300 = vst [vmem:[%s3 + $0x20] sm:$0xff] %v251
  %301 = vst [vmem:[%s3 + $0x28] sm:$0xff] %v252
  %302 = vst [vmem:[%s3 + $0x30] sm:$0xff] %v253
  %303 = vst [vmem:[%s3 + $0x38] sm:$0xff] %v254
  %304 = vst [vmem:[%s3 + $0x40] sm:$0xff] %v255
  %305 = vst [vmem:[%s3 + $0x48] sm:$0xff] %v256
  %306 = vst [vmem:[%s3 + $0x50] sm:$0xff] %v257
  %307 = vst [vmem:[%s3 + $0x58] sm:$0xff] %v258
  %308 = vst [vmem:[%s3 + $0x60] sm:$0xff] %v259
  %309 = vst [vmem:[%s3 + $0x68] sm:$0xff] %v260
  %310 = vst [vmem:[%s3 + $0x70] sm:$0xff] %v261
  %311 = vst [vmem:[%s3 + $0x78] sm:$0xff] %v262
  %312 = vst [vmem:[%s3 + $0x80] sm:$0xff] %v263
  %313 = vst [vmem:[%s3 + $0x88] sm:$0xff] %v264
  %314 = vst [vmem:[%s3 + $0x90] sm:$0xff] %v265
  %315 = vst [vmem:[%s3 + $0x98] sm:$0xff] %v266
  %316 = vst [vmem:[%s3 + $0xa0] sm:$0xff] %v267
  %317 = vst [vmem:[%s3 + $0xa8] sm:$0xff] %v268
  %318 = vst [vmem:[%s3 + $0xb0] sm:$0xff] %v269
  %319 = vst [vmem:[%s3 + $0xb8] sm:$0xff] %v270
  %320 = vst [vmem:[%s3 + $0xc0] sm:$0xff] %v271
  %321 = vst [vmem:[%s3 + $0xc8] sm:$0xff] %v272
  %322 = vst [vmem:[%s3 + $0xd0] sm:$0xff] %v273
  %323 = vst [vmem:[%s3 + $0xd8] sm:$0xff] %v274
  %324 = vst [vmem:[%s3 + $0xe0] sm:$0xff] %v275
  %325 = vst [vmem:[%s3 + $0xe8] sm:$0xff] %v276
  %326 = vst [vmem:[%s3 + $0xf0] sm:$0xff] %v277
  %327 = vst [vmem:[%s3 + $0xf8] sm:$0xff] %v278
  %328 = vst [vmem:[%s3 + $0x100] sm:$0xff] %v279
  %329 = vst [vmem:[%s3 + $0x108] sm:$0xff] %v280
  %330 = vst [vmem:[%s3 + $0x110] sm:$0xff] %v281
  %331 = vst [vmem:[%s3 + $0x118] sm:$0xff] %v282
  %332 = vst [vmem:[%s3 + $0x120] sm:$0xff] %v283
  %333 = vst [vmem:[%s3 + $0x128] sm:$0xff] %v284
  %334 = vst [vmem:[%s3 + $0x130] sm:$0xff] %v285
  %335 = vst [vmem:[%s3 + $0x138] sm:$0xff] %v286
  %336 = vst [vmem:[%s3 + $0x140] sm:$0xff] %v287
  %337 = vst [vmem:[%s3 + $0x148] sm:$0xff] %v288
  %338 = vst [vmem:[%s3 + $0x150] sm:$0xff] %v289
  %339 = vst [vmem:[%s3 + $0x158] sm:$0xff] %v290
  %340 = vst [vmem:[%s3 + $0x160] sm:$0xff] %v291
  %341 = vst [vmem:[%s3 + $0x168] sm:$0xff] %v292
  %342 = vst [vmem:[%s3 + $0x170] sm:$0xff] %v293
  %343 = vst [vmem:[%s3 + $0x178] sm:$0xff] %v294
  %344 = vst [vmem:[%s3 + $0x180] sm:$0xff] %v295
  // Predicated region
  $region14: #{bottleneck_block_forward.5} parent=0 // pred_check
    _
  $region15: #{bottleneck_block_forward.5} parent=0 // pred_check_branch
    %346 = sbr.rel (0) target = $region17
  $region16: #{bottleneck_block_forward.5} parent=0 // pred_region
    _
  $region17: #{bottleneck_block_forward.5} parent=0 // pred_fallthru
    _
  // Predicated region
  $region18: #{bottleneck_block_forward.5} parent=0 // pred_check
    _
  $region19: #{bottleneck_block_forward.5} parent=0 // pred_check_branch
    %348 = sbr.rel (0) target = $region21
  $region20: #{bottleneck_block_forward.5} parent=0 // pred_region
    _
  $region21: #{bottleneck_block_forward.5} parent=0 // pred_fallthru
    _

// kernel: bottleneck_block_forward.4
$region0: #{bottleneck_block_forward.4}
  #allocation0 [shape = 'u32[]', space=smem, size = 0x4, offset = 0x4, fixed_abs, tag = 'smem constant byte address 0x4 - core index']
  #allocation1 [shape = 'u32[72,128]{1,0:T(1,128)}', space=vmem, size = 0x9000, scoped, tag = 'internal scratch']
  %s0 = inlined_call_operand.vmem [shape: f32[2,16,16,128], index: 0, kind: input, shape index: {}, may-alias: {0,1,2}]
  %s1 = inlined_call_operand.vmem [shape: f32[2,16,16,128], index: 1, kind: input, shape index: {}, may-alias: {0,1,2}]
  %s2 = inlined_call_operand.vmem [shape: f32[2,16,16,128], index: 2, kind: input, shape index: {}, may-alias: {0,1,2}]
  %s3 = inlined_call_operand.vmem [shape: f32[1,128], index: 3, kind: input, shape index: {}]
  %s4 = inlined_call_operand.vmem [shape: f32[1,128], index: 4, kind: input, shape index: {}]
  %s5 = inlined_call_operand.vmem [shape: f32[3,3,128,128], index: 5, kind: input, shape index: {}]
  %s6 = inlined_call_operand.vmem [shape: f32[2,14,14,128], index: 6, kind: output, shape index: {0}]
  %s7 = inlined_call_operand.vmem [shape: f32[4,2,128], index: 7, kind: output, shape index: {1}]
  %8 = xla_tuple %s6, %s7
  %s9 = sld [smem:[#allocation0]]
  $region65: #{bottleneck_block_forward.4} parent=0
    _
  %s11 = ssub.s32 1, %s9
  %s12 = scalar_select 0, %s11, %s9
  loop: start=0, step=1, limit=6
  $region2: #{bottleneck_block_forward.4} parent=0 // loop_pre_header
    _
  $region3: #{bottleneck_block_forward.4} parent=0 // loop_header
    %s14 = sphi 0, %s18
    %p15 = scmp.ge.s32.totalorder %s14, 6
    %s21 = sphi 0, %s33
    %s22 = sphi 0, %s29
    %s23 = sphi 0, %s21
    %s24 = sphi 0, %s22
    %s25 = sphi 0, %s23
    %s26 = sphi 0, %s24
    %s38 = sphi 0, %s40
    %s41 = sphi 0, %s38
    %s42 = sphi 0, %s41
    %s58 = sphi 0, %s42
    %s70 = sphi 0, %s72
    %s73 = sphi 0, %s70
    %s74 = sphi 0, %s73
    %s90 = sphi 0, %s74
    %s104 = sphi 0, %s106
    %s107 = sphi 0, %s104
    %s108 = sphi 0, %s107
    %s124 = sphi 0, %s108
    %s128 = sphi 0, %s128
    %s130 = sphi 0, %s128
    %s131 = sphi 0, %s130
    %s145 = sphi 0, %s131
    %s149 = sphi 0, %s149
    %s151 = sphi 0, %s149
    %s152 = sphi 0, %s151
    %s166 = sphi 0, %s152
    %s170 = sphi 0, %s170
    %s172 = sphi 0, %s170
    %s173 = sphi 0, %s172
    %s187 = sphi 0, %s173
    %s195 = sphi 0, %s197
    %s198 = sphi 0, %s195
    %s199 = sphi 0, %s198
    %s215 = sphi 0, %s199
    %s225 = sphi 0, %s227
    %s228 = sphi 0, %s225
    %s229 = sphi 0, %s228
    %s245 = sphi 0, %s229
  $region4: #{bottleneck_block_forward.4} parent=0 // loop_header_branch
    %17 = sbr.rel (%p15) target = $region8
  $region5: #{bottleneck_block_forward.4} parent=0 // loop_body
    %s19 = ssub.s32 %s14, 1
    %s20 = ssub.s32 %s14, 2
    %s27 = sadd.s32 1, %s22
    %p28 = scmp.ge.s32.totalorder %s27, 2
    %s29 = scalar_select %p28, 0, %s27
    %s30 = sadd.s32 1, %s21
    %s31 = scalar_select %p28, %s30, %s21
    %p32 = scmp.ge.s32.totalorder %s31, 2
    %s33 = scalar_select %p32, 0, %s31
    %s34 = ssub.s32 %s21, %s33
    %s35 = ssub.s32 %s22, %s29
    %s36 = sor.u32 %s34, %s35
    %p37 = scmp.eq.s32.totalorder %s36, 0
    %s39 = sadd.s32 %s38, 1
    %s40 = scalar_select %p37, %s38, %s39
    %p43 = pneg %p37
    %p44 = scmp.eq.s32.totalorder %s14, 3
    %p45 = por %p43, %p44
    %p46 = scmp.ne.s32.totalorder %s38, %s41
    %p47 = scmp.eq.s32.totalorder %s14, 0
    %p48 = por %p46, %p47
    %p49 = scmp.ne.s32.totalorder %s38, %s41
    %p50 = scmp.eq.s32.totalorder %s19, 3
    %p51 = por %p49, %p50
    %p52 = scmp.ne.s32.totalorder %s41, %s42
    %p53 = scmp.eq.s32.totalorder %s19, 0
    %p54 = por %p52, %p53
    %p55 = scmp.ne.s32.totalorder %s41, %s42
    %p56 = scmp.eq.s32.totalorder %s20, 3
    %p57 = por %p55, %p56
    %p59 = scmp.ne.s32.totalorder %s42, %s58
    %p60 = scmp.eq.s32.totalorder %s20, 0
    %p61 = por %p59, %p60
    %s62 = sadd.s32 %s22, 1
    %s63 = smul.u32 %s62, 7
    %s64 = sadd.s32 %s29, 1
    %s65 = smul.u32 %s64, 7
    %s66 = ssub.s32 %s21, %s33
    %s67 = ssub.s32 %s63, %s65
    %s68 = sor.u32 %s66, %s67
    %p69 = scmp.eq.s32.totalorder %s68, 0
    %s71 = sadd.s32 %s70, 1
    %s72 = scalar_select %p69, %s70, %s71
    %p75 = pneg %p69
    %p76 = scmp.eq.s32.totalorder %s14, 3
    %p77 = por %p75, %p76
    %p78 = scmp.ne.s32.totalorder %s70, %s73
    %p79 = scmp.eq.s32.totalorder %s14, 0
    %p80 = por %p78, %p79
    %p81 = scmp.ne.s32.totalorder %s70, %s73
    %p82 = scmp.eq.s32.totalorder %s19, 3
    %p83 = por %p81, %p82
    %p84 = scmp.ne.s32.totalorder %s73, %s74
    %p85 = scmp.eq.s32.totalorder %s19, 0
    %p86 = por %p84, %p85
    %p87 = scmp.ne.s32.totalorder %s73, %s74
    %p88 = scmp.eq.s32.totalorder %s20, 3
    %p89 = por %p87, %p88
    %p91 = scmp.ne.s32.totalorder %s74, %s90
    %p92 = scmp.eq.s32.totalorder %s20, 0
    %p93 = por %p91, %p92
    %s94 = sadd.s32 %s22, 1
    %s95 = smul.u32 %s94, 7
    %s96 = sadd.s32 %s95, 1
    %s97 = sadd.s32 %s29, 1
    %s98 = smul.u32 %s97, 7
    %s99 = sadd.s32 %s98, 1
    %s100 = ssub.s32 %s21, %s33
    %s101 = ssub.s32 %s96, %s99
    %s102 = sor.u32 %s100, %s101
    %p103 = scmp.eq.s32.totalorder %s102, 0
    %s105 = sadd.s32 %s104, 1
    %s106 = scalar_select %p103, %s104, %s105
    %p109 = pneg %p103
    %p110 = scmp.eq.s32.totalorder %s14, 3
    %p111 = por %p109, %p110
    %p112 = scmp.ne.s32.totalorder %s104, %s107
    %p113 = scmp.eq.s32.totalorder %s14, 0
    %p114 = por %p112, %p113
    %p115 = scmp.ne.s32.totalorder %s104, %s107
    %p116 = scmp.eq.s32.totalorder %s19, 3
    %p117 = por %p115, %p116
    %p118 = scmp.ne.s32.totalorder %s107, %s108
    %p119 = scmp.eq.s32.totalorder %s19, 0
    %p120 = por %p118, %p119
    %p121 = scmp.ne.s32.totalorder %s107, %s108
    %p122 = scmp.eq.s32.totalorder %s20, 3
    %p123 = por %p121, %p122
    %p125 = scmp.ne.s32.totalorder %s108, %s124
    %p126 = scmp.eq.s32.totalorder %s20, 0
    %p127 = por %p125, %p126
    %s129 = sadd.s32 %s128, 1
    %p132 = scmp.eq.s32.totalorder %s14, 3
    %p133 = scmp.ne.s32.totalorder %s128, %s130
    %p134 = scmp.eq.s32.totalorder %s14, 0
    %p135 = por %p133, %p134
    %p136 = scmp.ne.s32.totalorder %s128, %s130
    %p137 = scmp.eq.s32.totalorder %s19, 3
    %p138 = por %p136, %p137
    %p139 = scmp.ne.s32.totalorder %s130, %s131
    %p140 = scmp.eq.s32.totalorder %s19, 0
    %p141 = por %p139, %p140
    %p142 = scmp.ne.s32.totalorder %s130, %s131
    %p143 = scmp.eq.s32.totalorder %s20, 3
    %p144 = por %p142, %p143
    %p146 = scmp.ne.s32.totalorder %s131, %s145
    %p147 = scmp.eq.s32.totalorder %s20, 0
    %p148 = por %p146, %p147
    %s150 = sadd.s32 %s149, 1
    %p153 = scmp.eq.s32.totalorder %s14, 3
    %p154 = scmp.ne.s32.totalorder %s149, %s151
    %p155 = scmp.eq.s32.totalorder %s14, 0
    %p156 = por %p154, %p155
    %p157 = scmp.ne.s32.totalorder %s149, %s151
    %p158 = scmp.eq.s32.totalorder %s19, 3
    %p159 = por %p157, %p158
    %p160 = scmp.ne.s32.totalorder %s151, %s152
    %p161 = scmp.eq.s32.totalorder %s19, 0
    %p162 = por %p160, %p161
    %p163 = scmp.ne.s32.totalorder %s151, %s152
    %p164 = scmp.eq.s32.totalorder %s20, 3
    %p165 = por %p163, %p164
    %p167 = scmp.ne.s32.totalorder %s152, %s166
    %p168 = scmp.eq.s32.totalorder %s20, 0
    %p169 = por %p167, %p168
    %s171 = sadd.s32 %s170, 1
    %p174 = scmp.eq.s32.totalorder %s14, 3
    %p175 = scmp.ne.s32.totalorder %s170, %s172
    %p176 = scmp.eq.s32.totalorder %s14, 0
    %p177 = por %p175, %p176
    %p178 = scmp.ne.s32.totalorder %s170, %s172
    %p179 = scmp.eq.s32.totalorder %s19, 3
    %p180 = por %p178, %p179
    %p181 = scmp.ne.s32.totalorder %s172, %s173
    %p182 = scmp.eq.s32.totalorder %s19, 0
    %p183 = por %p181, %p182
    %p184 = scmp.ne.s32.totalorder %s172, %s173
    %p185 = scmp.eq.s32.totalorder %s20, 3
    %p186 = por %p184, %p185
    %p188 = scmp.ne.s32.totalorder %s173, %s187
    %p189 = scmp.eq.s32.totalorder %s20, 0
    %p190 = por %p188, %p189
    %s191 = ssub.s32 %s21, %s33
    %s192 = ssub.s32 %s22, %s29
    %s193 = sor.u32 %s191, %s192
    %p194 = scmp.eq.s32.totalorder %s193, 0
    %s196 = sadd.s32 %s195, 1
    %s197 = scalar_select %p194, %s195, %s196
    %p200 = pneg %p194
    %p201 = scmp.eq.s32.totalorder %s14, 3
    %p202 = por %p200, %p201
    %p203 = scmp.ne.s32.totalorder %s195, %s198
    %p204 = scmp.eq.s32.totalorder %s14, 0
    %p205 = por %p203, %p204
    %p206 = scmp.ne.s32.totalorder %s195, %s198
    %p207 = scmp.eq.s32.totalorder %s19, 3
    %p208 = por %p206, %p207
    %p209 = scmp.ne.s32.totalorder %s198, %s199
    %p210 = scmp.eq.s32.totalorder %s19, 0
    %p211 = por %p209, %p210
    %p212 = scmp.ne.s32.totalorder %s198, %s199
    %p213 = scmp.eq.s32.totalorder %s20, 3
    %p214 = por %p212, %p213
    %p216 = scmp.ne.s32.totalorder %s199, %s215
    %p217 = scmp.eq.s32.totalorder %s20, 0
    %p218 = por %p216, %p217
    %s219 = smul.u32 %s21, 2
    %s220 = sadd.s32 %s219, %s22
    %s221 = smul.u32 %s33, 2
    %s222 = sadd.s32 %s221, %s29
    %s223 = ssub.s32 %s220, %s222
    %p224 = scmp.eq.s32.totalorder %s223, 0
    %s226 = sadd.s32 %s225, 1
    %s227 = scalar_select %p224, %s225, %s226
    %p230 = pneg %p224
    %p231 = scmp.eq.s32.totalorder %s14, 3
    %p232 = por %p230, %p231
    %p233 = scmp.ne.s32.totalorder %s225, %s228
    %p234 = scmp.eq.s32.totalorder %s14, 0
    %p235 = por %p233, %p234
    %p236 = scmp.ne.s32.totalorder %s225, %s228
    %p237 = scmp.eq.s32.totalorder %s19, 3
    %p238 = por %p236, %p237
    %p239 = scmp.ne.s32.totalorder %s228, %s229
    %p240 = scmp.eq.s32.totalorder %s19, 0
    %p241 = por %p239, %p240
    %p242 = scmp.ne.s32.totalorder %s228, %s229
    %p243 = scmp.eq.s32.totalorder %s20, 3
    %p244 = por %p242, %p243
    %p246 = scmp.ne.s32.totalorder %s229, %s245
    %p247 = scmp.eq.s32.totalorder %s20, 0
    %p248 = por %p246, %p247
    %p249 = scmp.le.s32.totalorder 1, %s14
    %p250 = scmp.lt.s32.totalorder %s14, 5
    %p251 = pnand %p249, %p250
    %p252 = pneg %p251
    // Predicated region
    $region9: #{bottleneck_block_forward.4} parent=5 // pred_check
      _
    $region10: #{bottleneck_block_forward.4} parent=5 // pred_check_branch
      %254 = sbr.rel (%p251) target = $region12
    $region11: #{bottleneck_block_forward.4} parent=5 // pred_region
      %s255 = ssub.s32 %s14, 1
      // Predicated region
      $region13: #{bottleneck_block_forward.4} parent=11 // pred_check
        %p256 = pneg %p141
      $region14: #{bottleneck_block_forward.4} parent=11 // pred_check_branch
        %258 = sbr.rel (%p256) target = $region16
      $region15: #{bottleneck_block_forward.4} parent=11 // pred_region
        _
      $region16: #{bottleneck_block_forward.4} parent=11 // pred_fallthru
        _
      // Predicated region
      $region17: #{bottleneck_block_forward.4} parent=11 // pred_check
        %p259 = pneg %p162
      $region18: #{bottleneck_block_forward.4} parent=11 // pred_check_branch
        %261 = sbr.rel (%p259) target = $region20
      $region19: #{bottleneck_block_forward.4} parent=11 // pred_region
        _
      $region20: #{bottleneck_block_forward.4} parent=11 // pred_fallthru
        _
      // Predicated region
      $region21: #{bottleneck_block_forward.4} parent=11 // pred_check
        %p262 = pneg %p183
      $region22: #{bottleneck_block_forward.4} parent=11 // pred_check_branch
        %264 = sbr.rel (%p262) target = $region24
      $region23: #{bottleneck_block_forward.4} parent=11 // pred_region
        _
      $region24: #{bottleneck_block_forward.4} parent=11 // pred_fallthru
        _
    $region12: #{bottleneck_block_forward.4} parent=5 // pred_fallthru
      _
    %p265 = scmp.lt.s32.totalorder %s14, 4
    // Predicated region
    $region25: #{bottleneck_block_forward.4} parent=5 // pred_check
      %p266 = pneg %p265
    $region26: #{bottleneck_block_forward.4} parent=5 // pred_check_branch
      %268 = sbr.rel (%p266) target = $region28
    $region27: #{bottleneck_block_forward.4} parent=5 // pred_region
      // Predicated region
      $region29: #{bottleneck_block_forward.4} parent=27 // pred_check
        %p269 = pneg %p48
      $region30: #{bottleneck_block_forward.4} parent=27 // pred_check_branch
        %271 = sbr.rel (%p269) target = $region32
      $region31: #{bottleneck_block_forward.4} parent=27 // pred_region
        %s272 = smul.u32 7, %s22
        %s273 = ssub.s32 16, %s272
        %p274 = scmp.lt.s32.totalorder %s273, 7
        %s275 = scalar_select %p274, %s273, 7
        %s276 = smul.u32 8, %s275
        %s277 = smul.u32 %s276, 2
        %p278 = scmp.lt.s32.totalorder %s21, 1
        %s279 = scalar_select %p278, %s21, 1
        %p280 = scmp.lt.s32.totalorder %s272, 15
        %s281 = scalar_select %p280, %s272, 15
        %s282 = smul.addr %s281, 2
        %s283 = smul.addr %s279, 32
        %s284 = sadd.s32 %s282, %s283
        %s285 = smul.addr %s284, 8
        %s286 = scalar_lea.vmem %s0, %s285
        %s287 = smul.u32 7, %s22
        %s288 = ssub.s32 16, %s287
        %p289 = scmp.lt.s32.totalorder %s288, 7
        %s290 = scalar_select %p289, %s288, 7
        %s291 = smul.u32 8, %s290
        %s292 = smul.u32 %s291, 2
      $region32: #{bottleneck_block_forward.4} parent=27 // pred_fallthru
        _
      // Predicated region
      $region33: #{bottleneck_block_forward.4} parent=27 // pred_check
        %p293 = pneg %p80
      $region34: #{bottleneck_block_forward.4} parent=27 // pred_check_branch
        %295 = sbr.rel (%p293) target = $region36
      $region35: #{bottleneck_block_forward.4} parent=27 // pred_region
        %s296 = sadd.s32 %s22, 1
        %s297 = smul.u32 %s296, 7
        %p298 = scmp.lt.s32.totalorder %s21, 1
        %s299 = scalar_select %p298, %s21, 1
        %p300 = scmp.lt.s32.totalorder %s297, 15
        %s301 = scalar_select %p300, %s297, 15
        %s302 = smul.addr %s301, 2
        %s303 = smul.addr %s299, 32
        %s304 = sadd.s32 %s302, %s303
        %s305 = smul.addr %s304, 8
        %s306 = scalar_lea.vmem %s1, %s305
        %s307 = sadd.s32 %s22, 1
        %s308 = smul.u32 %s307, 7
      $region36: #{bottleneck_block_forward.4} parent=27 // pred_fallthru
        _
      // Predicated region
      $region37: #{bottleneck_block_forward.4} parent=27 // pred_check
        %p309 = pneg %p114
      $region38: #{bottleneck_block_forward.4} parent=27 // pred_check_branch
        %311 = sbr.rel (%p309) target = $region40
      $region39: #{bottleneck_block_forward.4} parent=27 // pred_region
        %s312 = sadd.s32 %s22, 1
        %s313 = smul.u32 %s312, 7
        %s314 = sadd.s32 %s313, 1
        %p315 = scmp.lt.s32.totalorder %s21, 1
        %s316 = scalar_select %p315, %s21, 1
        %p317 = scmp.lt.s32.totalorder %s314, 15
        %s318 = scalar_select %p317, %s314, 15
        %s319 = smul.addr %s318, 2
        %s320 = smul.addr %s316, 32
        %s321 = sadd.s32 %s319, %s320
        %s322 = smul.addr %s321, 8
        %s323 = scalar_lea.vmem %s2, %s322
        %s324 = sadd.s32 %s22, 1
        %s325 = smul.u32 %s324, 7
        %s326 = sadd.s32 %s325, 1
      $region40: #{bottleneck_block_forward.4} parent=27 // pred_fallthru
        _
    $region28: #{bottleneck_block_forward.4} parent=5 // pred_fallthru
      _
    %p327 = scmp.le.s32.totalorder 1, %s14
    %p328 = scmp.lt.s32.totalorder %s14, 5
    %p329 = pnand %p327, %p328
    %p330 = pneg %p329
    // Predicated region
    $region41: #{bottleneck_block_forward.4} parent=5 // pred_check
      _
    $region42: #{bottleneck_block_forward.4} parent=5 // pred_check_branch
      %332 = sbr.rel (%p329) target = $region44
    $region43: #{bottleneck_block_forward.4} parent=5 // pred_region
      %s333 = ssub.s32 %s14, 1
      %s334 = smul.u32 7, %s24
      %s335 = ssub.s32 16, %s334
      %p336 = scmp.lt.s32.totalorder %s335, 7
      %s337 = scalar_select %p336, %s335, 7
      %s338 = smul.u32 8, %s337
      %s339 = smul.u32 %s338, 2
      %p340 = scmp.lt.s32.totalorder %s23, 1
      %s341 = scalar_select %p340, %s23, 1
      %p342 = scmp.lt.s32.totalorder %s334, 15
      %s343 = scalar_select %p342, %s334, 15
      %s344 = smul.addr %s343, 2
      %s345 = smul.addr %s341, 32
      %s346 = sadd.s32 %s344, %s345
      %s347 = smul.addr %s346, 8
      %s348 = scalar_lea.vmem %s0, %s347
      %p349 = pneg %p54
      %p350 = pneg %p51
      %s351 = sadd.s32 %s24, 1
      %s352 = smul.u32 %s351, 7
      %p353 = scmp.lt.s32.totalorder %s23, 1
      %s354 = scalar_select %p353, %s23, 1
      %p355 = scmp.lt.s32.totalorder %s352, 15
      %s356 = scalar_select %p355, %s352, 15
      %s357 = smul.addr %s356, 2
      %s358 = smul.addr %s354, 32
      %s359 = sadd.s32 %s357, %s358
      %s360 = smul.addr %s359, 8
      %s361 = scalar_lea.vmem %s1, %s360
      %p362 = pneg %p86
      %p363 = pneg %p83
      %s364 = sadd.s32 %s24, 1
      %s365 = smul.u32 %s364, 7
      %s366 = sadd.s32 %s365, 1
      %p367 = scmp.lt.s32.totalorder %s23, 1
      %s368 = scalar_select %p367, %s23, 1
      %p369 = scmp.lt.s32.totalorder %s366, 15
      %s370 = scalar_select %p369, %s366, 15
      %s371 = smul.addr %s370, 2
      %s372 = smul.addr %s368, 32
      %s373 = sadd.s32 %s371, %s372
      %s374 = smul.addr %s373, 8
      %s375 = scalar_lea.vmem %s2, %s374
      %p376 = pneg %p120
      %p377 = pneg %p117
      %p378 = pneg %p141
      %p379 = pneg %p138
      %p380 = pneg %p162
      %p381 = pneg %p159
      %p382 = pneg %p183
      %p383 = pneg %p180
      %p384 = pneg %p211
      %p385 = pneg %p208
      %s386 = smul.u32 7, %s24
      %p387 = scmp.lt.s32.totalorder %s23, 1
      %s388 = scalar_select %p387, %s23, 1
      %p389 = scmp.lt.s32.totalorder %s386, 13
      %s390 = scalar_select %p389, %s386, 13
      %s391 = smul.addr %s390, 2
      %s392 = smul.addr %s388, 28
      %s393 = sadd.s32 %s391, %s392
      %s394 = smul.addr %s393, 8
      %s395 = scalar_lea.vmem %s6, %s394
      %p396 = pneg %p241
      %p397 = pneg %p238
      %s398 = smul.u32 %s23, 2
      %s399 = sadd.s32 %s398, %s24
      %p400 = scmp.lt.s32.totalorder %s399, 3
      %s401 = scalar_select %p400, %s399, 3
      %s402 = smul.addr %s401, 2
      %s403 = scalar_lea.vmem %s7, %s402
      %s404 = smul.u32 7, %s24
      %s405 = ssub.s32 16, %s404
      %p406 = scmp.lt.s32.totalorder %s405, 7
      %s407 = scalar_select %p406, %s405, 7
      %s408 = smul.u32 8, %s407
      %s409 = smul.u32 %s408, 2
      %p410 = scmp.lt.s32.totalorder %s23, 1
      %s411 = scalar_select %p410, %s23, 1
      %p412 = scmp.lt.s32.totalorder %s404, 15
      %s413 = scalar_select %p412, %s404, 15
      %s414 = smul.addr %s413, 2
      %s415 = smul.addr %s411, 32
      %s416 = sadd.s32 %s414, %s415
      %s417 = smul.addr %s416, 8
      %s418 = scalar_lea.vmem %s0, %s417
      %s419 = smul.u32 7, %s24
      %s420 = ssub.s32 16, %s419
      %p421 = scmp.lt.s32.totalorder %s420, 7
      %s422 = scalar_select %p421, %s420, 7
      %s423 = smul.u32 8, %s422
      %s424 = smul.u32 %s423, 2
      %s425 = sadd.s32 %s24, 1
      %s426 = smul.u32 %s425, 7
      %p427 = scmp.lt.s32.totalorder %s23, 1
      %s428 = scalar_select %p427, %s23, 1
      %p429 = scmp.lt.s32.totalorder %s426, 15
      %s430 = scalar_select %p429, %s426, 15
      %s431 = smul.addr %s430, 2
      %s432 = smul.addr %s428, 32
      %s433 = sadd.s32 %s431, %s432
      %s434 = smul.addr %s433, 8
      %s435 = scalar_lea.vmem %s1, %s434
      %s436 = sadd.s32 %s24, 1
      %s437 = smul.u32 %s436, 7
      %s438 = sadd.s32 %s24, 1
      %s439 = smul.u32 %s438, 7
      %s440 = sadd.s32 %s439, 1
      %p441 = scmp.lt.s32.totalorder %s23, 1
      %s442 = scalar_select %p441, %s23, 1
      %p443 = scmp.lt.s32.totalorder %s440, 15
      %s444 = scalar_select %p443, %s440, 15
      %s445 = smul.addr %s444, 2
      %s446 = smul.addr %s442, 32
      %s447 = sadd.s32 %s445, %s446
      %s448 = smul.addr %s447, 8
      %s449 = scalar_lea.vmem %s2, %s448
      %s450 = sadd.s32 %s24, 1
      %s451 = smul.u32 %s450, 7
      %s452 = sadd.s32 %s451, 1
      %s453 = smul.u32 7, %s24
      %p454 = scmp.lt.s32.totalorder %s23, 1
      %s455 = scalar_select %p454, %s23, 1
      %p456 = scmp.lt.s32.totalorder %s453, 13
      %s457 = scalar_select %p456, %s453, 13
      %s458 = smul.addr %s457, 2
      %s459 = smul.addr %s455, 28
      %s460 = sadd.s32 %s458, %s459
      %s461 = smul.addr %s460, 8
      %s462 = scalar_lea.vmem %s6, %s461
      %s463 = smul.u32 7, %s24
      %s464 = smul.u32 %s23, 2
      %s465 = sadd.s32 %s464, %s24
      %p466 = scmp.lt.s32.totalorder %s465, 3
      %s467 = scalar_select %p466, %s465, 3
      %s468 = smul.addr %s467, 2
      %s469 = scalar_lea.vmem %s7, %s468
      %s470 = smul.u32 %s23, 2
      %s471 = sadd.s32 %s470, %s24
      %v472 = vld [vmem:[%s418] sm:$0xff]
      %v473 = vld [vmem:[%s418 + $0x8] sm:$0xff]
      %v474 = vld [vmem:[%s418 + $0x10] sm:$0xff]
      %v475 = vld [vmem:[%s418 + $0x18] sm:$0xff]
      %v476 = vld [vmem:[%s418 + $0x20] sm:$0xff]
      %v477 = vld [vmem:[%s418 + $0x28] sm:$0xff]
      %v478 = vld [vmem:[%s418 + $0x30] sm:$0xff]
      %v479 = vld [vmem:[%s418 + $0x38] sm:$0xff]
      %v480 = vld [vmem:[%s418 + $0x40] sm:$0xff]
      %v481 = vld [vmem:[%s418 + $0x48] sm:$0xff]
      %v482 = vld [vmem:[%s418 + $0x50] sm:$0xff]
      %v483 = vld [vmem:[%s418 + $0x58] sm:$0xff]
      %v484 = vld [vmem:[%s418 + $0x60] sm:$0xff]
      %v485 = vld [vmem:[%s418 + $0x68] sm:$0xff]
      %v486 = vld [vmem:[%s435] sm:$0xff]
      %v487 = vld [vmem:[%s435 + $0x8] sm:$0xff]
      %v488 = vld [vmem:[%s449] sm:$0xff]
      %v489 = vld [vmem:[%s449 + $0x8] sm:$0xff]
      %v490 = vld [vmem:[%s3] sm:$0x1]
      %v492 = vperm.slane %v490, 0
      %v494 = vmul.f32 %v472, %v492
      %v495 = vmul.f32 %v473, %v492
      %v496 = vmul.f32 %v474, %v492
      %v497 = vmul.f32 %v475, %v492
      %v498 = vmul.f32 %v476, %v492
      %v499 = vmul.f32 %v477, %v492
      %v500 = vmul.f32 %v478, %v492
      %v501 = vmul.f32 %v479, %v492
      %v502 = vmul.f32 %v480, %v492
      %v503 = vmul.f32 %v481, %v492
      %v504 = vmul.f32 %v482, %v492
      %v505 = vmul.f32 %v483, %v492
      %v506 = vmul.f32 %v484, %v492
      %v507 = vmul.f32 %v485, %v492
      %v508 = vmul.f32 %v486, %v492
      %v509 = vmul.f32 %v487, %v492
      %v510 = vmul.f32 %v488, %v492
      %v511 = vmul.f32 %v489, %v492
      %v512 = vld [vmem:[%s4] sm:$0x1]
      %v514 = vperm.slane %v512, 0
      %v516 = vadd.f32 %v494, %v514
      %v517 = vadd.f32 %v495, %v514
      %v518 = vadd.f32 %v496, %v514
      %v519 = vadd.f32 %v497, %v514
      %v520 = vadd.f32 %v498, %v514
      %v521 = vadd.f32 %v499, %v514
      %v522 = vadd.f32 %v500, %v514
      %v523 = vadd.f32 %v501, %v514
      %v524 = vadd.f32 %v502, %v514
      %v525 = vadd.f32 %v503, %v514
      %v526 = vadd.f32 %v504, %v514
      %v527 = vadd.f32 %v505, %v514
      %v528 = vadd.f32 %v506, %v514
      %v529 = vadd.f32 %v507, %v514
      %v530 = vadd.f32 %v508, %v514
      %v531 = vadd.f32 %v509, %v514
      %v532 = vadd.f32 %v510, %v514
      %v533 = vadd.f32 %v511, %v514
      %v534 = vmax.f32 %v516, 0.0
      %v535 = vmax.f32 %v517, 0.0
      %v536 = vmax.f32 %v518, 0.0
      %v537 = vmax.f32 %v519, 0.0
      %v538 = vmax.f32 %v520, 0.0
      %v539 = vmax.f32 %v521, 0.0
      %v540 = vmax.f32 %v522, 0.0
      %v541 = vmax.f32 %v523, 0.0
      %v542 = vmax.f32 %v524, 0.0
      %v543 = vmax.f32 %v525, 0.0
      %v544 = vmax.f32 %v526, 0.0
      %v545 = vmax.f32 %v527, 0.0
      %v546 = vmax.f32 %v528, 0.0
      %v547 = vmax.f32 %v529, 0.0
      %v548 = vmax.f32 %v530, 0.0
      %v549 = vmax.f32 %v531, 0.0
      %v550 = vmax.f32 %v532, 0.0
      %v551 = vmax.f32 %v533, 0.0
      %v552 = vld [vmem:[%s5] sm:$0xff]
      %v553 = vld [vmem:[%s5 + $0x8] sm:$0xff]
      %v554 = vld [vmem:[%s5 + $0x10] sm:$0xff]
      %v555 = vld [vmem:[%s5 + $0x18] sm:$0xff]
      %v556 = vld [vmem:[%s5 + $0x20] sm:$0xff]
      %v557 = vld [vmem:[%s5 + $0x28] sm:$0xff]
      %v558 = vld [vmem:[%s5 + $0x30] sm:$0xff]
      %v559 = vld [vmem:[%s5 + $0x38] sm:$0xff]
      %v560 = vld [vmem:[%s5 + $0x40] sm:$0xff]
      %v561 = vld [vmem:[%s5 + $0x48] sm:$0xff]
      %v562 = vld [vmem:[%s5 + $0x50] sm:$0xff]
      %v563 = vld [vmem:[%s5 + $0x58] sm:$0xff]
      %v564 = vld [vmem:[%s5 + $0x60] sm:$0xff]
      %v565 = vld [vmem:[%s5 + $0x68] sm:$0xff]
      %v566 = vld [vmem:[%s5 + $0x70] sm:$0xff]
      %v567 = vld [vmem:[%s5 + $0x78] sm:$0xff]
      %s568 = scalar_lea.vmem %s5, 128
      %v569 = vld [vmem:[%s568] sm:$0xff]
      %v570 = vld [vmem:[%s568 + $0x8] sm:$0xff]
      %v571 = vld [vmem:[%s568 + $0x10] sm:$0xff]
      %v572 = vld [vmem:[%s568 + $0x18] sm:$0xff]
      %v573 = vld [vmem:[%s568 + $0x20] sm:$0xff]
      %v574 = vld [vmem:[%s568 + $0x28] sm:$0xff]
      %v575 = vld [vmem:[%s568 + $0x30] sm:$0xff]
      %v576 = vld [vmem:[%s568 + $0x38] sm:$0xff]
      %v577 = vld [vmem:[%s568 + $0x40] sm:$0xff]
      %v578 = vld [vmem:[%s568 + $0x48] sm:$0xff]
      %v579 = vld [vmem:[%s568 + $0x50] sm:$0xff]
      %v580 = vld [vmem:[%s568 + $0x58] sm:$0xff]
      %v581 = vld [vmem:[%s568 + $0x60] sm:$0xff]
      %v582 = vld [vmem:[%s568 + $0x68] sm:$0xff]
      %v583 = vld [vmem:[%s568 + $0x70] sm:$0xff]
      %v584 = vld [vmem:[%s568 + $0x78] sm:$0xff]
      %v599 = vrot.slane %v534, 2
      %v600 = vrot.slane %v534, 4
      %v601 = vrot.slane %v534, 6
      %v602 = vrot.slane %v535, 2
      %v603 = vrot.slane %v535, 4
      %v604 = vrot.slane %v535, 6
      %v605 = vrot.slane %v536, 2
      %v606 = vrot.slane %v536, 4
      %v607 = vrot.slane %v536, 6
      %v608 = vrot.slane %v537, 2
      %v609 = vrot.slane %v537, 4
      %v610 = vrot.slane %v537, 6
      %v611 = vrot.slane %v538, 2
      %v612 = vrot.slane %v538, 4
      %v613 = vrot.slane %v538, 6
      %v614 = vrot.slane %v539, 2
      %v615 = vrot.slane %v539, 4
      %v616 = vrot.slane %v539, 6
      %v617 = vrot.slane %v540, 2
      %v618 = vrot.slane %v540, 4
      %v619 = vrot.slane %v540, 6
      %v620 = vrot.slane %v541, 2
      %v621 = vrot.slane %v541, 4
      %v622 = vrot.slane %v541, 6
      %v623 = vrot.slane %v542, 2
      %v624 = vrot.slane %v542, 4
      %v625 = vrot.slane %v542, 6
      %v626 = vrot.slane %v543, 2
      %v627 = vrot.slane %v543, 4
      %v628 = vrot.slane %v543, 6
      %v629 = vrot.slane %v544, 2
      %v630 = vrot.slane %v544, 4
      %v631 = vrot.slane %v544, 6
      %v632 = vrot.slane %v545, 2
      %v633 = vrot.slane %v545, 4
      %v634 = vrot.slane %v545, 6
      %v635 = vrot.slane %v546, 2
      %v636 = vrot.slane %v546, 4
      %v637 = vrot.slane %v546, 6
      %v638 = vrot.slane %v547, 2
      %v639 = vrot.slane %v547, 4
      %v640 = vrot.slane %v547, 6
      %vm641 = vcmask 1040384
      %vm642 = vcmask 1042434
      %vm643 = vmor %vm641, %vm642
      %vm644 = vcmask 1044484
      %vm645 = vmor %vm643, %vm644
      %vm646 = vcmask 1046534
      %vm647 = vmor %vm645, %vm646
      %v648 = vrot.slane %v534, 7
      %v649 = vrot.slane %v648, 2
      %v650 = vrot.slane %v599, 7
      %v651 = vsel %vm647, %v649, %v650
      %v652 = vrot.slane %v650, 2
      %v653 = vrot.slane %v600, 7
      %v654 = vsel %vm647, %v652, %v653
      %v655 = vrot.slane %v653, 2
      %v656 = vrot.slane %v601, 7
      %v657 = vsel %vm647, %v655, %v656
      %v658 = vrot.slane %v656, 2
      %v659 = vrot.slane %v535, 7
      %v660 = vsel %vm647, %v658, %v659
      %v661 = vrot.slane %v659, 2
      %v662 = vrot.slane %v602, 7
      %v663 = vsel %vm647, %v661, %v662
      %v664 = vrot.slane %v662, 2
      %v665 = vrot.slane %v603, 7
      %v666 = vsel %vm647, %v664, %v665
      %v667 = vrot.slane %v665, 2
      %v668 = vrot.slane %v604, 7
      %v669 = vsel %vm647, %v667, %v668
      %v670 = vrot.slane %v536, 7
      %v671 = vrot.slane %v670, 2
      %v672 = vrot.slane %v605, 7
      %v673 = vsel %vm647, %v671, %v672
      %v674 = vrot.slane %v672, 2
      %v675 = vrot.slane %v606, 7
      %v676 = vsel %vm647, %v674, %v675
      %v677 = vrot.slane %v675, 2
      %v678 = vrot.slane %v607, 7
      %v679 = vsel %vm647, %v677, %v678
      %v680 = vrot.slane %v678, 2
      %v681 = vrot.slane %v537, 7
      %v682 = vsel %vm647, %v680, %v681
      %v683 = vrot.slane %v681, 2
      %v684 = vrot.slane %v608, 7
      %v685 = vsel %vm647, %v683, %v684
      %v686 = vrot.slane %v684, 2
      %v687 = vrot.slane %v609, 7
      %v688 = vsel %vm647, %v686, %v687
      %v689 = vrot.slane %v687, 2
      %v690 = vrot.slane %v610, 7
      %v691 = vsel %vm647, %v689, %v690
      %v692 = vrot.slane %v538, 7
      %v693 = vrot.slane %v692, 2
      %v694 = vrot.slane %v611, 7
      %v695 = vsel %vm647, %v693, %v694
      %v696 = vrot.slane %v694, 2
      %v697 = vrot.slane %v612, 7
      %v698 = vsel %vm647, %v696, %v697
      %v699 = vrot.slane %v697, 2
      %v700 = vrot.slane %v613, 7
      %v701 = vsel %vm647, %v699, %v700
      %v702 = vrot.slane %v700, 2
      %v703 = vrot.slane %v539, 7
      %v704 = vsel %vm647, %v702, %v703
      %v705 = vrot.slane %v703, 2
      %v706 = vrot.slane %v614, 7
      %v707 = vsel %vm647, %v705, %v706
      %v708 = vrot.slane %v706, 2
      %v709 = vrot.slane %v615, 7
      %v710 = vsel %vm647, %v708, %v709
      %v711 = vrot.slane %v709, 2
      %v712 = vrot.slane %v616, 7
      %v713 = vsel %vm647, %v711, %v712
      %v714 = vrot.slane %v540, 7
      %v715 = vrot.slane %v714, 2
      %v716 = vrot.slane %v617, 7
      %v717 = vsel %vm647, %v715, %v716
      %v718 = vrot.slane %v716, 2
      %v719 = vrot.slane %v618, 7
      %v720 = vsel %vm647, %v718, %v719
      %v721 = vrot.slane %v719, 2
      %v722 = vrot.slane %v619, 7
      %v723 = vsel %vm647, %v721, %v722
      %v724 = vrot.slane %v722, 2
      %v725 = vrot.slane %v541, 7
      %v726 = vsel %vm647, %v724, %v725
      %v727 = vrot.slane %v725, 2
      %v728 = vrot.slane %v620, 7
      %v729 = vsel %vm647, %v727, %v728
      %v730 = vrot.slane %v728, 2
      %v731 = vrot.slane %v621, 7
      %v732 = vsel %vm647, %v730, %v731
      %v733 = vrot.slane %v731, 2
      %v734 = vrot.slane %v622, 7
      %v735 = vsel %vm647, %v733, %v734
      %v736 = vrot.slane %v542, 7
      %v737 = vrot.slane %v736, 2
      %v738 = vrot.slane %v623, 7
      %v739 = vsel %vm647, %v737, %v738
      %v740 = vrot.slane %v738, 2
      %v741 = vrot.slane %v624, 7
      %v742 = vsel %vm647, %v740, %v741
      %v743 = vrot.slane %v741, 2
      %v744 = vrot.slane %v625, 7
      %v745 = vsel %vm647, %v743, %v744
      %v746 = vrot.slane %v744, 2
      %v747 = vrot.slane %v543, 7
      %v748 = vsel %vm647, %v746, %v747
      %v749 = vrot.slane %v747, 2
      %v750 = vrot.slane %v626, 7
      %v751 = vsel %vm647, %v749, %v750
      %v752 = vrot.slane %v750, 2
      %v753 = vrot.slane %v627, 7
      %v754 = vsel %vm647, %v752, %v753
      %v755 = vrot.slane %v753, 2
      %v756 = vrot.slane %v628, 7
      %v757 = vsel %vm647, %v755, %v756
      %v758 = vrot.slane %v544, 7
      %v759 = vrot.slane %v758, 2
      %v760 = vrot.slane %v629, 7
      %v761 = vsel %vm647, %v759, %v760
      %v762 = vrot.slane %v760, 2
      %v763 = vrot.slane %v630, 7
      %v764 = vsel %vm647, %v762, %v763
      %v765 = vrot.slane %v763, 2
      %v766 = vrot.slane %v631, 7
      %v767 = vsel %vm647, %v765, %v766
      %v768 = vrot.slane %v766, 2
      %v769 = vrot.slane %v545, 7
      %v770 = vsel %vm647, %v768, %v769
      %v771 = vrot.slane %v769, 2
      %v772 = vrot.slane %v632, 7
      %v773 = vsel %vm647, %v771, %v772
      %v774 = vrot.slane %v772, 2
      %v775 = vrot.slane %v633, 7
      %v776 = vsel %vm647, %v774, %v775
      %v777 = vrot.slane %v775, 2
      %v778 = vrot.slane %v634, 7
      %v779 = vsel %vm647, %v777, %v778
      %v780 = vrot.slane %v546, 7
      %v781 = vrot.slane %v780, 2
      %v782 = vrot.slane %v635, 7
      %v783 = vsel %vm647, %v781, %v782
      %v784 = vrot.slane %v782, 2
      %v785 = vrot.slane %v636, 7
      %v786 = vsel %vm647, %v784, %v785
      %v787 = vrot.slane %v785, 2
      %v788 = vrot.slane %v637, 7
      %v789 = vsel %vm647, %v787, %v788
      %v790 = vrot.slane %v788, 2
      %v791 = vrot.slane %v547, 7
      %v792 = vsel %vm647, %v790, %v791
      %v793 = vrot.slane %v791, 2
      %v794 = vrot.slane %v638, 7
      %v795 = vsel %vm647, %v793, %v794
      %v796 = vrot.slane %v794, 2
      %v797 = vrot.slane %v639, 7
      %v798 = vsel %vm647, %v796, %v797
      %v799 = vrot.slane %v797, 2
      %v800 = vrot.slane %v640, 7
      %v801 = vsel %vm647, %v799, %v800
      %802 = vst [vmem:[#allocation1] ss:$4 sm:$0xff] %v651
      %s803 = scalar_lea.vmem [#allocation1], 1
      %804 = vst [vmem:[%s803] ss:$4 sm:$0xff] %v654
      %s805 = scalar_lea.vmem [#allocation1], 2
      %806 = vst [vmem:[%s805] ss:$4 sm:$0xff] %v657
      %s807 = scalar_lea.vmem [#allocation1], 3
      %808 = vst [vmem:[%s807] ss:$4 sm:$0xff] %v660
      %s809 = scalar_lea.vmem [#allocation1], 32
      %810 = vst [vmem:[%s809] ss:$4 sm:$0xff] %v663
      %s811 = scalar_lea.vmem [#allocation1], 33
      %812 = vst [vmem:[%s811] ss:$4 sm:$0xff] %v666
      %s813 = scalar_lea.vmem [#allocation1], 34
      %814 = vst [vmem:[%s813] ss:$4 sm:$0xff] %v669
      %s815 = scalar_lea.vmem [#allocation1], 35
      %816 = vst [vmem:[%s815] ss:$4 sm:$0xff] %v673
      %v817 = vld.sshfl [vmem:[#allocation1] sm:$0xff pattern:$0x73625140]
      %v818 = vld.sshfl [vmem:[#allocation1 + $0x20] sm:$0xff pattern:$0x73625140]
      %819 = vst [vmem:[#allocation1] ss:$4 sm:$0xff] %v676
      %820 = vst [vmem:[%s803] ss:$4 sm:$0xff] %v679
      %821 = vst [vmem:[%s805] ss:$4 sm:$0xff] %v682
      %822 = vst [vmem:[%s807] ss:$4 sm:$0xff] %v685
      %823 = vst [vmem:[%s809] ss:$4 sm:$0xff] %v688
      %824 = vst [vmem:[%s811] ss:$4 sm:$0xff] %v691
      %825 = vst [vmem:[%s813] ss:$4 sm:$0xff] %v695
      %826 = vst [vmem:[%s815] ss:$4 sm:$0xff] %v698
      %v827 = vld.sshfl [vmem:[#allocation1] sm:$0xff pattern:$0x73625140]
      %v828 = vld.sshfl [vmem:[#allocation1 + $0x20] sm:$0xff pattern:$0x73625140]
      %829 = vst [vmem:[#allocation1] ss:$4 sm:$0xff] %v701
      %830 = vst [vmem:[%s803] ss:$4 sm:$0xff] %v704
      %831 = vst [vmem:[%s805] ss:$4 sm:$0xff] %v707
      %832 = vst [vmem:[%s807] ss:$4 sm:$0xff] %v710
      %833 = vst [vmem:[%s809] ss:$4 sm:$0xff] %v713
      %834 = vst [vmem:[%s811] ss:$4 sm:$0xff] %v717
      %835 = vst [vmem:[%s813] ss:$4 sm:$0xff] %v720
      %836 = vst [vmem:[%s815] ss:$4 sm:$0xff] %v723
      %v837 = vld.sshfl [vmem:[#allocation1] sm:$0xff pattern:$0x73625140]
      %v838 = vld.sshfl [vmem:[#allocation1 + $0x20] sm:$0xff pattern:$0x73625140]
      %839 = vst [vmem:[#allocation1] ss:$4 sm:$0xff] %v726
      %840 = vst [vmem:[%s803] ss:$4 sm:$0xff] %v729
      %841 = vst [vmem:[%s805] ss:$4 sm:$0xff] %v732
      %842 = vst [vmem:[%s807] ss:$4 sm:$0xff] %v735
      %843 = vst [vmem:[%s809] ss:$4 sm:$0xff] %v739
      %844 = vst [vmem:[%s811] ss:$4 sm:$0xff] %v742
      %845 = vst [vmem:[%s813] ss:$4 sm:$0xff] %v745
      %846 = vst [vmem:[%s815] ss:$4 sm:$0xff] %v748
      %v847 = vld.sshfl [vmem:[#allocation1] sm:$0xff pattern:$0x73625140]
      %v848 = vld.sshfl [vmem:[#allocation1 + $0x20] sm:$0xff pattern:$0x73625140]
      %849 = vst [vmem:[#allocation1] ss:$4 sm:$0xff] %v751
      %850 = vst [vmem:[%s803] ss:$4 sm:$0xff] %v754
      %851 = vst [vmem:[%s805] ss:$4 sm:$0xff] %v757
      %852 = vst [vmem:[%s807] ss:$4 sm:$0xff] %v761
      %853 = vst [vmem:[%s809] ss:$4 sm:$0xff] %v764
      %854 = vst [vmem:[%s811] ss:$4 sm:$0xff] %v767
      %855 = vst [vmem:[%s813] ss:$4 sm:$0xff] %v770
      %856 = vst [vmem:[%s815] ss:$4 sm:$0xff] %v773
      %v857 = vld.sshfl [vmem:[#allocation1] sm:$0xff pattern:$0x73625140]
      %v858 = vld.sshfl [vmem:[#allocation1 + $0x20] sm:$0xff pattern:$0x73625140]
      %859 = vst [vmem:[#allocation1] ss:$4 sm:$0xff] %v776
      %860 = vst [vmem:[%s803] ss:$4 sm:$0xff] %v779
      %861 = vst [vmem:[%s805] ss:$4 sm:$0xff] %v783
      %862 = vst [vmem:[%s807] ss:$4 sm:$0xff] %v786
      %863 = vst [vmem:[%s809] ss:$4 sm:$0xff] %v789
      %864 = vst [vmem:[%s811] ss:$4 sm:$0xff] %v792
      %865 = vst [vmem:[%s813] ss:$4 sm:$0xff] %v795
      %866 = vst [vmem:[%s815] ss:$4 sm:$0xff] %v798
      %v867 = vld.sshfl [vmem:[#allocation1] sm:$0xff pattern:$0x73625140]
      %v868 = vld.sshfl [vmem:[#allocation1 + $0x20] sm:$0xff pattern:$0x73625140]
      %869 = vst [vmem:[#allocation1] ss:$4 sm:$0xff] %v801
      %v870 = vld.sshfl [vmem:[#allocation1] sm:$0xff pattern:$0x73625140]
      %884 = vmatpush.msra.mxu0 %v584
      %885 = vmatpush.msra.mxu0 %v583
      %886 = vmatpush.msra.mxu0 %v582
      %887 = vmatpush.msra.mxu0 %v581
      %888 = vmatpush.msra.mxu0 %v580
      %889 = vmatpush.msra.mxu0 %v579
      %890 = vmatpush.msra.mxu0 %v578
      %891 = vmatpush.msra.mxu0 %v577
      %892 = vmatpush.msra.mxu0 %v576
      %893 = vmatpush.msra.mxu0 %v575
      %894 = vmatpush.msra.mxu0 %v574
      %895 = vmatpush.msra.mxu0 %v573
      %896 = vmatpush.msra.mxu0 %v572
      %897 = vmatpush.msra.mxu0 %v571
      %898 = vmatpush.msra.mxu0 %v570
      %899 = vmatpush.msra.mxu0 %v569
      %900 = vmatmul.f32.gmra.mxu0 %v817
      %v901 = vpop.f32.mrf.mxu0
      %v902 = vadd.f32 0.0, %v901
      %903 = vmatmul.f32.gmra.mxu0 %v818
      %v904 = vpop.f32.mrf.mxu0
      %v905 = vadd.f32 0.0, %v904
      %906 = vmatmul.f32.gmra.mxu0 %v827
      %v907 = vpop.f32.mrf.mxu0
      %v908 = vadd.f32 0.0, %v907
      %909 = vmatmul.f32.gmra.mxu0 %v828
      %v910 = vpop.f32.mrf.mxu0
      %v911 = vadd.f32 0.0, %v910
      %912 = vmatmul.f32.gmra.mxu0 %v837
      %v913 = vpop.f32.mrf.mxu0
      %v914 = vadd.f32 0.0, %v913
      %915 = vmatmul.f32.gmra.mxu0 %v838
      %v916 = vpop.f32.mrf.mxu0
      %v917 = vadd.f32 0.0, %v916
      %918 = vmatmul.f32.gmra.mxu0 %v847
      %v919 = vpop.f32.mrf.mxu0
      %v920 = vadd.f32 0.0, %v919
      %921 = vmatmul.f32.gmra.mxu0 %v848
      %v922 = vpop.f32.mrf.mxu0
      %v923 = vadd.f32 0.0, %v922
      %924 = vmatmul.f32.gmra.mxu0 %v857
      %v925 = vpop.f32.mrf.mxu0
      %v926 = vadd.f32 0.0, %v925
      %927 = vmatmul.f32.gmra.mxu0 %v858
      %v928 = vpop.f32.mrf.mxu0
      %v929 = vadd.f32 0.0, %v928
      %930 = vmatmul.f32.gmra.mxu0 %v867
      %v931 = vpop.f32.mrf.mxu0
      %v932 = vadd.f32 0.0, %v931
      %933 = vmatmul.f32.gmra.mxu0 %v868
      %v934 = vpop.f32.mrf.mxu0
      %v935 = vadd.f32 0.0, %v934
      %936 = vmatmul.f32.gmra.mxu0 %v870
      %v937 = vpop.f32.mrf.mxu0
      %v938 = vadd.f32 0.0, %v937
      %939 = vdwg.mxu0
      %940 = vst [vmem:[#allocation1] ss:$4 sm:$0xff] %v534
      %s941 = scalar_lea.vmem [#allocation1], 1
      %942 = vst [vmem:[%s941] ss:$4 sm:$0xff] %v599
      %s943 = scalar_lea.vmem [#allocation1], 2
      %944 = vst [vmem:[%s943] ss:$4 sm:$0xff] %v600
      %s945 = scalar_lea.vmem [#allocation1], 3
      %946 = vst [vmem:[%s945] ss:$4 sm:$0xff] %v601
      %s947 = scalar_lea.vmem [#allocation1], 32
      %948 = vst [vmem:[%s947] ss:$4 sm:$0xff] %v535
      %s949 = scalar_lea.vmem [#allocation1], 33
      %950 = vst [vmem:[%s949] ss:$4 sm:$0xff] %v602
      %s951 = scalar_lea.vmem [#allocation1], 34
      %952 = vst [vmem:[%s951] ss:$4 sm:$0xff] %v603
      %s953 = scalar_lea.vmem [#allocation1], 35
      %954 = vst [vmem:[%s953] ss:$4 sm:$0xff] %v536
      %v955 = vld.sshfl [vmem:[#allocation1] sm:$0xff pattern:$0x73625140]
      %v956 = vld.sshfl [vmem:[#allocation1 + $0x20] sm:$0xff pattern:$0x73625140]
      %957 = vst [vmem:[#allocation1] ss:$4 sm:$0xff] %v605
      %958 = vst [vmem:[%s941] ss:$4 sm:$0xff] %v606
      %959 = vst [vmem:[%s943] ss:$4 sm:$0xff] %v607
      %960 = vst [vmem:[%s945] ss:$4 sm:$0xff] %v537
      %961 = vst [vmem:[%s947] ss:$4 sm:$0xff] %v608
      %962 = vst [vmem:[%s949] ss:$4 sm:$0xff] %v609
      %963 = vst [vmem:[%s951] ss:$4 sm:$0xff] %v538
      %964 = vst [vmem:[%s953] ss:$4 sm:$0xff] %v611
      %v965 = vld.sshfl [vmem:[#allocation1] sm:$0xff pattern:$0x73625140]
      %v966 = vld.sshfl [vmem:[#allocation1 + $0x20] sm:$0xff pattern:$0x73625140]
      %967 = vst [vmem:[#allocation1] ss:$4 sm:$0xff] %v612
      %968 = vst [vmem:[%s941] ss:$4 sm:$0xff] %v613
      %969 = vst [vmem:[%s943] ss:$4 sm:$0xff] %v539
      %970 = vst [vmem:[%s945] ss:$4 sm:$0xff] %v614
      %971 = vst [vmem:[%s947] ss:$4 sm:$0xff] %v615
      %972 = vst [vmem:[%s949] ss:$4 sm:$0xff] %v540
      %973 = vst [vmem:[%s951] ss:$4 sm:$0xff] %v617
      %974 = vst [vmem:[%s953] ss:$4 sm:$0xff] %v618
      %v975 = vld.sshfl [vmem:[#allocation1] sm:$0xff pattern:$0x73625140]
      %v976 = vld.sshfl [vmem:[#allocation1 + $0x20] sm:$0xff pattern:$0x73625140]
      %977 = vst [vmem:[#allocation1] ss:$4 sm:$0xff] %v619
      %978 = vst [vmem:[%s941] ss:$4 sm:$0xff] %v541
      %979 = vst [vmem:[%s943] ss:$4 sm:$0xff] %v620
      %980 = vst [vmem:[%s945] ss:$4 sm:$0xff] %v621
      %981 = vst [vmem:[%s947] ss:$4 sm:$0xff] %v542
      %982 = vst [vmem:[%s949] ss:$4 sm:$0xff] %v623
      %983 = vst [vmem:[%s951] ss:$4 sm:$0xff] %v624
      %984 = vst [vmem:[%s953] ss:$4 sm:$0xff] %v625
      %v985 = vld.sshfl [vmem:[#allocation1] sm:$0xff pattern:$0x73625140]
      %v986 = vld.sshfl [vmem:[#allocation1 + $0x20] sm:$0xff pattern:$0x73625140]
      %987 = vst [vmem:[#allocation1] ss:$4 sm:$0xff] %v543
      %988 = vst [vmem:[%s941] ss:$4 sm:$0xff] %v626
      %989 = vst [vmem:[%s943] ss:$4 sm:$0xff] %v627
      %990 = vst [vmem:[%s945] ss:$4 sm:$0xff] %v544
      %991 = vst [vmem:[%s947] ss:$4 sm:$0xff] %v629
      %992 = vst [vmem:[%s949] ss:$4 sm:$0xff] %v630
      %993 = vst [vmem:[%s951] ss:$4 sm:$0xff] %v631
      %994 = vst [vmem:[%s953] ss:$4 sm:$0xff] %v545
      %v995 = vld.sshfl [vmem:[#allocation1] sm:$0xff pattern:$0x73625140]
      %v996 = vld.sshfl [vmem:[#allocation1 + $0x20] sm:$0xff pattern:$0x73625140]
      %997 = vst [vmem:[#allocation1] ss:$4 sm:$0xff] %v632
      %998 = vst [vmem:[%s941] ss:$4 sm:$0xff] %v633
      %999 = vst [vmem:[%s943] ss:$4 sm:$0xff] %v546
      %1000 = vst [vmem:[%s945] ss:$4 sm:$0xff] %v635
      %1001 = vst [vmem:[%s947] ss:$4 sm:$0xff] %v636
      %1002 = vst [vmem:[%s949] ss:$4 sm:$0xff] %v637
      %1003 = vst [vmem:[%s951] ss:$4 sm:$0xff] %v547
      %1004 = vst [vmem:[%s953] ss:$4 sm:$0xff] %v638
      %v1005 = vld.sshfl [vmem:[#allocation1] sm:$0xff pattern:$0x73625140]
      %v1006 = vld.sshfl [vmem:[#allocation1 + $0x20] sm:$0xff pattern:$0x73625140]
      %1007 = vst [vmem:[#allocation1] ss:$4 sm:$0xff] %v639
      %v1008 = vld.sshfl [vmem:[#allocation1] sm:$0xff pattern:$0x73625140]
      %1022 = vmatpush.msra.mxu0 %v567
      %1023 = vmatpush.msra.mxu0 %v566
      %1024 = vmatpush.msra.mxu0 %v565
      %1025 = vmatpush.msra.mxu0 %v564
      %1026 = vmatpush.msra.mxu0 %v563
      %1027 = vmatpush.msra.mxu0 %v562
      %1028 = vmatpush.msra.mxu0 %v561
      %1029 = vmatpush.msra.mxu0 %v560
      %1030 = vmatpush.msra.mxu0 %v559
      %1031 = vmatpush.msra.mxu0 %v558
      %1032 = vmatpush.msra.mxu0 %v557
      %1033 = vmatpush.msra.mxu0 %v556
      %1034 = vmatpush.msra.mxu0 %v555
      %1035 = vmatpush.msra.mxu0 %v554
      %1036 = vmatpush.msra.mxu0 %v553
      %1037 = vmatpush.msra.mxu0 %v552
      %1038 = vmatmul.f32.gmra.mxu0 %v955
      %v1039 = vpop.f32.mrf.mxu0
      %v1040 = vadd.f32 %v902, %v1039
      %1041 = vmatmul.f32.gmra.mxu0 %v956
      %v1042 = vpop.f32.mrf.mxu0
      %v1043 = vadd.f32 %v905, %v1042
      %1044 = vmatmul.f32.gmra.mxu0 %v965
      %v1045 = vpop.f32.mrf.mxu0
      %v1046 = vadd.f32 %v908, %v1045
      %1047 = vmatmul.f32.gmra.mxu0 %v966
      %v1048 = vpop.f32.mrf.mxu0
      %v1049 = vadd.f32 %v911, %v1048
      %1050 = vmatmul.f32.gmra.mxu0 %v975
      %v1051 = vpop.f32.mrf.mxu0
      %v1052 = vadd.f32 %v914, %v1051
      %1053 = vmatmul.f32.gmra.mxu0 %v976
      %v1054 = vpop.f32.mrf.mxu0
      %v1055 = vadd.f32 %v917, %v1054
      %1056 = vmatmul.f32.gmra.mxu0 %v985
      %v1057 = vpop.f32.mrf.mxu0
      %v1058 = vadd.f32 %v920, %v1057
      %1059 = vmatmul.f32.gmra.mxu0 %v986
      %v1060 = vpop.f32.mrf.mxu0
      %v1061 = vadd.f32 %v923, %v1060
      %1062 = vmatmul.f32.gmra.mxu0 %v995
      %v1063 = vpop.f32.mrf.mxu0
      %v1064 = vadd.f32 %v926, %v1063
      %1065 = vmatmul.f32.gmra.mxu0 %v996
      %v1066 = vpop.f32.mrf.mxu0
      %v1067 = vadd.f32 %v929, %v1066
      %1068 = vmatmul.f32.gmra.mxu0 %v1005
      %v1069 = vpop.f32.mrf.mxu0
      %v1070 = vadd.f32 %v932, %v1069
      %1071 = vmatmul.f32.gmra.mxu0 %v1006
      %v1072 = vpop.f32.mrf.mxu0
      %v1073 = vadd.f32 %v935, %v1072
      %1074 = vmatmul.f32.gmra.mxu0 %v1008
      %v1075 = vpop.f32.mrf.mxu0
      %v1076 = vadd.f32 %v938, %v1075
      %1077 = vdwg.mxu0
      %v1090 = vrot.slane %v1040, 2
      %v1091 = vrot.slane %v1040, 4
      %v1092 = vrot.slane %v1040, 6
      %v1093 = vrot.slane %v1043, 2
      %v1094 = vrot.slane %v1043, 4
      %v1095 = vrot.slane %v1043, 6
      %v1096 = vrot.slane %v1046, 2
      %v1097 = vrot.slane %v1046, 4
      %v1098 = vrot.slane %v1046, 6
      %v1099 = vrot.slane %v1049, 2
      %v1100 = vrot.slane %v1049, 4
      %v1101 = vrot.slane %v1049, 6
      %v1102 = vrot.slane %v1052, 2
      %v1103 = vrot.slane %v1052, 4
      %v1104 = vrot.slane %v1052, 6
      %v1105 = vrot.slane %v1055, 2
      %v1106 = vrot.slane %v1055, 4
      %v1107 = vrot.slane %v1055, 6
      %v1108 = vrot.slane %v1058, 2
      %v1109 = vrot.slane %v1058, 4
      %v1110 = vrot.slane %v1058, 6
      %v1111 = vrot.slane %v1061, 2
      %v1112 = vrot.slane %v1061, 4
      %v1113 = vrot.slane %v1061, 6
      %v1114 = vrot.slane %v1064, 2
      %v1115 = vrot.slane %v1064, 4
      %v1116 = vrot.slane %v1064, 6
      %v1117 = vrot.slane %v1067, 2
      %v1118 = vrot.slane %v1067, 4
      %v1119 = vrot.slane %v1067, 6
      %v1120 = vrot.slane %v1070, 2
      %v1121 = vrot.slane %v1070, 4
      %v1122 = vrot.slane %v1070, 6
      %v1123 = vrot.slane %v1073, 2
      %v1124 = vrot.slane %v1073, 4
      %v1125 = vrot.slane %v1073, 6
      %s1162 = scalar_lea.vmem %s5, 256
      %v1163 = vld [vmem:[%s1162] sm:$0xff]
      %v1164 = vld [vmem:[%s1162 + $0x8] sm:$0xff]
      %v1165 = vld [vmem:[%s1162 + $0x10] sm:$0xff]
      %v1166 = vld [vmem:[%s1162 + $0x18] sm:$0xff]
      %v1167 = vld [vmem:[%s1162 + $0x20] sm:$0xff]
      %v1168 = vld [vmem:[%s1162 + $0x28] sm:$0xff]
      %v1169 = vld [vmem:[%s1162 + $0x30] sm:$0xff]
      %v1170 = vld [vmem:[%s1162 + $0x38] sm:$0xff]
      %v1171 = vld [vmem:[%s1162 + $0x40] sm:$0xff]
      %v1172 = vld [vmem:[%s1162 + $0x48] sm:$0xff]
      %v1173 = vld [vmem:[%s1162 + $0x50] sm:$0xff]
      %v1174 = vld [vmem:[%s1162 + $0x58] sm:$0xff]
      %v1175 = vld [vmem:[%s1162 + $0x60] sm:$0xff]
      %v1176 = vld [vmem:[%s1162 + $0x68] sm:$0xff]
      %v1177 = vld [vmem:[%s1162 + $0x70] sm:$0xff]
      %v1178 = vld [vmem:[%s1162 + $0x78] sm:$0xff]
      %1179 = vst.sshfl [vmem:[#allocation1] sm:$0xff pattern:$0x73625140] %v534
      %1180 = vst.sshfl [vmem:[#allocation1 + $0x20] sm:$0xff pattern:$0x73625140] %v535
      %s1181 = scalar_lea.vmem [#allocation1], 1
      %v1182 = vld [vmem:[%s1181] ss:$4 sm:$0xff]
      %s1183 = scalar_lea.vmem [#allocation1], 2
      %v1184 = vld [vmem:[%s1183] ss:$4 sm:$0xff]
      %s1185 = scalar_lea.vmem [#allocation1], 3
      %v1186 = vld [vmem:[%s1185] ss:$4 sm:$0xff]
      %s1187 = scalar_lea.vmem [#allocation1], 32
      %v1188 = vld [vmem:[%s1187] ss:$4 sm:$0xff]
      %s1189 = scalar_lea.vmem [#allocation1], 33
      %v1190 = vld [vmem:[%s1189] ss:$4 sm:$0xff]
      %s1191 = scalar_lea.vmem [#allocation1], 34
      %v1192 = vld [vmem:[%s1191] ss:$4 sm:$0xff]
      %s1193 = scalar_lea.vmem [#allocation1], 35
      %v1194 = vld [vmem:[%s1193] ss:$4 sm:$0xff]
      %1195 = vst.sshfl [vmem:[#allocation1] sm:$0xff pattern:$0x73625140] %v536
      %1196 = vst.sshfl [vmem:[#allocation1 + $0x20] sm:$0xff pattern:$0x73625140] %v537
      %v1197 = vld [vmem:[%s1181] ss:$4 sm:$0xff]
      %v1198 = vld [vmem:[%s1183] ss:$4 sm:$0xff]
      %v1199 = vld [vmem:[%s1185] ss:$4 sm:$0xff]
      %v1200 = vld [vmem:[%s1187] ss:$4 sm:$0xff]
      %v1201 = vld [vmem:[%s1189] ss:$4 sm:$0xff]
      %v1202 = vld [vmem:[%s1191] ss:$4 sm:$0xff]
      %v1203 = vld [vmem:[%s1193] ss:$4 sm:$0xff]
      %1204 = vst.sshfl [vmem:[#allocation1] sm:$0xff pattern:$0x73625140] %v538
      %1205 = vst.sshfl [vmem:[#allocation1 + $0x20] sm:$0xff pattern:$0x73625140] %v539
      %v1206 = vld [vmem:[%s1181] ss:$4 sm:$0xff]
      %v1207 = vld [vmem:[%s1183] ss:$4 sm:$0xff]
      %v1208 = vld [vmem:[%s1185] ss:$4 sm:$0xff]
      %v1209 = vld [vmem:[%s1187] ss:$4 sm:$0xff]
      %v1210 = vld [vmem:[%s1189] ss:$4 sm:$0xff]
      %v1211 = vld [vmem:[%s1191] ss:$4 sm:$0xff]
      %v1212 = vld [vmem:[%s1193] ss:$4 sm:$0xff]
      %1213 = vst.sshfl [vmem:[#allocation1] sm:$0xff pattern:$0x73625140] %v540
      %1214 = vst.sshfl [vmem:[#allocation1 + $0x20] sm:$0xff pattern:$0x73625140] %v541
      %v1215 = vld [vmem:[%s1181] ss:$4 sm:$0xff]
      %v1216 = vld [vmem:[%s1183] ss:$4 sm:$0xff]
      %v1217 = vld [vmem:[%s1185] ss:$4 sm:$0xff]
      %v1218 = vld [vmem:[%s1187] ss:$4 sm:$0xff]
      %v1219 = vld [vmem:[%s1189] ss:$4 sm:$0xff]
      %v1220 = vld [vmem:[%s1191] ss:$4 sm:$0xff]
      %v1221 = vld [vmem:[%s1193] ss:$4 sm:$0xff]
      %1222 = vst.sshfl [vmem:[#allocation1] sm:$0xff pattern:$0x73625140] %v542
      %1223 = vst.sshfl [vmem:[#allocation1 + $0x20] sm:$0xff pattern:$0x73625140] %v543
      %v1224 = vld [vmem:[%s1181] ss:$4 sm:$0xff]
      %v1225 = vld [vmem:[%s1183] ss:$4 sm:$0xff]
      %v1226 = vld [vmem:[%s1185] ss:$4 sm:$0xff]
      %v1227 = vld [vmem:[%s1187] ss:$4 sm:$0xff]
      %v1228 = vld [vmem:[%s1189] ss:$4 sm:$0xff]
      %v1229 = vld [vmem:[%s1191] ss:$4 sm:$0xff]
      %v1230 = vld [vmem:[%s1193] ss:$4 sm:$0xff]
      %1231 = vst.sshfl [vmem:[#allocation1] sm:$0xff pattern:$0x73625140] %v544
      %1232 = vst.sshfl [vmem:[#allocation1 + $0x20] sm:$0xff pattern:$0x73625140] %v545
      %v1233 = vld [vmem:[%s1181] ss:$4 sm:$0xff]
      %v1234 = vld [vmem:[%s1183] ss:$4 sm:$0xff]
      %v1235 = vld [vmem:[%s1185] ss:$4 sm:$0xff]
      %v1236 = vld [vmem:[%s1187] ss:$4 sm:$0xff]
      %v1237 = vld [vmem:[%s1189] ss:$4 sm:$0xff]
      %v1238 = vld [vmem:[%s1191] ss:$4 sm:$0xff]
      %v1239 = vld [vmem:[%s1193] ss:$4 sm:$0xff]
      %1240 = vst.sshfl [vmem:[#allocation1] sm:$0xff pattern:$0x73625140] %v546
      %1241 = vst.sshfl [vmem:[#allocation1 + $0x20] sm:$0xff pattern:$0x73625140] %v547
      %v1242 = vld [vmem:[%s1181] ss:$4 sm:$0xff]
      %v1243 = vld [vmem:[%s1183] ss:$4 sm:$0xff]
      %v1244 = vld [vmem:[%s1185] ss:$4 sm:$0xff]
      %v1245 = vld [vmem:[%s1187] ss:$4 sm:$0xff]
      %v1246 = vld [vmem:[%s1189] ss:$4 sm:$0xff]
      %v1247 = vld [vmem:[%s1191] ss:$4 sm:$0xff]
      %v1248 = vld [vmem:[%s1193] ss:$4 sm:$0xff]
      %1249 = vst [vmem:[#allocation1] ss:$4 sm:$0xff] %v1182
      %s1250 = scalar_lea.vmem [#allocation1], 1
      %1251 = vst [vmem:[%s1250] ss:$4 sm:$0xff] %v1184
      %s1252 = scalar_lea.vmem [#allocation1], 2
      %1253 = vst [vmem:[%s1252] ss:$4 sm:$0xff] %v1186
      %s1254 = scalar_lea.vmem [#allocation1], 3
      %1255 = vst [vmem:[%s1254] ss:$4 sm:$0xff] %v1188
      %s1256 = scalar_lea.vmem [#allocation1], 32
      %1257 = vst [vmem:[%s1256] ss:$4 sm:$0xff] %v1190
      %s1258 = scalar_lea.vmem [#allocation1], 33
      %1259 = vst [vmem:[%s1258] ss:$4 sm:$0xff] %v1192
      %s1260 = scalar_lea.vmem [#allocation1], 34
      %1261 = vst [vmem:[%s1260] ss:$4 sm:$0xff] %v1194
      %s1262 = scalar_lea.vmem [#allocation1], 35
      %1263 = vst [vmem:[%s1262] ss:$4 sm:$0xff] %v1197
      %v1264 = vld.sshfl [vmem:[#allocation1] sm:$0xff pattern:$0x73625140]
      %v1265 = vld.sshfl [vmem:[#allocation1 + $0x20] sm:$0xff pattern:$0x73625140]
      %1266 = vst [vmem:[#allocation1] ss:$4 sm:$0xff] %v1198
      %1267 = vst [vmem:[%s1250] ss:$4 sm:$0xff] %v1199
      %1268 = vst [vmem:[%s1252] ss:$4 sm:$0xff] %v1200
      %1269 = vst [vmem:[%s1254] ss:$4 sm:$0xff] %v1201
      %1270 = vst [vmem:[%s1256] ss:$4 sm:$0xff] %v1202
      %1271 = vst [vmem:[%s1258] ss:$4 sm:$0xff] %v1203
      %1272 = vst [vmem:[%s1260] ss:$4 sm:$0xff] %v1206
      %1273 = vst [vmem:[%s1262] ss:$4 sm:$0xff] %v1207
      %v1274 = vld.sshfl [vmem:[#allocation1] sm:$0xff pattern:$0x73625140]
      %v1275 = vld.sshfl [vmem:[#allocation1 + $0x20] sm:$0xff pattern:$0x73625140]
      %1276 = vst [vmem:[#allocation1] ss:$4 sm:$0xff] %v1208
      %1277 = vst [vmem:[%s1250] ss:$4 sm:$0xff] %v1209
      %1278 = vst [vmem:[%s1252] ss:$4 sm:$0xff] %v1210
      %1279 = vst [vmem:[%s1254] ss:$4 sm:$0xff] %v1211
      %1280 = vst [vmem:[%s1256] ss:$4 sm:$0xff] %v1212
      %1281 = vst [vmem:[%s1258] ss:$4 sm:$0xff] %v1215
      %1282 = vst [vmem:[%s1260] ss:$4 sm:$0xff] %v1216
      %1283 = vst [vmem:[%s1262] ss:$4 sm:$0xff] %v1217
      %v1284 = vld.sshfl [vmem:[#allocation1] sm:$0xff pattern:$0x73625140]
      %v1285 = vld.sshfl [vmem:[#allocation1 + $0x20] sm:$0xff pattern:$0x73625140]
      %1286 = vst [vmem:[#allocation1] ss:$4 sm:$0xff] %v1218
      %1287 = vst [vmem:[%s1250] ss:$4 sm:$0xff] %v1219
      %1288 = vst [vmem:[%s1252] ss:$4 sm:$0xff] %v1220
      %1289 = vst [vmem:[%s1254] ss:$4 sm:$0xff] %v1221
      %1290 = vst [vmem:[%s1256] ss:$4 sm:$0xff] %v1224
      %1291 = vst [vmem:[%s1258] ss:$4 sm:$0xff] %v1225
      %1292 = vst [vmem:[%s1260] ss:$4 sm:$0xff] %v1226
      %1293 = vst [vmem:[%s1262] ss:$4 sm:$0xff] %v1227
      %v1294 = vld.sshfl [vmem:[#allocation1] sm:$0xff pattern:$0x73625140]
      %v1295 = vld.sshfl [vmem:[#allocation1 + $0x20] sm:$0xff pattern:$0x73625140]
      %1296 = vst [vmem:[#allocation1] ss:$4 sm:$0xff] %v1228
      %1297 = vst [vmem:[%s1250] ss:$4 sm:$0xff] %v1229
      %1298 = vst [vmem:[%s1252] ss:$4 sm:$0xff] %v1230
      %1299 = vst [vmem:[%s1254] ss:$4 sm:$0xff] %v1233
      %1300 = vst [vmem:[%s1256] ss:$4 sm:$0xff] %v1234
      %1301 = vst [vmem:[%s1258] ss:$4 sm:$0xff] %v1235
      %1302 = vst [vmem:[%s1260] ss:$4 sm:$0xff] %v1236
      %1303 = vst [vmem:[%s1262] ss:$4 sm:$0xff] %v1237
      %v1304 = vld.sshfl [vmem:[#allocation1] sm:$0xff pattern:$0x73625140]
      %v1305 = vld.sshfl [vmem:[#allocation1 + $0x20] sm:$0xff pattern:$0x73625140]
      %1306 = vst [vmem:[#allocation1] ss:$4 sm:$0xff] %v1238
      %1307 = vst [vmem:[%s1250] ss:$4 sm:$0xff] %v1239
      %1308 = vst [vmem:[%s1252] ss:$4 sm:$0xff] %v1242
      %1309 = vst [vmem:[%s1254] ss:$4 sm:$0xff] %v1243
      %1310 = vst [vmem:[%s1256] ss:$4 sm:$0xff] %v1244
      %1311 = vst [vmem:[%s1258] ss:$4 sm:$0xff] %v1245
      %1312 = vst [vmem:[%s1260] ss:$4 sm:$0xff] %v1246
      %1313 = vst [vmem:[%s1262] ss:$4 sm:$0xff] %v1247
      %v1314 = vld.sshfl [vmem:[#allocation1] sm:$0xff pattern:$0x73625140]
      %v1315 = vld.sshfl [vmem:[#allocation1 + $0x20] sm:$0xff pattern:$0x73625140]
      %1316 = vst [vmem:[#allocation1] ss:$4 sm:$0xff] %v1248
      %v1317 = vld.sshfl [vmem:[#allocation1] sm:$0xff pattern:$0x73625140]
      %1331 = vmatpush.msra.mxu0 %v1178
      %1332 = vmatpush.msra.mxu0 %v1177
      %1333 = vmatpush.msra.mxu0 %v1176
      %1334 = vmatpush.msra.mxu0 %v1175
      %1335 = vmatpush.msra.mxu0 %v1174
      %1336 = vmatpush.msra.mxu0 %v1173
      %1337 = vmatpush.msra.mxu0 %v1172
      %1338 = vmatpush.msra.mxu0 %v1171
      %1339 = vmatpush.msra.mxu0 %v1170
      %1340 = vmatpush.msra.mxu0 %v1169
      %1341 = vmatpush.msra.mxu0 %v1168
      %1342 = vmatpush.msra.mxu0 %v1167
      %1343 = vmatpush.msra.mxu0 %v1166
      %1344 = vmatpush.msra.mxu0 %v1165
      %1345 = vmatpush.msra.mxu0 %v1164
      %1346 = vmatpush.msra.mxu0 %v1163
      %1347 = vmatmul.f32.gmra.mxu0 %v1264
      %v1348 = vpop.f32.mrf.mxu0
      %v1349 = vadd.f32 0.0, %v1348
      %1350 = vmatmul.f32.gmra.mxu0 %v1265
      %v1351 = vpop.f32.mrf.mxu0
      %v1352 = vadd.f32 0.0, %v1351
      %1353 = vmatmul.f32.gmra.mxu0 %v1274
      %v1354 = vpop.f32.mrf.mxu0
      %v1355 = vadd.f32 0.0, %v1354
      %1356 = vmatmul.f32.gmra.mxu0 %v1275
      %v1357 = vpop.f32.mrf.mxu0
      %v1358 = vadd.f32 0.0, %v1357
      %1359 = vmatmul.f32.gmra.mxu0 %v1284
      %v1360 = vpop.f32.mrf.mxu0
      %v1361 = vadd.f32 0.0, %v1360
      %1362 = vmatmul.f32.gmra.mxu0 %v1285
      %v1363 = vpop.f32.mrf.mxu0
      %v1364 = vadd.f32 0.0, %v1363
      %1365 = vmatmul.f32.gmra.mxu0 %v1294
      %v1366 = vpop.f32.mrf.mxu0
      %v1367 = vadd.f32 0.0, %v1366
      %1368 = vmatmul.f32.gmra.mxu0 %v1295
      %v1369 = vpop.f32.mrf.mxu0
      %v1370 = vadd.f32 0.0, %v1369
      %1371 = vmatmul.f32.gmra.mxu0 %v1304
      %v1372 = vpop.f32.mrf.mxu0
      %v1373 = vadd.f32 0.0, %v1372
      %1374 = vmatmul.f32.gmra.mxu0 %v1305
      %v1375 = vpop.f32.mrf.mxu0
      %v1376 = vadd.f32 0.0, %v1375
      %1377 = vmatmul.f32.gmra.mxu0 %v1314
      %v1378 = vpop.f32.mrf.mxu0
      %v1379 = vadd.f32 0.0, %v1378
      %1380 = vmatmul.f32.gmra.mxu0 %v1315
      %v1381 = vpop.f32.mrf.mxu0
      %v1382 = vadd.f32 0.0, %v1381
      %1383 = vmatmul.f32.gmra.mxu0 %v1317
      %v1384 = vpop.f32.mrf.mxu0
      %v1385 = vadd.f32 0.0, %v1384
      %1386 = vdwg.mxu0
      %v1399 = vrot.slane %v1349, 2
      %v1400 = vrot.slane %v1349, 4
      %v1401 = vrot.slane %v1349, 6
      %v1402 = vrot.slane %v1352, 2
      %v1403 = vrot.slane %v1352, 4
      %v1404 = vrot.slane %v1352, 6
      %v1405 = vrot.slane %v1355, 2
      %v1406 = vrot.slane %v1355, 4
      %v1407 = vrot.slane %v1355, 6
      %v1408 = vrot.slane %v1358, 2
      %v1409 = vrot.slane %v1358, 4
      %v1410 = vrot.slane %v1358, 6
      %v1411 = vrot.slane %v1361, 2
      %v1412 = vrot.slane %v1361, 4
      %v1413 = vrot.slane %v1361, 6
      %v1414 = vrot.slane %v1364, 2
      %v1415 = vrot.slane %v1364, 4
      %v1416 = vrot.slane %v1364, 6
      %v1417 = vrot.slane %v1367, 2
      %v1418 = vrot.slane %v1367, 4
      %v1419 = vrot.slane %v1367, 6
      %v1420 = vrot.slane %v1370, 2
      %v1421 = vrot.slane %v1370, 4
      %v1422 = vrot.slane %v1370, 6
      %v1423 = vrot.slane %v1373, 2
      %v1424 = vrot.slane %v1373, 4
      %v1425 = vrot.slane %v1373, 6
      %v1426 = vrot.slane %v1376, 2
      %v1427 = vrot.slane %v1376, 4
      %v1428 = vrot.slane %v1376, 6
      %v1429 = vrot.slane %v1379, 2
      %v1430 = vrot.slane %v1379, 4
      %v1431 = vrot.slane %v1379, 6
      %v1432 = vrot.slane %v1382, 2
      %v1433 = vrot.slane %v1382, 4
      %v1434 = vrot.slane %v1382, 6
      %v1471 = vadd.f32 %v1040, %v1349
      %v1472 = vadd.f32 %v1090, %v1399
      %v1473 = vadd.f32 %v1091, %v1400
      %v1474 = vadd.f32 %v1092, %v1401
      %v1475 = vadd.f32 %v1043, %v1352
      %v1476 = vadd.f32 %v1093, %v1402
      %v1477 = vadd.f32 %v1094, %v1403
      %v1478 = vadd.f32 %v1095, %v1404
      %v1479 = vadd.f32 %v1046, %v1355
      %v1480 = vadd.f32 %v1096, %v1405
      %v1481 = vadd.f32 %v1097, %v1406
      %v1482 = vadd.f32 %v1098, %v1407
      %v1483 = vadd.f32 %v1049, %v1358
      %v1484 = vadd.f32 %v1099, %v1408
      %v1485 = vadd.f32 %v1100, %v1409
      %v1486 = vadd.f32 %v1101, %v1410
      %v1487 = vadd.f32 %v1052, %v1361
      %v1488 = vadd.f32 %v1102, %v1411
      %v1489 = vadd.f32 %v1103, %v1412
      %v1490 = vadd.f32 %v1104, %v1413
      %v1491 = vadd.f32 %v1055, %v1364
      %v1492 = vadd.f32 %v1105, %v1414
      %v1493 = vadd.f32 %v1106, %v1415
      %v1494 = vadd.f32 %v1107, %v1416
      %v1495 = vadd.f32 %v1058, %v1367
      %v1496 = vadd.f32 %v1108, %v1417
      %v1497 = vadd.f32 %v1109, %v1418
      %v1498 = vadd.f32 %v1110, %v1419
      %v1499 = vadd.f32 %v1061, %v1370
      %v1500 = vadd.f32 %v1111, %v1420
      %v1501 = vadd.f32 %v1112, %v1421
      %v1502 = vadd.f32 %v1113, %v1422
      %v1503 = vadd.f32 %v1064, %v1373
      %v1504 = vadd.f32 %v1114, %v1423
      %v1505 = vadd.f32 %v1115, %v1424
      %v1506 = vadd.f32 %v1116, %v1425
      %v1507 = vadd.f32 %v1067, %v1376
      %v1508 = vadd.f32 %v1117, %v1426
      %v1509 = vadd.f32 %v1118, %v1427
      %v1510 = vadd.f32 %v1119, %v1428
      %v1511 = vadd.f32 %v1070, %v1379
      %v1512 = vadd.f32 %v1120, %v1429
      %v1513 = vadd.f32 %v1121, %v1430
      %v1514 = vadd.f32 %v1122, %v1431
      %v1515 = vadd.f32 %v1073, %v1382
      %v1516 = vadd.f32 %v1123, %v1432
      %v1517 = vadd.f32 %v1124, %v1433
      %v1518 = vadd.f32 %v1125, %v1434
      %v1519 = vadd.f32 %v1076, %v1385
      %s1520 = scalar_lea.vmem %s5, 384
      %v1521 = vld [vmem:[%s1520] sm:$0xff]
      %v1522 = vld [vmem:[%s1520 + $0x8] sm:$0xff]
      %v1523 = vld [vmem:[%s1520 + $0x10] sm:$0xff]
      %v1524 = vld [vmem:[%s1520 + $0x18] sm:$0xff]
      %v1525 = vld [vmem:[%s1520 + $0x20] sm:$0xff]
      %v1526 = vld [vmem:[%s1520 + $0x28] sm:$0xff]
      %v1527 = vld [vmem:[%s1520 + $0x30] sm:$0xff]
      %v1528 = vld [vmem:[%s1520 + $0x38] sm:$0xff]
      %v1529 = vld [vmem:[%s1520 + $0x40] sm:$0xff]
      %v1530 = vld [vmem:[%s1520 + $0x48] sm:$0xff]
      %v1531 = vld [vmem:[%s1520 + $0x50] sm:$0xff]
      %v1532 = vld [vmem:[%s1520 + $0x58] sm:$0xff]
      %v1533 = vld [vmem:[%s1520 + $0x60] sm:$0xff]
      %v1534 = vld [vmem:[%s1520 + $0x68] sm:$0xff]
      %v1535 = vld [vmem:[%s1520 + $0x70] sm:$0xff]
      %v1536 = vld [vmem:[%s1520 + $0x78] sm:$0xff]
      %v1539 = vrot.slane %v548, 2
      %v1540 = vrot.slane %v548, 4
      %v1541 = vrot.slane %v548, 6
      %v1542 = vrot.slane %v549, 2
      %v1543 = vrot.slane %v549, 4
      %1544 = vst [vmem:[#allocation1] ss:$4 sm:$0xff] %v536
      %s1545 = scalar_lea.vmem [#allocation1], 1
      %1546 = vst [vmem:[%s1545] ss:$4 sm:$0xff] %v605
      %s1547 = scalar_lea.vmem [#allocation1], 2
      %1548 = vst [vmem:[%s1547] ss:$4 sm:$0xff] %v606
      %s1549 = scalar_lea.vmem [#allocation1], 3
      %1550 = vst [vmem:[%s1549] ss:$4 sm:$0xff] %v607
      %s1551 = scalar_lea.vmem [#allocation1], 32
      %1552 = vst [vmem:[%s1551] ss:$4 sm:$0xff] %v537
      %s1553 = scalar_lea.vmem [#allocation1], 33
      %1554 = vst [vmem:[%s1553] ss:$4 sm:$0xff] %v608
      %s1555 = scalar_lea.vmem [#allocation1], 34
      %1556 = vst [vmem:[%s1555] ss:$4 sm:$0xff] %v609
      %s1557 = scalar_lea.vmem [#allocation1], 35
      %1558 = vst [vmem:[%s1557] ss:$4 sm:$0xff] %v538
      %v1559 = vld.sshfl [vmem:[#allocation1] sm:$0xff pattern:$0x73625140]
      %v1560 = vld.sshfl [vmem:[#allocation1 + $0x20] sm:$0xff pattern:$0x73625140]
      %1561 = vst [vmem:[#allocation1] ss:$4 sm:$0xff] %v611
      %1562 = vst [vmem:[%s1545] ss:$4 sm:$0xff] %v612
      %1563 = vst [vmem:[%s1547] ss:$4 sm:$0xff] %v613
      %1564 = vst [vmem:[%s1549] ss:$4 sm:$0xff] %v539
      %1565 = vst [vmem:[%s1551] ss:$4 sm:$0xff] %v614
      %1566 = vst [vmem:[%s1553] ss:$4 sm:$0xff] %v615
      %1567 = vst [vmem:[%s1555] ss:$4 sm:$0xff] %v540
      %1568 = vst [vmem:[%s1557] ss:$4 sm:$0xff] %v617
      %v1569 = vld.sshfl [vmem:[#allocation1] sm:$0xff pattern:$0x73625140]
      %v1570 = vld.sshfl [vmem:[#allocation1 + $0x20] sm:$0xff pattern:$0x73625140]
      %1571 = vst [vmem:[#allocation1] ss:$4 sm:$0xff] %v618
      %1572 = vst [vmem:[%s1545] ss:$4 sm:$0xff] %v619
      %1573 = vst [vmem:[%s1547] ss:$4 sm:$0xff] %v541
      %1574 = vst [vmem:[%s1549] ss:$4 sm:$0xff] %v620
      %1575 = vst [vmem:[%s1551] ss:$4 sm:$0xff] %v621
      %1576 = vst [vmem:[%s1553] ss:$4 sm:$0xff] %v542
      %1577 = vst [vmem:[%s1555] ss:$4 sm:$0xff] %v623
      %1578 = vst [vmem:[%s1557] ss:$4 sm:$0xff] %v624
      %v1579 = vld.sshfl [vmem:[#allocation1] sm:$0xff pattern:$0x73625140]
      %v1580 = vld.sshfl [vmem:[#allocation1 + $0x20] sm:$0xff pattern:$0x73625140]
      %1581 = vst [vmem:[#allocation1] ss:$4 sm:$0xff] %v625
      %1582 = vst [vmem:[%s1545] ss:$4 sm:$0xff] %v543
      %1583 = vst [vmem:[%s1547] ss:$4 sm:$0xff] %v626
      %1584 = vst [vmem:[%s1549] ss:$4 sm:$0xff] %v627
      %1585 = vst [vmem:[%s1551] ss:$4 sm:$0xff] %v544
      %1586 = vst [vmem:[%s1553] ss:$4 sm:$0xff] %v629
      %1587 = vst [vmem:[%s1555] ss:$4 sm:$0xff] %v630
      %1588 = vst [vmem:[%s1557] ss:$4 sm:$0xff] %v631
      %v1589 = vld.sshfl [vmem:[#allocation1] sm:$0xff pattern:$0x73625140]
      %v1590 = vld.sshfl [vmem:[#allocation1 + $0x20] sm:$0xff pattern:$0x73625140]
      %1591 = vst [vmem:[#allocation1] ss:$4 sm:$0xff] %v545
      %1592 = vst [vmem:[%s1545] ss:$4 sm:$0xff] %v632
      %1593 = vst [vmem:[%s1547] ss:$4 sm:$0xff] %v633
      %1594 = vst [vmem:[%s1549] ss:$4 sm:$0xff] %v546
      %1595 = vst [vmem:[%s1551] ss:$4 sm:$0xff] %v635
      %1596 = vst [vmem:[%s1553] ss:$4 sm:$0xff] %v636
      %1597 = vst [vmem:[%s1555] ss:$4 sm:$0xff] %v637
      %1598 = vst [vmem:[%s1557] ss:$4 sm:$0xff] %v547
      %v1599 = vld.sshfl [vmem:[#allocation1] sm:$0xff pattern:$0x73625140]
      %v1600 = vld.sshfl [vmem:[#allocation1 + $0x20] sm:$0xff pattern:$0x73625140]
      %1601 = vst [vmem:[#allocation1] ss:$4 sm:$0xff] %v638
      %1602 = vst [vmem:[%s1545] ss:$4 sm:$0xff] %v639
      %1603 = vst [vmem:[%s1547] ss:$4 sm:$0xff] %v548
      %1604 = vst [vmem:[%s1549] ss:$4 sm:$0xff] %v1539
      %1605 = vst [vmem:[%s1551] ss:$4 sm:$0xff] %v1540
      %1606 = vst [vmem:[%s1553] ss:$4 sm:$0xff] %v1541
      %1607 = vst [vmem:[%s1555] ss:$4 sm:$0xff] %v549
      %1608 = vst [vmem:[%s1557] ss:$4 sm:$0xff] %v1542
      %v1609 = vld.sshfl [vmem:[#allocation1] sm:$0xff pattern:$0x73625140]
      %v1610 = vld.sshfl [vmem:[#allocation1 + $0x20] sm:$0xff pattern:$0x73625140]
      %1611 = vst [vmem:[#allocation1] ss:$4 sm:$0xff] %v1543
      %v1612 = vld.sshfl [vmem:[#allocation1] sm:$0xff pattern:$0x73625140]
      %1626 = vmatpush.msra.mxu0 %v1536
      %1627 = vmatpush.msra.mxu0 %v1535
      %1628 = vmatpush.msra.mxu0 %v1534
      %1629 = vmatpush.msra.mxu0 %v1533
      %1630 = vmatpush.msra.mxu0 %v1532
      %1631 = vmatpush.msra.mxu0 %v1531
      %1632 = vmatpush.msra.mxu0 %v1530
      %1633 = vmatpush.msra.mxu0 %v1529
      %1634 = vmatpush.msra.mxu0 %v1528
      %1635 = vmatpush.msra.mxu0 %v1527
      %1636 = vmatpush.msra.mxu0 %v1526
      %1637 = vmatpush.msra.mxu0 %v1525
      %1638 = vmatpush.msra.mxu0 %v1524
      %1639 = vmatpush.msra.mxu0 %v1523
      %1640 = vmatpush.msra.mxu0 %v1522
      %1641 = vmatpush.msra.mxu0 %v1521
      %1642 = vmatmul.f32.gmra.mxu0 %v1559
      %v1643 = vpop.f32.mrf.mxu0
      %v1644 = vadd.f32 0.0, %v1643
      %1645 = vmatmul.f32.gmra.mxu0 %v1560
      %v1646 = vpop.f32.mrf.mxu0
      %v1647 = vadd.f32 0.0, %v1646
      %1648 = vmatmul.f32.gmra.mxu0 %v1569
      %v1649 = vpop.f32.mrf.mxu0
      %v1650 = vadd.f32 0.0, %v1649
      %1651 = vmatmul.f32.gmra.mxu0 %v1570
      %v1652 = vpop.f32.mrf.mxu0
      %v1653 = vadd.f32 0.0, %v1652
      %1654 = vmatmul.f32.gmra.mxu0 %v1579
      %v1655 = vpop.f32.mrf.mxu0
      %v1656 = vadd.f32 0.0, %v1655
      %1657 = vmatmul.f32.gmra.mxu0 %v1580
      %v1658 = vpop.f32.mrf.mxu0
      %v1659 = vadd.f32 0.0, %v1658
      %1660 = vmatmul.f32.gmra.mxu0 %v1589
      %v1661 = vpop.f32.mrf.mxu0
      %v1662 = vadd.f32 0.0, %v1661
      %1663 = vmatmul.f32.gmra.mxu0 %v1590
      %v1664 = vpop.f32.mrf.mxu0
      %v1665 = vadd.f32 0.0, %v1664
      %1666 = vmatmul.f32.gmra.mxu0 %v1599
      %v1667 = vpop.f32.mrf.mxu0
      %v1668 = vadd.f32 0.0, %v1667
      %1669 = vmatmul.f32.gmra.mxu0 %v1600
      %v1670 = vpop.f32.mrf.mxu0
      %v1671 = vadd.f32 0.0, %v1670
      %1672 = vmatmul.f32.gmra.mxu0 %v1609
      %v1673 = vpop.f32.mrf.mxu0
      %v1674 = vadd.f32 0.0, %v1673
      %1675 = vmatmul.f32.gmra.mxu0 %v1610
      %v1676 = vpop.f32.mrf.mxu0
      %v1677 = vadd.f32 0.0, %v1676
      %1678 = vmatmul.f32.gmra.mxu0 %v1612
      %v1679 = vpop.f32.mrf.mxu0
      %v1680 = vadd.f32 0.0, %v1679
      %1681 = vdwg.mxu0
      %v1694 = vrot.slane %v1644, 2
      %v1695 = vrot.slane %v1644, 4
      %v1696 = vrot.slane %v1644, 6
      %v1697 = vrot.slane %v1647, 2
      %v1698 = vrot.slane %v1647, 4
      %v1699 = vrot.slane %v1647, 6
      %v1700 = vrot.slane %v1650, 2
      %v1701 = vrot.slane %v1650, 4
      %v1702 = vrot.slane %v1650, 6
      %v1703 = vrot.slane %v1653, 2
      %v1704 = vrot.slane %v1653, 4
      %v1705 = vrot.slane %v1653, 6
      %v1706 = vrot.slane %v1656, 2
      %v1707 = vrot.slane %v1656, 4
      %v1708 = vrot.slane %v1656, 6
      %v1709 = vrot.slane %v1659, 2
      %v1710 = vrot.slane %v1659, 4
      %v1711 = vrot.slane %v1659, 6
      %v1712 = vrot.slane %v1662, 2
      %v1713 = vrot.slane %v1662, 4
      %v1714 = vrot.slane %v1662, 6
      %v1715 = vrot.slane %v1665, 2
      %v1716 = vrot.slane %v1665, 4
      %v1717 = vrot.slane %v1665, 6
      %v1718 = vrot.slane %v1668, 2
      %v1719 = vrot.slane %v1668, 4
      %v1720 = vrot.slane %v1668, 6
      %v1721 = vrot.slane %v1671, 2
      %v1722 = vrot.slane %v1671, 4
      %v1723 = vrot.slane %v1671, 6
      %v1724 = vrot.slane %v1674, 2
      %v1725 = vrot.slane %v1674, 4
      %v1726 = vrot.slane %v1674, 6
      %v1727 = vrot.slane %v1677, 2
      %v1728 = vrot.slane %v1677, 4
      %v1729 = vrot.slane %v1677, 6
      %v1766 = vadd.f32 %v1471, %v1644
      %v1767 = vadd.f32 %v1472, %v1694
      %v1768 = vadd.f32 %v1473, %v1695
      %v1769 = vadd.f32 %v1474, %v1696
      %v1770 = vadd.f32 %v1475, %v1647
      %v1771 = vadd.f32 %v1476, %v1697
      %v1772 = vadd.f32 %v1477, %v1698
      %v1773 = vadd.f32 %v1478, %v1699
      %v1774 = vadd.f32 %v1479, %v1650
      %v1775 = vadd.f32 %v1480, %v1700
      %v1776 = vadd.f32 %v1481, %v1701
      %v1777 = vadd.f32 %v1482, %v1702
      %v1778 = vadd.f32 %v1483, %v1653
      %v1779 = vadd.f32 %v1484, %v1703
      %v1780 = vadd.f32 %v1485, %v1704
      %v1781 = vadd.f32 %v1486, %v1705
      %v1782 = vadd.f32 %v1487, %v1656
      %v1783 = vadd.f32 %v1488, %v1706
      %v1784 = vadd.f32 %v1489, %v1707
      %v1785 = vadd.f32 %v1490, %v1708
      %v1786 = vadd.f32 %v1491, %v1659
      %v1787 = vadd.f32 %v1492, %v1709
      %v1788 = vadd.f32 %v1493, %v1710
      %v1789 = vadd.f32 %v1494, %v1711
      %v1790 = vadd.f32 %v1495, %v1662
      %v1791 = vadd.f32 %v1496, %v1712
      %v1792 = vadd.f32 %v1497, %v1713
      %v1793 = vadd.f32 %v1498, %v1714
      %v1794 = vadd.f32 %v1499, %v1665
      %v1795 = vadd.f32 %v1500, %v1715
      %v1796 = vadd.f32 %v1501, %v1716
      %v1797 = vadd.f32 %v1502, %v1717
      %v1798 = vadd.f32 %v1503, %v1668
      %v1799 = vadd.f32 %v1504, %v1718
      %v1800 = vadd.f32 %v1505, %v1719
      %v1801 = vadd.f32 %v1506, %v1720
      %v1802 = vadd.f32 %v1507, %v1671
      %v1803 = vadd.f32 %v1508, %v1721
      %v1804 = vadd.f32 %v1509, %v1722
      %v1805 = vadd.f32 %v1510, %v1723
      %v1806 = vadd.f32 %v1511, %v1674
      %v1807 = vadd.f32 %v1512, %v1724
      %v1808 = vadd.f32 %v1513, %v1725
      %v1809 = vadd.f32 %v1514, %v1726
      %v1810 = vadd.f32 %v1515, %v1677
      %v1811 = vadd.f32 %v1516, %v1727
      %v1812 = vadd.f32 %v1517, %v1728
      %v1813 = vadd.f32 %v1518, %v1729
      %v1814 = vadd.f32 %v1519, %v1680
      %s1815 = scalar_lea.vmem %s5, 512
      %v1816 = vld [vmem:[%s1815] sm:$0xff]
      %v1817 = vld [vmem:[%s1815 + $0x8] sm:$0xff]
      %v1818 = vld [vmem:[%s1815 + $0x10] sm:$0xff]
      %v1819 = vld [vmem:[%s1815 + $0x18] sm:$0xff]
      %v1820 = vld [vmem:[%s1815 + $0x20] sm:$0xff]
      %v1821 = vld [vmem:[%s1815 + $0x28] sm:$0xff]
      %v1822 = vld [vmem:[%s1815 + $0x30] sm:$0xff]
      %v1823 = vld [vmem:[%s1815 + $0x38] sm:$0xff]
      %v1824 = vld [vmem:[%s1815 + $0x40] sm:$0xff]
      %v1825 = vld [vmem:[%s1815 + $0x48] sm:$0xff]
      %v1826 = vld [vmem:[%s1815 + $0x50] sm:$0xff]
      %v1827 = vld [vmem:[%s1815 + $0x58] sm:$0xff]
      %v1828 = vld [vmem:[%s1815 + $0x60] sm:$0xff]
      %v1829 = vld [vmem:[%s1815 + $0x68] sm:$0xff]
      %v1830 = vld [vmem:[%s1815 + $0x70] sm:$0xff]
      %v1831 = vld [vmem:[%s1815 + $0x78] sm:$0xff]
      %v1832 = vrot.slane %v549, 6
      %v1833 = vrot.slane %v548, 7
      %v1834 = vrot.slane %v1833, 2
      %v1835 = vrot.slane %v1539, 7
      %v1836 = vsel %vm647, %v1834, %v1835
      %v1837 = vrot.slane %v1835, 2
      %v1838 = vrot.slane %v1540, 7
      %v1839 = vsel %vm647, %v1837, %v1838
      %v1840 = vrot.slane %v1838, 2
      %v1841 = vrot.slane %v1541, 7
      %v1842 = vsel %vm647, %v1840, %v1841
      %v1843 = vrot.slane %v1841, 2
      %v1844 = vrot.slane %v549, 7
      %v1845 = vsel %vm647, %v1843, %v1844
      %v1846 = vrot.slane %v1844, 2
      %v1847 = vrot.slane %v1542, 7
      %v1848 = vsel %vm647, %v1846, %v1847
      %v1849 = vrot.slane %v1847, 2
      %v1850 = vrot.slane %v1543, 7
      %v1851 = vsel %vm647, %v1849, %v1850
      %v1852 = vrot.slane %v1850, 2
      %v1853 = vrot.slane %v1832, 7
      %v1854 = vsel %vm647, %v1852, %v1853
      %1855 = vst [vmem:[#allocation1] ss:$4 sm:$0xff] %v673
      %s1856 = scalar_lea.vmem [#allocation1], 1
      %1857 = vst [vmem:[%s1856] ss:$4 sm:$0xff] %v676
      %s1858 = scalar_lea.vmem [#allocation1], 2
      %1859 = vst [vmem:[%s1858] ss:$4 sm:$0xff] %v679
      %s1860 = scalar_lea.vmem [#allocation1], 3
      %1861 = vst [vmem:[%s1860] ss:$4 sm:$0xff] %v682
      %s1862 = scalar_lea.vmem [#allocation1], 32
      %1863 = vst [vmem:[%s1862] ss:$4 sm:$0xff] %v685
      %s1864 = scalar_lea.vmem [#allocation1], 33
      %1865 = vst [vmem:[%s1864] ss:$4 sm:$0xff] %v688
      %s1866 = scalar_lea.vmem [#allocation1], 34
      %1867 = vst [vmem:[%s1866] ss:$4 sm:$0xff] %v691
      %s1868 = scalar_lea.vmem [#allocation1], 35
      %1869 = vst [vmem:[%s1868] ss:$4 sm:$0xff] %v695
      %v1870 = vld.sshfl [vmem:[#allocation1] sm:$0xff pattern:$0x73625140]
      %v1871 = vld.sshfl [vmem:[#allocation1 + $0x20] sm:$0xff pattern:$0x73625140]
      %1872 = vst [vmem:[#allocation1] ss:$4 sm:$0xff] %v698
      %1873 = vst [vmem:[%s1856] ss:$4 sm:$0xff] %v701
      %1874 = vst [vmem:[%s1858] ss:$4 sm:$0xff] %v704
      %1875 = vst [vmem:[%s1860] ss:$4 sm:$0xff] %v707
      %1876 = vst [vmem:[%s1862] ss:$4 sm:$0xff] %v710
      %1877 = vst [vmem:[%s1864] ss:$4 sm:$0xff] %v713
      %1878 = vst [vmem:[%s1866] ss:$4 sm:$0xff] %v717
      %1879 = vst [vmem:[%s1868] ss:$4 sm:$0xff] %v720
      %v1880 = vld.sshfl [vmem:[#allocation1] sm:$0xff pattern:$0x73625140]
      %v1881 = vld.sshfl [vmem:[#allocation1 + $0x20] sm:$0xff pattern:$0x73625140]
      %1882 = vst [vmem:[#allocation1] ss:$4 sm:$0xff] %v723
      %1883 = vst [vmem:[%s1856] ss:$4 sm:$0xff] %v726
      %1884 = vst [vmem:[%s1858] ss:$4 sm:$0xff] %v729
      %1885 = vst [vmem:[%s1860] ss:$4 sm:$0xff] %v732
      %1886 = vst [vmem:[%s1862] ss:$4 sm:$0xff] %v735
      %1887 = vst [vmem:[%s1864] ss:$4 sm:$0xff] %v739
      %1888 = vst [vmem:[%s1866] ss:$4 sm:$0xff] %v742
      %1889 = vst [vmem:[%s1868] ss:$4 sm:$0xff] %v745
      %v1890 = vld.sshfl [vmem:[#allocation1] sm:$0xff pattern:$0x73625140]
      %v1891 = vld.sshfl [vmem:[#allocation1 + $0x20] sm:$0xff pattern:$0x73625140]
      %1892 = vst [vmem:[#allocation1] ss:$4 sm:$0xff] %v748
      %1893 = vst [vmem:[%s1856] ss:$4 sm:$0xff] %v751
      %1894 = vst [vmem:[%s1858] ss:$4 sm:$0xff] %v754
      %1895 = vst [vmem:[%s1860] ss:$4 sm:$0xff] %v757
      %1896 = vst [vmem:[%s1862] ss:$4 sm:$0xff] %v761
      %1897 = vst [vmem:[%s1864] ss:$4 sm:$0xff] %v764
      %1898 = vst [vmem:[%s1866] ss:$4 sm:$0xff] %v767
      %1899 = vst [vmem:[%s1868] ss:$4 sm:$0xff] %v770
      %v1900 = vld.sshfl [vmem:[#allocation1] sm:$0xff pattern:$0x73625140]
      %v1901 = vld.sshfl [vmem:[#allocation1 + $0x20] sm:$0xff pattern:$0x73625140]
      %1902 = vst [vmem:[#allocation1] ss:$4 sm:$0xff] %v773
      %1903 = vst [vmem:[%s1856] ss:$4 sm:$0xff] %v776
      %1904 = vst [vmem:[%s1858] ss:$4 sm:$0xff] %v779
      %1905 = vst [vmem:[%s1860] ss:$4 sm:$0xff] %v783
      %1906 = vst [vmem:[%s1862] ss:$4 sm:$0xff] %v786
      %1907 = vst [vmem:[%s1864] ss:$4 sm:$0xff] %v789
      %1908 = vst [vmem:[%s1866] ss:$4 sm:$0xff] %v792
      %1909 = vst [vmem:[%s1868] ss:$4 sm:$0xff] %v795
      %v1910 = vld.sshfl [vmem:[#allocation1] sm:$0xff pattern:$0x73625140]
      %v1911 = vld.sshfl [vmem:[#allocation1 + $0x20] sm:$0xff pattern:$0x73625140]
      %1912 = vst [vmem:[#allocation1] ss:$4 sm:$0xff] %v798
      %1913 = vst [vmem:[%s1856] ss:$4 sm:$0xff] %v801
      %1914 = vst [vmem:[%s1858] ss:$4 sm:$0xff] %v1836
      %1915 = vst [vmem:[%s1860] ss:$4 sm:$0xff] %v1839
      %1916 = vst [vmem:[%s1862] ss:$4 sm:$0xff] %v1842
      %1917 = vst [vmem:[%s1864] ss:$4 sm:$0xff] %v1845
      %1918 = vst [vmem:[%s1866] ss:$4 sm:$0xff] %v1848
      %1919 = vst [vmem:[%s1868] ss:$4 sm:$0xff] %v1851
      %v1920 = vld.sshfl [vmem:[#allocation1] sm:$0xff pattern:$0x73625140]
      %v1921 = vld.sshfl [vmem:[#allocation1 + $0x20] sm:$0xff pattern:$0x73625140]
      %1922 = vst [vmem:[#allocation1] ss:$4 sm:$0xff] %v1854
      %v1923 = vld.sshfl [vmem:[#allocation1] sm:$0xff pattern:$0x73625140]
      %1937 = vmatpush.msra.mxu0 %v1831
      %1938 = vmatpush.msra.mxu0 %v1830
      %1939 = vmatpush.msra.mxu0 %v1829
      %1940 = vmatpush.msra.mxu0 %v1828
      %1941 = vmatpush.msra.mxu0 %v1827
      %1942 = vmatpush.msra.mxu0 %v1826
      %1943 = vmatpush.msra.mxu0 %v1825
      %1944 = vmatpush.msra.mxu0 %v1824
      %1945 = vmatpush.msra.mxu0 %v1823
      %1946 = vmatpush.msra.mxu0 %v1822
      %1947 = vmatpush.msra.mxu0 %v1821
      %1948 = vmatpush.msra.mxu0 %v1820
      %1949 = vmatpush.msra.mxu0 %v1819
      %1950 = vmatpush.msra.mxu0 %v1818
      %1951 = vmatpush.msra.mxu0 %v1817
      %1952 = vmatpush.msra.mxu0 %v1816
      %1953 = vmatmul.f32.gmra.mxu0 %v1870
      %v1954 = vpop.f32.mrf.mxu0
      %v1955 = vadd.f32 0.0, %v1954
      %1956 = vmatmul.f32.gmra.mxu0 %v1871
      %v1957 = vpop.f32.mrf.mxu0
      %v1958 = vadd.f32 0.0, %v1957
      %1959 = vmatmul.f32.gmra.mxu0 %v1880
      %v1960 = vpop.f32.mrf.mxu0
      %v1961 = vadd.f32 0.0, %v1960
      %1962 = vmatmul.f32.gmra.mxu0 %v1881
      %v1963 = vpop.f32.mrf.mxu0
      %v1964 = vadd.f32 0.0, %v1963
      %1965 = vmatmul.f32.gmra.mxu0 %v1890
      %v1966 = vpop.f32.mrf.mxu0
      %v1967 = vadd.f32 0.0, %v1966
      %1968 = vmatmul.f32.gmra.mxu0 %v1891
      %v1969 = vpop.f32.mrf.mxu0
      %v1970 = vadd.f32 0.0, %v1969
      %1971 = vmatmul.f32.gmra.mxu0 %v1900
      %v1972 = vpop.f32.mrf.mxu0
      %v1973 = vadd.f32 0.0, %v1972
      %1974 = vmatmul.f32.gmra.mxu0 %v1901
      %v1975 = vpop.f32.mrf.mxu0
      %v1976 = vadd.f32 0.0, %v1975
      %1977 = vmatmul.f32.gmra.mxu0 %v1910
      %v1978 = vpop.f32.mrf.mxu0
      %v1979 = vadd.f32 0.0, %v1978
      %1980 = vmatmul.f32.gmra.mxu0 %v1911
      %v1981 = vpop.f32.mrf.mxu0
      %v1982 = vadd.f32 0.0, %v1981
      %1983 = vmatmul.f32.gmra.mxu0 %v1920
      %v1984 = vpop.f32.mrf.mxu0
      %v1985 = vadd.f32 0.0, %v1984
      %1986 = vmatmul.f32.gmra.mxu0 %v1921
      %v1987 = vpop.f32.mrf.mxu0
      %v1988 = vadd.f32 0.0, %v1987
      %1989 = vmatmul.f32.gmra.mxu0 %v1923
      %v1990 = vpop.f32.mrf.mxu0
      %v1991 = vadd.f32 0.0, %v1990
      %1992 = vdwg.mxu0
      %v2005 = vrot.slane %v1955, 2
      %v2006 = vrot.slane %v1955, 4
      %v2007 = vrot.slane %v1955, 6
      %v2008 = vrot.slane %v1958, 2
      %v2009 = vrot.slane %v1958, 4
      %v2010 = vrot.slane %v1958, 6
      %v2011 = vrot.slane %v1961, 2
      %v2012 = vrot.slane %v1961, 4
      %v2013 = vrot.slane %v1961, 6
      %v2014 = vrot.slane %v1964, 2
      %v2015 = vrot.slane %v1964, 4
      %v2016 = vrot.slane %v1964, 6
      %v2017 = vrot.slane %v1967, 2
      %v2018 = vrot.slane %v1967, 4
      %v2019 = vrot.slane %v1967, 6
      %v2020 = vrot.slane %v1970, 2
      %v2021 = vrot.slane %v1970, 4
      %v2022 = vrot.slane %v1970, 6
      %v2023 = vrot.slane %v1973, 2
      %v2024 = vrot.slane %v1973, 4
      %v2025 = vrot.slane %v1973, 6
      %v2026 = vrot.slane %v1976, 2
      %v2027 = vrot.slane %v1976, 4
      %v2028 = vrot.slane %v1976, 6
      %v2029 = vrot.slane %v1979, 2
      %v2030 = vrot.slane %v1979, 4
      %v2031 = vrot.slane %v1979, 6
      %v2032 = vrot.slane %v1982, 2
      %v2033 = vrot.slane %v1982, 4
      %v2034 = vrot.slane %v1982, 6
      %v2035 = vrot.slane %v1985, 2
      %v2036 = vrot.slane %v1985, 4
      %v2037 = vrot.slane %v1985, 6
      %v2038 = vrot.slane %v1988, 2
      %v2039 = vrot.slane %v1988, 4
      %v2040 = vrot.slane %v1988, 6
      %v2077 = vadd.f32 %v1766, %v1955
      %v2078 = vadd.f32 %v1767, %v2005
      %v2079 = vadd.f32 %v1768, %v2006
      %v2080 = vadd.f32 %v1769, %v2007
      %v2081 = vadd.f32 %v1770, %v1958
      %v2082 = vadd.f32 %v1771, %v2008
      %v2083 = vadd.f32 %v1772, %v2009
      %v2084 = vadd.f32 %v1773, %v2010
      %v2085 = vadd.f32 %v1774, %v1961
      %v2086 = vadd.f32 %v1775, %v2011
      %v2087 = vadd.f32 %v1776, %v2012
      %v2088 = vadd.f32 %v1777, %v2013
      %v2089 = vadd.f32 %v1778, %v1964
      %v2090 = vadd.f32 %v1779, %v2014
      %v2091 = vadd.f32 %v1780, %v2015
      %v2092 = vadd.f32 %v1781, %v2016
      %v2093 = vadd.f32 %v1782, %v1967
      %v2094 = vadd.f32 %v1783, %v2017
      %v2095 = vadd.f32 %v1784, %v2018
      %v2096 = vadd.f32 %v1785, %v2019
      %v2097 = vadd.f32 %v1786, %v1970
      %v2098 = vadd.f32 %v1787, %v2020
      %v2099 = vadd.f32 %v1788, %v2021
      %v2100 = vadd.f32 %v1789, %v2022
      %v2101 = vadd.f32 %v1790, %v1973
      %v2102 = vadd.f32 %v1791, %v2023
      %v2103 = vadd.f32 %v1792, %v2024
      %v2104 = vadd.f32 %v1793, %v2025
      %v2105 = vadd.f32 %v1794, %v1976
      %v2106 = vadd.f32 %v1795, %v2026
      %v2107 = vadd.f32 %v1796, %v2027
      %v2108 = vadd.f32 %v1797, %v2028
      %v2109 = vadd.f32 %v1798, %v1979
      %v2110 = vadd.f32 %v1799, %v2029
      %v2111 = vadd.f32 %v1800, %v2030
      %v2112 = vadd.f32 %v1801, %v2031
      %v2113 = vadd.f32 %v1802, %v1982
      %v2114 = vadd.f32 %v1803, %v2032
      %v2115 = vadd.f32 %v1804, %v2033
      %v2116 = vadd.f32 %v1805, %v2034
      %v2117 = vadd.f32 %v1806, %v1985
      %v2118 = vadd.f32 %v1807, %v2035
      %v2119 = vadd.f32 %v1808, %v2036
      %v2120 = vadd.f32 %v1809, %v2037
      %v2121 = vadd.f32 %v1810, %v1988
      %v2122 = vadd.f32 %v1811, %v2038
      %v2123 = vadd.f32 %v1812, %v2039
      %v2124 = vadd.f32 %v1813, %v2040
      %v2125 = vadd.f32 %v1814, %v1991
      %s2126 = scalar_lea.vmem %s5, 640
      %v2127 = vld [vmem:[%s2126] sm:$0xff]
      %v2128 = vld [vmem:[%s2126 + $0x8] sm:$0xff]
      %v2129 = vld [vmem:[%s2126 + $0x10] sm:$0xff]
      %v2130 = vld [vmem:[%s2126 + $0x18] sm:$0xff]
      %v2131 = vld [vmem:[%s2126 + $0x20] sm:$0xff]
      %v2132 = vld [vmem:[%s2126 + $0x28] sm:$0xff]
      %v2133 = vld [vmem:[%s2126 + $0x30] sm:$0xff]
      %v2134 = vld [vmem:[%s2126 + $0x38] sm:$0xff]
      %v2135 = vld [vmem:[%s2126 + $0x40] sm:$0xff]
      %v2136 = vld [vmem:[%s2126 + $0x48] sm:$0xff]
      %v2137 = vld [vmem:[%s2126 + $0x50] sm:$0xff]
      %v2138 = vld [vmem:[%s2126 + $0x58] sm:$0xff]
      %v2139 = vld [vmem:[%s2126 + $0x60] sm:$0xff]
      %v2140 = vld [vmem:[%s2126 + $0x68] sm:$0xff]
      %v2141 = vld [vmem:[%s2126 + $0x70] sm:$0xff]
      %v2142 = vld [vmem:[%s2126 + $0x78] sm:$0xff]
      %2143 = vst.sshfl [vmem:[#allocation1] sm:$0xff pattern:$0x73625140] %v536
      %2144 = vst.sshfl [vmem:[#allocation1 + $0x20] sm:$0xff pattern:$0x73625140] %v537
      %s2145 = scalar_lea.vmem [#allocation1], 1
      %v2146 = vld [vmem:[%s2145] ss:$4 sm:$0xff]
      %s2147 = scalar_lea.vmem [#allocation1], 2
      %v2148 = vld [vmem:[%s2147] ss:$4 sm:$0xff]
      %s2149 = scalar_lea.vmem [#allocation1], 3
      %v2150 = vld [vmem:[%s2149] ss:$4 sm:$0xff]
      %s2151 = scalar_lea.vmem [#allocation1], 32
      %v2152 = vld [vmem:[%s2151] ss:$4 sm:$0xff]
      %s2153 = scalar_lea.vmem [#allocation1], 33
      %v2154 = vld [vmem:[%s2153] ss:$4 sm:$0xff]
      %s2155 = scalar_lea.vmem [#allocation1], 34
      %v2156 = vld [vmem:[%s2155] ss:$4 sm:$0xff]
      %s2157 = scalar_lea.vmem [#allocation1], 35
      %v2158 = vld [vmem:[%s2157] ss:$4 sm:$0xff]
      %2159 = vst.sshfl [vmem:[#allocation1] sm:$0xff pattern:$0x73625140] %v538
      %2160 = vst.sshfl [vmem:[#allocation1 + $0x20] sm:$0xff pattern:$0x73625140] %v539
      %v2161 = vld [vmem:[%s2145] ss:$4 sm:$0xff]
      %v2162 = vld [vmem:[%s2147] ss:$4 sm:$0xff]
      %v2163 = vld [vmem:[%s2149] ss:$4 sm:$0xff]
      %v2164 = vld [vmem:[%s2151] ss:$4 sm:$0xff]
      %v2165 = vld [vmem:[%s2153] ss:$4 sm:$0xff]
      %v2166 = vld [vmem:[%s2155] ss:$4 sm:$0xff]
      %v2167 = vld [vmem:[%s2157] ss:$4 sm:$0xff]
      %2168 = vst.sshfl [vmem:[#allocation1] sm:$0xff pattern:$0x73625140] %v540
      %2169 = vst.sshfl [vmem:[#allocation1 + $0x20] sm:$0xff pattern:$0x73625140] %v541
      %v2170 = vld [vmem:[%s2145] ss:$4 sm:$0xff]
      %v2171 = vld [vmem:[%s2147] ss:$4 sm:$0xff]
      %v2172 = vld [vmem:[%s2149] ss:$4 sm:$0xff]
      %v2173 = vld [vmem:[%s2151] ss:$4 sm:$0xff]
      %v2174 = vld [vmem:[%s2153] ss:$4 sm:$0xff]
      %v2175 = vld [vmem:[%s2155] ss:$4 sm:$0xff]
      %v2176 = vld [vmem:[%s2157] ss:$4 sm:$0xff]
      %2177 = vst.sshfl [vmem:[#allocation1] sm:$0xff pattern:$0x73625140] %v542
      %2178 = vst.sshfl [vmem:[#allocation1 + $0x20] sm:$0xff pattern:$0x73625140] %v543
      %v2179 = vld [vmem:[%s2145] ss:$4 sm:$0xff]
      %v2180 = vld [vmem:[%s2147] ss:$4 sm:$0xff]
      %v2181 = vld [vmem:[%s2149] ss:$4 sm:$0xff]
      %v2182 = vld [vmem:[%s2151] ss:$4 sm:$0xff]
      %v2183 = vld [vmem:[%s2153] ss:$4 sm:$0xff]
      %v2184 = vld [vmem:[%s2155] ss:$4 sm:$0xff]
      %v2185 = vld [vmem:[%s2157] ss:$4 sm:$0xff]
      %2186 = vst.sshfl [vmem:[#allocation1] sm:$0xff pattern:$0x73625140] %v544
      %2187 = vst.sshfl [vmem:[#allocation1 + $0x20] sm:$0xff pattern:$0x73625140] %v545
      %v2188 = vld [vmem:[%s2145] ss:$4 sm:$0xff]
      %v2189 = vld [vmem:[%s2147] ss:$4 sm:$0xff]
      %v2190 = vld [vmem:[%s2149] ss:$4 sm:$0xff]
      %v2191 = vld [vmem:[%s2151] ss:$4 sm:$0xff]
      %v2192 = vld [vmem:[%s2153] ss:$4 sm:$0xff]
      %v2193 = vld [vmem:[%s2155] ss:$4 sm:$0xff]
      %v2194 = vld [vmem:[%s2157] ss:$4 sm:$0xff]
      %2195 = vst.sshfl [vmem:[#allocation1] sm:$0xff pattern:$0x73625140] %v546
      %2196 = vst.sshfl [vmem:[#allocation1 + $0x20] sm:$0xff pattern:$0x73625140] %v547
      %v2197 = vld [vmem:[%s2145] ss:$4 sm:$0xff]
      %v2198 = vld [vmem:[%s2147] ss:$4 sm:$0xff]
      %v2199 = vld [vmem:[%s2149] ss:$4 sm:$0xff]
      %v2200 = vld [vmem:[%s2151] ss:$4 sm:$0xff]
      %v2201 = vld [vmem:[%s2153] ss:$4 sm:$0xff]
      %v2202 = vld [vmem:[%s2155] ss:$4 sm:$0xff]
      %v2203 = vld [vmem:[%s2157] ss:$4 sm:$0xff]
      %2204 = vst.sshfl [vmem:[#allocation1] sm:$0xff pattern:$0x73625140] %v548
      %2205 = vst.sshfl [vmem:[#allocation1 + $0x20] sm:$0xff pattern:$0x73625140] %v549
      %v2206 = vld [vmem:[%s2145] ss:$4 sm:$0xff]
      %v2207 = vld [vmem:[%s2147] ss:$4 sm:$0xff]
      %v2208 = vld [vmem:[%s2149] ss:$4 sm:$0xff]
      %v2209 = vld [vmem:[%s2151] ss:$4 sm:$0xff]
      %v2210 = vld [vmem:[%s2153] ss:$4 sm:$0xff]
      %v2211 = vld [vmem:[%s2155] ss:$4 sm:$0xff]
      %v2212 = vld [vmem:[%s2157] ss:$4 sm:$0xff]
      %2213 = vst [vmem:[#allocation1] ss:$4 sm:$0xff] %v2146
      %s2214 = scalar_lea.vmem [#allocation1], 1
      %2215 = vst [vmem:[%s2214] ss:$4 sm:$0xff] %v2148
      %s2216 = scalar_lea.vmem [#allocation1], 2
      %2217 = vst [vmem:[%s2216] ss:$4 sm:$0xff] %v2150
      %s2218 = scalar_lea.vmem [#allocation1], 3
      %2219 = vst [vmem:[%s2218] ss:$4 sm:$0xff] %v2152
      %s2220 = scalar_lea.vmem [#allocation1], 32
      %2221 = vst [vmem:[%s2220] ss:$4 sm:$0xff] %v2154
      %s2222 = scalar_lea.vmem [#allocation1], 33
      %2223 = vst [vmem:[%s2222] ss:$4 sm:$0xff] %v2156
      %s2224 = scalar_lea.vmem [#allocation1], 34
      %2225 = vst [vmem:[%s2224] ss:$4 sm:$0xff] %v2158
      %s2226 = scalar_lea.vmem [#allocation1], 35
      %2227 = vst [vmem:[%s2226] ss:$4 sm:$0xff] %v2161
      %v2228 = vld.sshfl [vmem:[#allocation1] sm:$0xff pattern:$0x73625140]
      %v2229 = vld.sshfl [vmem:[#allocation1 + $0x20] sm:$0xff pattern:$0x73625140]
      %2230 = vst [vmem:[#allocation1] ss:$4 sm:$0xff] %v2162
      %2231 = vst [vmem:[%s2214] ss:$4 sm:$0xff] %v2163
      %2232 = vst [vmem:[%s2216] ss:$4 sm:$0xff] %v2164
      %2233 = vst [vmem:[%s2218] ss:$4 sm:$0xff] %v2165
      %2234 = vst [vmem:[%s2220] ss:$4 sm:$0xff] %v2166
      %2235 = vst [vmem:[%s2222] ss:$4 sm:$0xff] %v2167
      %2236 = vst [vmem:[%s2224] ss:$4 sm:$0xff] %v2170
      %2237 = vst [vmem:[%s2226] ss:$4 sm:$0xff] %v2171
      %v2238 = vld.sshfl [vmem:[#allocation1] sm:$0xff pattern:$0x73625140]
      %v2239 = vld.sshfl [vmem:[#allocation1 + $0x20] sm:$0xff pattern:$0x73625140]
      %2240 = vst [vmem:[#allocation1] ss:$4 sm:$0xff] %v2172
      %2241 = vst [vmem:[%s2214] ss:$4 sm:$0xff] %v2173
      %2242 = vst [vmem:[%s2216] ss:$4 sm:$0xff] %v2174
      %2243 = vst [vmem:[%s2218] ss:$4 sm:$0xff] %v2175
      %2244 = vst [vmem:[%s2220] ss:$4 sm:$0xff] %v2176
      %2245 = vst [vmem:[%s2222] ss:$4 sm:$0xff] %v2179
      %2246 = vst [vmem:[%s2224] ss:$4 sm:$0xff] %v2180
      %2247 = vst [vmem:[%s2226] ss:$4 sm:$0xff] %v2181
      %v2248 = vld.sshfl [vmem:[#allocation1] sm:$0xff pattern:$0x73625140]
      %v2249 = vld.sshfl [vmem:[#allocation1 + $0x20] sm:$0xff pattern:$0x73625140]
      %2250 = vst [vmem:[#allocation1] ss:$4 sm:$0xff] %v2182
      %2251 = vst [vmem:[%s2214] ss:$4 sm:$0xff] %v2183
      %2252 = vst [vmem:[%s2216] ss:$4 sm:$0xff] %v2184
      %2253 = vst [vmem:[%s2218] ss:$4 sm:$0xff] %v2185
      %2254 = vst [vmem:[%s2220] ss:$4 sm:$0xff] %v2188
      %2255 = vst [vmem:[%s2222] ss:$4 sm:$0xff] %v2189
      %2256 = vst [vmem:[%s2224] ss:$4 sm:$0xff] %v2190
      %2257 = vst [vmem:[%s2226] ss:$4 sm:$0xff] %v2191
      %v2258 = vld.sshfl [vmem:[#allocation1] sm:$0xff pattern:$0x73625140]
      %v2259 = vld.sshfl [vmem:[#allocation1 + $0x20] sm:$0xff pattern:$0x73625140]
      %2260 = vst [vmem:[#allocation1] ss:$4 sm:$0xff] %v2192
      %2261 = vst [vmem:[%s2214] ss:$4 sm:$0xff] %v2193
      %2262 = vst [vmem:[%s2216] ss:$4 sm:$0xff] %v2194
      %2263 = vst [vmem:[%s2218] ss:$4 sm:$0xff] %v2197
      %2264 = vst [vmem:[%s2220] ss:$4 sm:$0xff] %v2198
      %2265 = vst [vmem:[%s2222] ss:$4 sm:$0xff] %v2199
      %2266 = vst [vmem:[%s2224] ss:$4 sm:$0xff] %v2200
      %2267 = vst [vmem:[%s2226] ss:$4 sm:$0xff] %v2201
      %v2268 = vld.sshfl [vmem:[#allocation1] sm:$0xff pattern:$0x73625140]
      %v2269 = vld.sshfl [vmem:[#allocation1 + $0x20] sm:$0xff pattern:$0x73625140]
      %2270 = vst [vmem:[#allocation1] ss:$4 sm:$0xff] %v2202
      %2271 = vst [vmem:[%s2214] ss:$4 sm:$0xff] %v2203
      %2272 = vst [vmem:[%s2216] ss:$4 sm:$0xff] %v2206
      %2273 = vst [vmem:[%s2218] ss:$4 sm:$0xff] %v2207
      %2274 = vst [vmem:[%s2220] ss:$4 sm:$0xff] %v2208
      %2275 = vst [vmem:[%s2222] ss:$4 sm:$0xff] %v2209
      %2276 = vst [vmem:[%s2224] ss:$4 sm:$0xff] %v2210
      %2277 = vst [vmem:[%s2226] ss:$4 sm:$0xff] %v2211
      %v2278 = vld.sshfl [vmem:[#allocation1] sm:$0xff pattern:$0x73625140]
      %v2279 = vld.sshfl [vmem:[#allocation1 + $0x20] sm:$0xff pattern:$0x73625140]
      %2280 = vst [vmem:[#allocation1] ss:$4 sm:$0xff] %v2212
      %v2281 = vld.sshfl [vmem:[#allocation1] sm:$0xff pattern:$0x73625140]
      %2295 = vmatpush.msra.mxu0 %v2142
      %2296 = vmatpush.msra.mxu0 %v2141
      %2297 = vmatpush.msra.mxu0 %v2140
      %2298 = vmatpush.msra.mxu0 %v2139
      %2299 = vmatpush.msra.mxu0 %v2138
      %2300 = vmatpush.msra.mxu0 %v2137
      %2301 = vmatpush.msra.mxu0 %v2136
      %2302 = vmatpush.msra.mxu0 %v2135
      %2303 = vmatpush.msra.mxu0 %v2134
      %2304 = vmatpush.msra.mxu0 %v2133
      %2305 = vmatpush.msra.mxu0 %v2132
      %2306 = vmatpush.msra.mxu0 %v2131
      %2307 = vmatpush.msra.mxu0 %v2130
      %2308 = vmatpush.msra.mxu0 %v2129
      %2309 = vmatpush.msra.mxu0 %v2128
      %2310 = vmatpush.msra.mxu0 %v2127
      %2311 = vmatmul.f32.gmra.mxu0 %v2228
      %v2312 = vpop.f32.mrf.mxu0
      %v2313 = vadd.f32 0.0, %v2312
      %2314 = vmatmul.f32.gmra.mxu0 %v2229
      %v2315 = vpop.f32.mrf.mxu0
      %v2316 = vadd.f32 0.0, %v2315
      %2317 = vmatmul.f32.gmra.mxu0 %v2238
      %v2318 = vpop.f32.mrf.mxu0
      %v2319 = vadd.f32 0.0, %v2318
      %2320 = vmatmul.f32.gmra.mxu0 %v2239
      %v2321 = vpop.f32.mrf.mxu0
      %v2322 = vadd.f32 0.0, %v2321
      %2323 = vmatmul.f32.gmra.mxu0 %v2248
      %v2324 = vpop.f32.mrf.mxu0
      %v2325 = vadd.f32 0.0, %v2324
      %2326 = vmatmul.f32.gmra.mxu0 %v2249
      %v2327 = vpop.f32.mrf.mxu0
      %v2328 = vadd.f32 0.0, %v2327
      %2329 = vmatmul.f32.gmra.mxu0 %v2258
      %v2330 = vpop.f32.mrf.mxu0
      %v2331 = vadd.f32 0.0, %v2330
      %2332 = vmatmul.f32.gmra.mxu0 %v2259
      %v2333 = vpop.f32.mrf.mxu0
      %v2334 = vadd.f32 0.0, %v2333
      %2335 = vmatmul.f32.gmra.mxu0 %v2268
      %v2336 = vpop.f32.mrf.mxu0
      %v2337 = vadd.f32 0.0, %v2336
      %2338 = vmatmul.f32.gmra.mxu0 %v2269
      %v2339 = vpop.f32.mrf.mxu0
      %v2340 = vadd.f32 0.0, %v2339
      %2341 = vmatmul.f32.gmra.mxu0 %v2278
      %v2342 = vpop.f32.mrf.mxu0
      %v2343 = vadd.f32 0.0, %v2342
      %2344 = vmatmul.f32.gmra.mxu0 %v2279
      %v2345 = vpop.f32.mrf.mxu0
      %v2346 = vadd.f32 0.0, %v2345
      %2347 = vmatmul.f32.gmra.mxu0 %v2281
      %v2348 = vpop.f32.mrf.mxu0
      %v2349 = vadd.f32 0.0, %v2348
      %2350 = vdwg.mxu0
      %v2363 = vrot.slane %v2313, 2
      %v2364 = vrot.slane %v2313, 4
      %v2365 = vrot.slane %v2313, 6
      %v2366 = vrot.slane %v2316, 2
      %v2367 = vrot.slane %v2316, 4
      %v2368 = vrot.slane %v2316, 6
      %v2369 = vrot.slane %v2319, 2
      %v2370 = vrot.slane %v2319, 4
      %v2371 = vrot.slane %v2319, 6
      %v2372 = vrot.slane %v2322, 2
      %v2373 = vrot.slane %v2322, 4
      %v2374 = vrot.slane %v2322, 6
      %v2375 = vrot.slane %v2325, 2
      %v2376 = vrot.slane %v2325, 4
      %v2377 = vrot.slane %v2325, 6
      %v2378 = vrot.slane %v2328, 2
      %v2379 = vrot.slane %v2328, 4
      %v2380 = vrot.slane %v2328, 6
      %v2381 = vrot.slane %v2331, 2
      %v2382 = vrot.slane %v2331, 4
      %v2383 = vrot.slane %v2331, 6
      %v2384 = vrot.slane %v2334, 2
      %v2385 = vrot.slane %v2334, 4
      %v2386 = vrot.slane %v2334, 6
      %v2387 = vrot.slane %v2337, 2
      %v2388 = vrot.slane %v2337, 4
      %v2389 = vrot.slane %v2337, 6
      %v2390 = vrot.slane %v2340, 2
      %v2391 = vrot.slane %v2340, 4
      %v2392 = vrot.slane %v2340, 6
      %v2393 = vrot.slane %v2343, 2
      %v2394 = vrot.slane %v2343, 4
      %v2395 = vrot.slane %v2343, 6
      %v2396 = vrot.slane %v2346, 2
      %v2397 = vrot.slane %v2346, 4
      %v2398 = vrot.slane %v2346, 6
      %v2435 = vadd.f32 %v2077, %v2313
      %v2436 = vadd.f32 %v2078, %v2363
      %v2437 = vadd.f32 %v2079, %v2364
      %v2438 = vadd.f32 %v2080, %v2365
      %v2439 = vadd.f32 %v2081, %v2316
      %v2440 = vadd.f32 %v2082, %v2366
      %v2441 = vadd.f32 %v2083, %v2367
      %v2442 = vadd.f32 %v2084, %v2368
      %v2443 = vadd.f32 %v2085, %v2319
      %v2444 = vadd.f32 %v2086, %v2369
      %v2445 = vadd.f32 %v2087, %v2370
      %v2446 = vadd.f32 %v2088, %v2371
      %v2447 = vadd.f32 %v2089, %v2322
      %v2448 = vadd.f32 %v2090, %v2372
      %v2449 = vadd.f32 %v2091, %v2373
      %v2450 = vadd.f32 %v2092, %v2374
      %v2451 = vadd.f32 %v2093, %v2325
      %v2452 = vadd.f32 %v2094, %v2375
      %v2453 = vadd.f32 %v2095, %v2376
      %v2454 = vadd.f32 %v2096, %v2377
      %v2455 = vadd.f32 %v2097, %v2328
      %v2456 = vadd.f32 %v2098, %v2378
      %v2457 = vadd.f32 %v2099, %v2379
      %v2458 = vadd.f32 %v2100, %v2380
      %v2459 = vadd.f32 %v2101, %v2331
      %v2460 = vadd.f32 %v2102, %v2381
      %v2461 = vadd.f32 %v2103, %v2382
      %v2462 = vadd.f32 %v2104, %v2383
      %v2463 = vadd.f32 %v2105, %v2334
      %v2464 = vadd.f32 %v2106, %v2384
      %v2465 = vadd.f32 %v2107, %v2385
      %v2466 = vadd.f32 %v2108, %v2386
      %v2467 = vadd.f32 %v2109, %v2337
      %v2468 = vadd.f32 %v2110, %v2387
      %v2469 = vadd.f32 %v2111, %v2388
      %v2470 = vadd.f32 %v2112, %v2389
      %v2471 = vadd.f32 %v2113, %v2340
      %v2472 = vadd.f32 %v2114, %v2390
      %v2473 = vadd.f32 %v2115, %v2391
      %v2474 = vadd.f32 %v2116, %v2392
      %v2475 = vadd.f32 %v2117, %v2343
      %v2476 = vadd.f32 %v2118, %v2393
      %v2477 = vadd.f32 %v2119, %v2394
      %v2478 = vadd.f32 %v2120, %v2395
      %v2479 = vadd.f32 %v2121, %v2346
      %v2480 = vadd.f32 %v2122, %v2396
      %v2481 = vadd.f32 %v2123, %v2397
      %v2482 = vadd.f32 %v2124, %v2398
      %v2483 = vadd.f32 %v2125, %v2349
      %s2484 = scalar_lea.vmem %s5, 768
      %v2485 = vld [vmem:[%s2484] sm:$0xff]
      %v2486 = vld [vmem:[%s2484 + $0x8] sm:$0xff]
      %v2487 = vld [vmem:[%s2484 + $0x10] sm:$0xff]
      %v2488 = vld [vmem:[%s2484 + $0x18] sm:$0xff]
      %v2489 = vld [vmem:[%s2484 + $0x20] sm:$0xff]
      %v2490 = vld [vmem:[%s2484 + $0x28] sm:$0xff]
      %v2491 = vld [vmem:[%s2484 + $0x30] sm:$0xff]
      %v2492 = vld [vmem:[%s2484 + $0x38] sm:$0xff]
      %v2493 = vld [vmem:[%s2484 + $0x40] sm:$0xff]
      %v2494 = vld [vmem:[%s2484 + $0x48] sm:$0xff]
      %v2495 = vld [vmem:[%s2484 + $0x50] sm:$0xff]
      %v2496 = vld [vmem:[%s2484 + $0x58] sm:$0xff]
      %v2497 = vld [vmem:[%s2484 + $0x60] sm:$0xff]
      %v2498 = vld [vmem:[%s2484 + $0x68] sm:$0xff]
      %v2499 = vld [vmem:[%s2484 + $0x70] sm:$0xff]
      %v2500 = vld [vmem:[%s2484 + $0x78] sm:$0xff]
      %v2503 = vrot.slane %v550, 2
      %v2504 = vrot.slane %v550, 4
      %v2505 = vrot.slane %v550, 6
      %v2506 = vrot.slane %v551, 2
      %v2507 = vrot.slane %v551, 4
      %2508 = vst [vmem:[#allocation1] ss:$4 sm:$0xff] %v538
      %s2509 = scalar_lea.vmem [#allocation1], 1
      %2510 = vst [vmem:[%s2509] ss:$4 sm:$0xff] %v611
      %s2511 = scalar_lea.vmem [#allocation1], 2
      %2512 = vst [vmem:[%s2511] ss:$4 sm:$0xff] %v612
      %s2513 = scalar_lea.vmem [#allocation1], 3
      %2514 = vst [vmem:[%s2513] ss:$4 sm:$0xff] %v613
      %s2515 = scalar_lea.vmem [#allocation1], 32
      %2516 = vst [vmem:[%s2515] ss:$4 sm:$0xff] %v539
      %s2517 = scalar_lea.vmem [#allocation1], 33
      %2518 = vst [vmem:[%s2517] ss:$4 sm:$0xff] %v614
      %s2519 = scalar_lea.vmem [#allocation1], 34
      %2520 = vst [vmem:[%s2519] ss:$4 sm:$0xff] %v615
      %s2521 = scalar_lea.vmem [#allocation1], 35
      %2522 = vst [vmem:[%s2521] ss:$4 sm:$0xff] %v540
      %v2523 = vld.sshfl [vmem:[#allocation1] sm:$0xff pattern:$0x73625140]
      %v2524 = vld.sshfl [vmem:[#allocation1 + $0x20] sm:$0xff pattern:$0x73625140]
      %2525 = vst [vmem:[#allocation1] ss:$4 sm:$0xff] %v617
      %2526 = vst [vmem:[%s2509] ss:$4 sm:$0xff] %v618
      %2527 = vst [vmem:[%s2511] ss:$4 sm:$0xff] %v619
      %2528 = vst [vmem:[%s2513] ss:$4 sm:$0xff] %v541
      %2529 = vst [vmem:[%s2515] ss:$4 sm:$0xff] %v620
      %2530 = vst [vmem:[%s2517] ss:$4 sm:$0xff] %v621
      %2531 = vst [vmem:[%s2519] ss:$4 sm:$0xff] %v542
      %2532 = vst [vmem:[%s2521] ss:$4 sm:$0xff] %v623
      %v2533 = vld.sshfl [vmem:[#allocation1] sm:$0xff pattern:$0x73625140]
      %v2534 = vld.sshfl [vmem:[#allocation1 + $0x20] sm:$0xff pattern:$0x73625140]
      %2535 = vst [vmem:[#allocation1] ss:$4 sm:$0xff] %v624
      %2536 = vst [vmem:[%s2509] ss:$4 sm:$0xff] %v625
      %2537 = vst [vmem:[%s2511] ss:$4 sm:$0xff] %v543
      %2538 = vst [vmem:[%s2513] ss:$4 sm:$0xff] %v626
      %2539 = vst [vmem:[%s2515] ss:$4 sm:$0xff] %v627
      %2540 = vst [vmem:[%s2517] ss:$4 sm:$0xff] %v544
      %2541 = vst [vmem:[%s2519] ss:$4 sm:$0xff] %v629
      %2542 = vst [vmem:[%s2521] ss:$4 sm:$0xff] %v630
      %v2543 = vld.sshfl [vmem:[#allocation1] sm:$0xff pattern:$0x73625140]
      %v2544 = vld.sshfl [vmem:[#allocation1 + $0x20] sm:$0xff pattern:$0x73625140]
      %2545 = vst [vmem:[#allocation1] ss:$4 sm:$0xff] %v631
      %2546 = vst [vmem:[%s2509] ss:$4 sm:$0xff] %v545
      %2547 = vst [vmem:[%s2511] ss:$4 sm:$0xff] %v632
      %2548 = vst [vmem:[%s2513] ss:$4 sm:$0xff] %v633
      %2549 = vst [vmem:[%s2515] ss:$4 sm:$0xff] %v546
      %2550 = vst [vmem:[%s2517] ss:$4 sm:$0xff] %v635
      %2551 = vst [vmem:[%s2519] ss:$4 sm:$0xff] %v636
      %2552 = vst [vmem:[%s2521] ss:$4 sm:$0xff] %v637
      %v2553 = vld.sshfl [vmem:[#allocation1] sm:$0xff pattern:$0x73625140]
      %v2554 = vld.sshfl [vmem:[#allocation1 + $0x20] sm:$0xff pattern:$0x73625140]
      %2555 = vst [vmem:[#allocation1] ss:$4 sm:$0xff] %v547
      %2556 = vst [vmem:[%s2509] ss:$4 sm:$0xff] %v638
      %2557 = vst [vmem:[%s2511] ss:$4 sm:$0xff] %v639
      %2558 = vst [vmem:[%s2513] ss:$4 sm:$0xff] %v548
      %2559 = vst [vmem:[%s2515] ss:$4 sm:$0xff] %v1539
      %2560 = vst [vmem:[%s2517] ss:$4 sm:$0xff] %v1540
      %2561 = vst [vmem:[%s2519] ss:$4 sm:$0xff] %v1541
      %2562 = vst [vmem:[%s2521] ss:$4 sm:$0xff] %v549
      %v2563 = vld.sshfl [vmem:[#allocation1] sm:$0xff pattern:$0x73625140]
      %v2564 = vld.sshfl [vmem:[#allocation1 + $0x20] sm:$0xff pattern:$0x73625140]
      %2565 = vst [vmem:[#allocation1] ss:$4 sm:$0xff] %v1542
      %2566 = vst [vmem:[%s2509] ss:$4 sm:$0xff] %v1543
      %2567 = vst [vmem:[%s2511] ss:$4 sm:$0xff] %v550
      %2568 = vst [vmem:[%s2513] ss:$4 sm:$0xff] %v2503
      %2569 = vst [vmem:[%s2515] ss:$4 sm:$0xff] %v2504
      %2570 = vst [vmem:[%s2517] ss:$4 sm:$0xff] %v2505
      %2571 = vst [vmem:[%s2519] ss:$4 sm:$0xff] %v551
      %2572 = vst [vmem:[%s2521] ss:$4 sm:$0xff] %v2506
      %v2573 = vld.sshfl [vmem:[#allocation1] sm:$0xff pattern:$0x73625140]
      %v2574 = vld.sshfl [vmem:[#allocation1 + $0x20] sm:$0xff pattern:$0x73625140]
      %2575 = vst [vmem:[#allocation1] ss:$4 sm:$0xff] %v2507
      %v2576 = vld.sshfl [vmem:[#allocation1] sm:$0xff pattern:$0x73625140]
      %2590 = vmatpush.msra.mxu0 %v2500
      %2591 = vmatpush.msra.mxu0 %v2499
      %2592 = vmatpush.msra.mxu0 %v2498
      %2593 = vmatpush.msra.mxu0 %v2497
      %2594 = vmatpush.msra.mxu0 %v2496
      %2595 = vmatpush.msra.mxu0 %v2495
      %2596 = vmatpush.msra.mxu0 %v2494
      %2597 = vmatpush.msra.mxu0 %v2493
      %2598 = vmatpush.msra.mxu0 %v2492
      %2599 = vmatpush.msra.mxu0 %v2491
      %2600 = vmatpush.msra.mxu0 %v2490
      %2601 = vmatpush.msra.mxu0 %v2489
      %2602 = vmatpush.msra.mxu0 %v2488
      %2603 = vmatpush.msra.mxu0 %v2487
      %2604 = vmatpush.msra.mxu0 %v2486
      %2605 = vmatpush.msra.mxu0 %v2485
      %2606 = vmatmul.f32.gmra.mxu0 %v2523
      %v2607 = vpop.f32.mrf.mxu0
      %v2608 = vadd.f32 0.0, %v2607
      %2609 = vmatmul.f32.gmra.mxu0 %v2524
      %v2610 = vpop.f32.mrf.mxu0
      %v2611 = vadd.f32 0.0, %v2610
      %2612 = vmatmul.f32.gmra.mxu0 %v2533
      %v2613 = vpop.f32.mrf.mxu0
      %v2614 = vadd.f32 0.0, %v2613
      %2615 = vmatmul.f32.gmra.mxu0 %v2534
      %v2616 = vpop.f32.mrf.mxu0
      %v2617 = vadd.f32 0.0, %v2616
      %2618 = vmatmul.f32.gmra.mxu0 %v2543
      %v2619 = vpop.f32.mrf.mxu0
      %v2620 = vadd.f32 0.0, %v2619
      %2621 = vmatmul.f32.gmra.mxu0 %v2544
      %v2622 = vpop.f32.mrf.mxu0
      %v2623 = vadd.f32 0.0, %v2622
      %2624 = vmatmul.f32.gmra.mxu0 %v2553
      %v2625 = vpop.f32.mrf.mxu0
      %v2626 = vadd.f32 0.0, %v2625
      %2627 = vmatmul.f32.gmra.mxu0 %v2554
      %v2628 = vpop.f32.mrf.mxu0
      %v2629 = vadd.f32 0.0, %v2628
      %2630 = vmatmul.f32.gmra.mxu0 %v2563
      %v2631 = vpop.f32.mrf.mxu0
      %v2632 = vadd.f32 0.0, %v2631
      %2633 = vmatmul.f32.gmra.mxu0 %v2564
      %v2634 = vpop.f32.mrf.mxu0
      %v2635 = vadd.f32 0.0, %v2634
      %2636 = vmatmul.f32.gmra.mxu0 %v2573
      %v2637 = vpop.f32.mrf.mxu0
      %v2638 = vadd.f32 0.0, %v2637
      %2639 = vmatmul.f32.gmra.mxu0 %v2574
      %v2640 = vpop.f32.mrf.mxu0
      %v2641 = vadd.f32 0.0, %v2640
      %2642 = vmatmul.f32.gmra.mxu0 %v2576
      %v2643 = vpop.f32.mrf.mxu0
      %v2644 = vadd.f32 0.0, %v2643
      %2645 = vdwg.mxu0
      %v2658 = vrot.slane %v2608, 2
      %v2659 = vrot.slane %v2608, 4
      %v2660 = vrot.slane %v2608, 6
      %v2661 = vrot.slane %v2611, 2
      %v2662 = vrot.slane %v2611, 4
      %v2663 = vrot.slane %v2611, 6
      %v2664 = vrot.slane %v2614, 2
      %v2665 = vrot.slane %v2614, 4
      %v2666 = vrot.slane %v2614, 6
      %v2667 = vrot.slane %v2617, 2
      %v2668 = vrot.slane %v2617, 4
      %v2669 = vrot.slane %v2617, 6
      %v2670 = vrot.slane %v2620, 2
      %v2671 = vrot.slane %v2620, 4
      %v2672 = vrot.slane %v2620, 6
      %v2673 = vrot.slane %v2623, 2
      %v2674 = vrot.slane %v2623, 4
      %v2675 = vrot.slane %v2623, 6
      %v2676 = vrot.slane %v2626, 2
      %v2677 = vrot.slane %v2626, 4
      %v2678 = vrot.slane %v2626, 6
      %v2679 = vrot.slane %v2629, 2
      %v2680 = vrot.slane %v2629, 4
      %v2681 = vrot.slane %v2629, 6
      %v2682 = vrot.slane %v2632, 2
      %v2683 = vrot.slane %v2632, 4
      %v2684 = vrot.slane %v2632, 6
      %v2685 = vrot.slane %v2635, 2
      %v2686 = vrot.slane %v2635, 4
      %v2687 = vrot.slane %v2635, 6
      %v2688 = vrot.slane %v2638, 2
      %v2689 = vrot.slane %v2638, 4
      %v2690 = vrot.slane %v2638, 6
      %v2691 = vrot.slane %v2641, 2
      %v2692 = vrot.slane %v2641, 4
      %v2693 = vrot.slane %v2641, 6
      %v2730 = vadd.f32 %v2435, %v2608
      %v2731 = vadd.f32 %v2436, %v2658
      %v2732 = vadd.f32 %v2437, %v2659
      %v2733 = vadd.f32 %v2438, %v2660
      %v2734 = vadd.f32 %v2439, %v2611
      %v2735 = vadd.f32 %v2440, %v2661
      %v2736 = vadd.f32 %v2441, %v2662
      %v2737 = vadd.f32 %v2442, %v2663
      %v2738 = vadd.f32 %v2443, %v2614
      %v2739 = vadd.f32 %v2444, %v2664
      %v2740 = vadd.f32 %v2445, %v2665
      %v2741 = vadd.f32 %v2446, %v2666
      %v2742 = vadd.f32 %v2447, %v2617
      %v2743 = vadd.f32 %v2448, %v2667
      %v2744 = vadd.f32 %v2449, %v2668
      %v2745 = vadd.f32 %v2450, %v2669
      %v2746 = vadd.f32 %v2451, %v2620
      %v2747 = vadd.f32 %v2452, %v2670
      %v2748 = vadd.f32 %v2453, %v2671
      %v2749 = vadd.f32 %v2454, %v2672
      %v2750 = vadd.f32 %v2455, %v2623
      %v2751 = vadd.f32 %v2456, %v2673
      %v2752 = vadd.f32 %v2457, %v2674
      %v2753 = vadd.f32 %v2458, %v2675
      %v2754 = vadd.f32 %v2459, %v2626
      %v2755 = vadd.f32 %v2460, %v2676
      %v2756 = vadd.f32 %v2461, %v2677
      %v2757 = vadd.f32 %v2462, %v2678
      %v2758 = vadd.f32 %v2463, %v2629
      %v2759 = vadd.f32 %v2464, %v2679
      %v2760 = vadd.f32 %v2465, %v2680
      %v2761 = vadd.f32 %v2466, %v2681
      %v2762 = vadd.f32 %v2467, %v2632
      %v2763 = vadd.f32 %v2468, %v2682
      %v2764 = vadd.f32 %v2469, %v2683
      %v2765 = vadd.f32 %v2470, %v2684
      %v2766 = vadd.f32 %v2471, %v2635
      %v2767 = vadd.f32 %v2472, %v2685
      %v2768 = vadd.f32 %v2473, %v2686
      %v2769 = vadd.f32 %v2474, %v2687
      %v2770 = vadd.f32 %v2475, %v2638
      %v2771 = vadd.f32 %v2476, %v2688
      %v2772 = vadd.f32 %v2477, %v2689
      %v2773 = vadd.f32 %v2478, %v2690
      %v2774 = vadd.f32 %v2479, %v2641
      %v2775 = vadd.f32 %v2480, %v2691
      %v2776 = vadd.f32 %v2481, %v2692
      %v2777 = vadd.f32 %v2482, %v2693
      %v2778 = vadd.f32 %v2483, %v2644
      %s2779 = scalar_lea.vmem %s5, 896
      %v2780 = vld [vmem:[%s2779] sm:$0xff]
      %v2781 = vld [vmem:[%s2779 + $0x8] sm:$0xff]
      %v2782 = vld [vmem:[%s2779 + $0x10] sm:$0xff]
      %v2783 = vld [vmem:[%s2779 + $0x18] sm:$0xff]
      %v2784 = vld [vmem:[%s2779 + $0x20] sm:$0xff]
      %v2785 = vld [vmem:[%s2779 + $0x28] sm:$0xff]
      %v2786 = vld [vmem:[%s2779 + $0x30] sm:$0xff]
      %v2787 = vld [vmem:[%s2779 + $0x38] sm:$0xff]
      %v2788 = vld [vmem:[%s2779 + $0x40] sm:$0xff]
      %v2789 = vld [vmem:[%s2779 + $0x48] sm:$0xff]
      %v2790 = vld [vmem:[%s2779 + $0x50] sm:$0xff]
      %v2791 = vld [vmem:[%s2779 + $0x58] sm:$0xff]
      %v2792 = vld [vmem:[%s2779 + $0x60] sm:$0xff]
      %v2793 = vld [vmem:[%s2779 + $0x68] sm:$0xff]
      %v2794 = vld [vmem:[%s2779 + $0x70] sm:$0xff]
      %v2795 = vld [vmem:[%s2779 + $0x78] sm:$0xff]
      %v2796 = vrot.slane %v551, 6
      %v2797 = vrot.slane %v550, 7
      %v2798 = vrot.slane %v2797, 2
      %v2799 = vrot.slane %v2503, 7
      %v2800 = vsel %vm647, %v2798, %v2799
      %v2801 = vrot.slane %v2799, 2
      %v2802 = vrot.slane %v2504, 7
      %v2803 = vsel %vm647, %v2801, %v2802
      %v2804 = vrot.slane %v2802, 2
      %v2805 = vrot.slane %v2505, 7
      %v2806 = vsel %vm647, %v2804, %v2805
      %v2807 = vrot.slane %v2805, 2
      %v2808 = vrot.slane %v551, 7
      %v2809 = vsel %vm647, %v2807, %v2808
      %v2810 = vrot.slane %v2808, 2
      %v2811 = vrot.slane %v2506, 7
      %v2812 = vsel %vm647, %v2810, %v2811
      %v2813 = vrot.slane %v2811, 2
      %v2814 = vrot.slane %v2507, 7
      %v2815 = vsel %vm647, %v2813, %v2814
      %v2816 = vrot.slane %v2814, 2
      %v2817 = vrot.slane %v2796, 7
      %v2818 = vsel %vm647, %v2816, %v2817
      %2819 = vst [vmem:[#allocation1] ss:$4 sm:$0xff] %v695
      %s2820 = scalar_lea.vmem [#allocation1], 1
      %2821 = vst [vmem:[%s2820] ss:$4 sm:$0xff] %v698
      %s2822 = scalar_lea.vmem [#allocation1], 2
      %2823 = vst [vmem:[%s2822] ss:$4 sm:$0xff] %v701
      %s2824 = scalar_lea.vmem [#allocation1], 3
      %2825 = vst [vmem:[%s2824] ss:$4 sm:$0xff] %v704
      %s2826 = scalar_lea.vmem [#allocation1], 32
      %2827 = vst [vmem:[%s2826] ss:$4 sm:$0xff] %v707
      %s2828 = scalar_lea.vmem [#allocation1], 33
      %2829 = vst [vmem:[%s2828] ss:$4 sm:$0xff] %v710
      %s2830 = scalar_lea.vmem [#allocation1], 34
      %2831 = vst [vmem:[%s2830] ss:$4 sm:$0xff] %v713
      %s2832 = scalar_lea.vmem [#allocation1], 35
      %2833 = vst [vmem:[%s2832] ss:$4 sm:$0xff] %v717
      %v2834 = vld.sshfl [vmem:[#allocation1] sm:$0xff pattern:$0x73625140]
      %v2835 = vld.sshfl [vmem:[#allocation1 + $0x20] sm:$0xff pattern:$0x73625140]
      %2836 = vst [vmem:[#allocation1] ss:$4 sm:$0xff] %v720
      %2837 = vst [vmem:[%s2820] ss:$4 sm:$0xff] %v723
      %2838 = vst [vmem:[%s2822] ss:$4 sm:$0xff] %v726
      %2839 = vst [vmem:[%s2824] ss:$4 sm:$0xff] %v729
      %2840 = vst [vmem:[%s2826] ss:$4 sm:$0xff] %v732
      %2841 = vst [vmem:[%s2828] ss:$4 sm:$0xff] %v735
      %2842 = vst [vmem:[%s2830] ss:$4 sm:$0xff] %v739
      %2843 = vst [vmem:[%s2832] ss:$4 sm:$0xff] %v742
      %v2844 = vld.sshfl [vmem:[#allocation1] sm:$0xff pattern:$0x73625140]
      %v2845 = vld.sshfl [vmem:[#allocation1 + $0x20] sm:$0xff pattern:$0x73625140]
      %2846 = vst [vmem:[#allocation1] ss:$4 sm:$0xff] %v745
      %2847 = vst [vmem:[%s2820] ss:$4 sm:$0xff] %v748
      %2848 = vst [vmem:[%s2822] ss:$4 sm:$0xff] %v751
      %2849 = vst [vmem:[%s2824] ss:$4 sm:$0xff] %v754
      %2850 = vst [vmem:[%s2826] ss:$4 sm:$0xff] %v757
      %2851 = vst [vmem:[%s2828] ss:$4 sm:$0xff] %v761
      %2852 = vst [vmem:[%s2830] ss:$4 sm:$0xff] %v764
      %2853 = vst [vmem:[%s2832] ss:$4 sm:$0xff] %v767
      %v2854 = vld.sshfl [vmem:[#allocation1] sm:$0xff pattern:$0x73625140]
      %v2855 = vld.sshfl [vmem:[#allocation1 + $0x20] sm:$0xff pattern:$0x73625140]
      %2856 = vst [vmem:[#allocation1] ss:$4 sm:$0xff] %v770
      %2857 = vst [vmem:[%s2820] ss:$4 sm:$0xff] %v773
      %2858 = vst [vmem:[%s2822] ss:$4 sm:$0xff] %v776
      %2859 = vst [vmem:[%s2824] ss:$4 sm:$0xff] %v779
      %2860 = vst [vmem:[%s2826] ss:$4 sm:$0xff] %v783
      %2861 = vst [vmem:[%s2828] ss:$4 sm:$0xff] %v786
      %2862 = vst [vmem:[%s2830] ss:$4 sm:$0xff] %v789
      %2863 = vst [vmem:[%s2832] ss:$4 sm:$0xff] %v792
      %v2864 = vld.sshfl [vmem:[#allocation1] sm:$0xff pattern:$0x73625140]
      %v2865 = vld.sshfl [vmem:[#allocation1 + $0x20] sm:$0xff pattern:$0x73625140]
      %2866 = vst [vmem:[#allocation1] ss:$4 sm:$0xff] %v795
      %2867 = vst [vmem:[%s2820] ss:$4 sm:$0xff] %v798
      %2868 = vst [vmem:[%s2822] ss:$4 sm:$0xff] %v801
      %2869 = vst [vmem:[%s2824] ss:$4 sm:$0xff] %v1836
      %2870 = vst [vmem:[%s2826] ss:$4 sm:$0xff] %v1839
      %2871 = vst [vmem:[%s2828] ss:$4 sm:$0xff] %v1842
      %2872 = vst [vmem:[%s2830] ss:$4 sm:$0xff] %v1845
      %2873 = vst [vmem:[%s2832] ss:$4 sm:$0xff] %v1848
      %v2874 = vld.sshfl [vmem:[#allocation1] sm:$0xff pattern:$0x73625140]
      %v2875 = vld.sshfl [vmem:[#allocation1 + $0x20] sm:$0xff pattern:$0x73625140]
      %2876 = vst [vmem:[#allocation1] ss:$4 sm:$0xff] %v1851
      %2877 = vst [vmem:[%s2820] ss:$4 sm:$0xff] %v1854
      %2878 = vst [vmem:[%s2822] ss:$4 sm:$0xff] %v2800
      %2879 = vst [vmem:[%s2824] ss:$4 sm:$0xff] %v2803
      %2880 = vst [vmem:[%s2826] ss:$4 sm:$0xff] %v2806
      %2881 = vst [vmem:[%s2828] ss:$4 sm:$0xff] %v2809
      %2882 = vst [vmem:[%s2830] ss:$4 sm:$0xff] %v2812
      %2883 = vst [vmem:[%s2832] ss:$4 sm:$0xff] %v2815
      %v2884 = vld.sshfl [vmem:[#allocation1] sm:$0xff pattern:$0x73625140]
      %v2885 = vld.sshfl [vmem:[#allocation1 + $0x20] sm:$0xff pattern:$0x73625140]
      %2886 = vst [vmem:[#allocation1] ss:$4 sm:$0xff] %v2818
      %v2887 = vld.sshfl [vmem:[#allocation1] sm:$0xff pattern:$0x73625140]
      %2901 = vmatpush.msra.mxu0 %v2795
      %2902 = vmatpush.msra.mxu0 %v2794
      %2903 = vmatpush.msra.mxu0 %v2793
      %2904 = vmatpush.msra.mxu0 %v2792
      %2905 = vmatpush.msra.mxu0 %v2791
      %2906 = vmatpush.msra.mxu0 %v2790
      %2907 = vmatpush.msra.mxu0 %v2789
      %2908 = vmatpush.msra.mxu0 %v2788
      %2909 = vmatpush.msra.mxu0 %v2787
      %2910 = vmatpush.msra.mxu0 %v2786
      %2911 = vmatpush.msra.mxu0 %v2785
      %2912 = vmatpush.msra.mxu0 %v2784
      %2913 = vmatpush.msra.mxu0 %v2783
      %2914 = vmatpush.msra.mxu0 %v2782
      %2915 = vmatpush.msra.mxu0 %v2781
      %2916 = vmatpush.msra.mxu0 %v2780
      %2917 = vmatmul.f32.gmra.mxu0 %v2834
      %v2918 = vpop.f32.mrf.mxu0
      %v2919 = vadd.f32 0.0, %v2918
      %2920 = vmatmul.f32.gmra.mxu0 %v2835
      %v2921 = vpop.f32.mrf.mxu0
      %v2922 = vadd.f32 0.0, %v2921
      %2923 = vmatmul.f32.gmra.mxu0 %v2844
      %v2924 = vpop.f32.mrf.mxu0
      %v2925 = vadd.f32 0.0, %v2924
      %2926 = vmatmul.f32.gmra.mxu0 %v2845
      %v2927 = vpop.f32.mrf.mxu0
      %v2928 = vadd.f32 0.0, %v2927
      %2929 = vmatmul.f32.gmra.mxu0 %v2854
      %v2930 = vpop.f32.mrf.mxu0
      %v2931 = vadd.f32 0.0, %v2930
      %2932 = vmatmul.f32.gmra.mxu0 %v2855
      %v2933 = vpop.f32.mrf.mxu0
      %v2934 = vadd.f32 0.0, %v2933
      %2935 = vmatmul.f32.gmra.mxu0 %v2864
      %v2936 = vpop.f32.mrf.mxu0
      %v2937 = vadd.f32 0.0, %v2936
      %2938 = vmatmul.f32.gmra.mxu0 %v2865
      %v2939 = vpop.f32.mrf.mxu0
      %v2940 = vadd.f32 0.0, %v2939
      %2941 = vmatmul.f32.gmra.mxu0 %v2874
      %v2942 = vpop.f32.mrf.mxu0
      %v2943 = vadd.f32 0.0, %v2942
      %2944 = vmatmul.f32.gmra.mxu0 %v2875
      %v2945 = vpop.f32.mrf.mxu0
      %v2946 = vadd.f32 0.0, %v2945
      %2947 = vmatmul.f32.gmra.mxu0 %v2884
      %v2948 = vpop.f32.mrf.mxu0
      %v2949 = vadd.f32 0.0, %v2948
      %2950 = vmatmul.f32.gmra.mxu0 %v2885
      %v2951 = vpop.f32.mrf.mxu0
      %v2952 = vadd.f32 0.0, %v2951
      %2953 = vmatmul.f32.gmra.mxu0 %v2887
      %v2954 = vpop.f32.mrf.mxu0
      %v2955 = vadd.f32 0.0, %v2954
      %2956 = vdwg.mxu0
      %v2969 = vrot.slane %v2919, 2
      %v2970 = vrot.slane %v2919, 4
      %v2971 = vrot.slane %v2919, 6
      %v2972 = vrot.slane %v2922, 2
      %v2973 = vrot.slane %v2922, 4
      %v2974 = vrot.slane %v2922, 6
      %v2975 = vrot.slane %v2925, 2
      %v2976 = vrot.slane %v2925, 4
      %v2977 = vrot.slane %v2925, 6
      %v2978 = vrot.slane %v2928, 2
      %v2979 = vrot.slane %v2928, 4
      %v2980 = vrot.slane %v2928, 6
      %v2981 = vrot.slane %v2931, 2
      %v2982 = vrot.slane %v2931, 4
      %v2983 = vrot.slane %v2931, 6
      %v2984 = vrot.slane %v2934, 2
      %v2985 = vrot.slane %v2934, 4
      %v2986 = vrot.slane %v2934, 6
      %v2987 = vrot.slane %v2937, 2
      %v2988 = vrot.slane %v2937, 4
      %v2989 = vrot.slane %v2937, 6
      %v2990 = vrot.slane %v2940, 2
      %v2991 = vrot.slane %v2940, 4
      %v2992 = vrot.slane %v2940, 6
      %v2993 = vrot.slane %v2943, 2
      %v2994 = vrot.slane %v2943, 4
      %v2995 = vrot.slane %v2943, 6
      %v2996 = vrot.slane %v2946, 2
      %v2997 = vrot.slane %v2946, 4
      %v2998 = vrot.slane %v2946, 6
      %v2999 = vrot.slane %v2949, 2
      %v3000 = vrot.slane %v2949, 4
      %v3001 = vrot.slane %v2949, 6
      %v3002 = vrot.slane %v2952, 2
      %v3003 = vrot.slane %v2952, 4
      %v3004 = vrot.slane %v2952, 6
      %v3041 = vadd.f32 %v2730, %v2919
      %v3042 = vadd.f32 %v2731, %v2969
      %v3043 = vadd.f32 %v2732, %v2970
      %v3044 = vadd.f32 %v2733, %v2971
      %v3045 = vadd.f32 %v2734, %v2922
      %v3046 = vadd.f32 %v2735, %v2972
      %v3047 = vadd.f32 %v2736, %v2973
      %v3048 = vadd.f32 %v2737, %v2974
      %v3049 = vadd.f32 %v2738, %v2925
      %v3050 = vadd.f32 %v2739, %v2975
      %v3051 = vadd.f32 %v2740, %v2976
      %v3052 = vadd.f32 %v2741, %v2977
      %v3053 = vadd.f32 %v2742, %v2928
      %v3054 = vadd.f32 %v2743, %v2978
      %v3055 = vadd.f32 %v2744, %v2979
      %v3056 = vadd.f32 %v2745, %v2980
      %v3057 = vadd.f32 %v2746, %v2931
      %v3058 = vadd.f32 %v2747, %v2981
      %v3059 = vadd.f32 %v2748, %v2982
      %v3060 = vadd.f32 %v2749, %v2983
      %v3061 = vadd.f32 %v2750, %v2934
      %v3062 = vadd.f32 %v2751, %v2984
      %v3063 = vadd.f32 %v2752, %v2985
      %v3064 = vadd.f32 %v2753, %v2986
      %v3065 = vadd.f32 %v2754, %v2937
      %v3066 = vadd.f32 %v2755, %v2987
      %v3067 = vadd.f32 %v2756, %v2988
      %v3068 = vadd.f32 %v2757, %v2989
      %v3069 = vadd.f32 %v2758, %v2940
      %v3070 = vadd.f32 %v2759, %v2990
      %v3071 = vadd.f32 %v2760, %v2991
      %v3072 = vadd.f32 %v2761, %v2992
      %v3073 = vadd.f32 %v2762, %v2943
      %v3074 = vadd.f32 %v2763, %v2993
      %v3075 = vadd.f32 %v2764, %v2994
      %v3076 = vadd.f32 %v2765, %v2995
      %v3077 = vadd.f32 %v2766, %v2946
      %v3078 = vadd.f32 %v2767, %v2996
      %v3079 = vadd.f32 %v2768, %v2997
      %v3080 = vadd.f32 %v2769, %v2998
      %v3081 = vadd.f32 %v2770, %v2949
      %v3082 = vadd.f32 %v2771, %v2999
      %v3083 = vadd.f32 %v2772, %v3000
      %v3084 = vadd.f32 %v2773, %v3001
      %v3085 = vadd.f32 %v2774, %v2952
      %v3086 = vadd.f32 %v2775, %v3002
      %v3087 = vadd.f32 %v2776, %v3003
      %v3088 = vadd.f32 %v2777, %v3004
      %v3089 = vadd.f32 %v2778, %v2955
      %s3090 = scalar_lea.vmem %s5, 1024
      %v3091 = vld [vmem:[%s3090] sm:$0xff]
      %v3092 = vld [vmem:[%s3090 + $0x8] sm:$0xff]
      %v3093 = vld [vmem:[%s3090 + $0x10] sm:$0xff]
      %v3094 = vld [vmem:[%s3090 + $0x18] sm:$0xff]
      %v3095 = vld [vmem:[%s3090 + $0x20] sm:$0xff]
      %v3096 = vld [vmem:[%s3090 + $0x28] sm:$0xff]
      %v3097 = vld [vmem:[%s3090 + $0x30] sm:$0xff]
      %v3098 = vld [vmem:[%s3090 + $0x38] sm:$0xff]
      %v3099 = vld [vmem:[%s3090 + $0x40] sm:$0xff]
      %v3100 = vld [vmem:[%s3090 + $0x48] sm:$0xff]
      %v3101 = vld [vmem:[%s3090 + $0x50] sm:$0xff]
      %v3102 = vld [vmem:[%s3090 + $0x58] sm:$0xff]
      %v3103 = vld [vmem:[%s3090 + $0x60] sm:$0xff]
      %v3104 = vld [vmem:[%s3090 + $0x68] sm:$0xff]
      %v3105 = vld [vmem:[%s3090 + $0x70] sm:$0xff]
      %v3106 = vld [vmem:[%s3090 + $0x78] sm:$0xff]
      %3107 = vst.sshfl [vmem:[#allocation1] sm:$0xff pattern:$0x73625140] %v538
      %3108 = vst.sshfl [vmem:[#allocation1 + $0x20] sm:$0xff pattern:$0x73625140] %v539
      %s3109 = scalar_lea.vmem [#allocation1], 1
      %v3110 = vld [vmem:[%s3109] ss:$4 sm:$0xff]
      %s3111 = scalar_lea.vmem [#allocation1], 2
      %v3112 = vld [vmem:[%s3111] ss:$4 sm:$0xff]
      %s3113 = scalar_lea.vmem [#allocation1], 3
      %v3114 = vld [vmem:[%s3113] ss:$4 sm:$0xff]
      %s3115 = scalar_lea.vmem [#allocation1], 32
      %v3116 = vld [vmem:[%s3115] ss:$4 sm:$0xff]
      %s3117 = scalar_lea.vmem [#allocation1], 33
      %v3118 = vld [vmem:[%s3117] ss:$4 sm:$0xff]
      %s3119 = scalar_lea.vmem [#allocation1], 34
      %v3120 = vld [vmem:[%s3119] ss:$4 sm:$0xff]
      %s3121 = scalar_lea.vmem [#allocation1], 35
      %v3122 = vld [vmem:[%s3121] ss:$4 sm:$0xff]
      %3123 = vst.sshfl [vmem:[#allocation1] sm:$0xff pattern:$0x73625140] %v540
      %3124 = vst.sshfl [vmem:[#allocation1 + $0x20] sm:$0xff pattern:$0x73625140] %v541
      %v3125 = vld [vmem:[%s3109] ss:$4 sm:$0xff]
      %v3126 = vld [vmem:[%s3111] ss:$4 sm:$0xff]
      %v3127 = vld [vmem:[%s3113] ss:$4 sm:$0xff]
      %v3128 = vld [vmem:[%s3115] ss:$4 sm:$0xff]
      %v3129 = vld [vmem:[%s3117] ss:$4 sm:$0xff]
      %v3130 = vld [vmem:[%s3119] ss:$4 sm:$0xff]
      %v3131 = vld [vmem:[%s3121] ss:$4 sm:$0xff]
      %3132 = vst.sshfl [vmem:[#allocation1] sm:$0xff pattern:$0x73625140] %v542
      %3133 = vst.sshfl [vmem:[#allocation1 + $0x20] sm:$0xff pattern:$0x73625140] %v543
      %v3134 = vld [vmem:[%s3109] ss:$4 sm:$0xff]
      %v3135 = vld [vmem:[%s3111] ss:$4 sm:$0xff]
      %v3136 = vld [vmem:[%s3113] ss:$4 sm:$0xff]
      %v3137 = vld [vmem:[%s3115] ss:$4 sm:$0xff]
      %v3138 = vld [vmem:[%s3117] ss:$4 sm:$0xff]
      %v3139 = vld [vmem:[%s3119] ss:$4 sm:$0xff]
      %v3140 = vld [vmem:[%s3121] ss:$4 sm:$0xff]
      %3141 = vst.sshfl [vmem:[#allocation1] sm:$0xff pattern:$0x73625140] %v544
      %3142 = vst.sshfl [vmem:[#allocation1 + $0x20] sm:$0xff pattern:$0x73625140] %v545
      %v3143 = vld [vmem:[%s3109] ss:$4 sm:$0xff]
      %v3144 = vld [vmem:[%s3111] ss:$4 sm:$0xff]
      %v3145 = vld [vmem:[%s3113] ss:$4 sm:$0xff]
      %v3146 = vld [vmem:[%s3115] ss:$4 sm:$0xff]
      %v3147 = vld [vmem:[%s3117] ss:$4 sm:$0xff]
      %v3148 = vld [vmem:[%s3119] ss:$4 sm:$0xff]
      %v3149 = vld [vmem:[%s3121] ss:$4 sm:$0xff]
      %3150 = vst.sshfl [vmem:[#allocation1] sm:$0xff pattern:$0x73625140] %v546
      %3151 = vst.sshfl [vmem:[#allocation1 + $0x20] sm:$0xff pattern:$0x73625140] %v547
      %v3152 = vld [vmem:[%s3109] ss:$4 sm:$0xff]
      %v3153 = vld [vmem:[%s3111] ss:$4 sm:$0xff]
      %v3154 = vld [vmem:[%s3113] ss:$4 sm:$0xff]
      %v3155 = vld [vmem:[%s3115] ss:$4 sm:$0xff]
      %v3156 = vld [vmem:[%s3117] ss:$4 sm:$0xff]
      %v3157 = vld [vmem:[%s3119] ss:$4 sm:$0xff]
      %v3158 = vld [vmem:[%s3121] ss:$4 sm:$0xff]
      %3159 = vst.sshfl [vmem:[#allocation1] sm:$0xff pattern:$0x73625140] %v548
      %3160 = vst.sshfl [vmem:[#allocation1 + $0x20] sm:$0xff pattern:$0x73625140] %v549
      %v3161 = vld [vmem:[%s3109] ss:$4 sm:$0xff]
      %v3162 = vld [vmem:[%s3111] ss:$4 sm:$0xff]
      %v3163 = vld [vmem:[%s3113] ss:$4 sm:$0xff]
      %v3164 = vld [vmem:[%s3115] ss:$4 sm:$0xff]
      %v3165 = vld [vmem:[%s3117] ss:$4 sm:$0xff]
      %v3166 = vld [vmem:[%s3119] ss:$4 sm:$0xff]
      %v3167 = vld [vmem:[%s3121] ss:$4 sm:$0xff]
      %3168 = vst.sshfl [vmem:[#allocation1] sm:$0xff pattern:$0x73625140] %v550
      %3169 = vst.sshfl [vmem:[#allocation1 + $0x20] sm:$0xff pattern:$0x73625140] %v551
      %v3170 = vld [vmem:[%s3109] ss:$4 sm:$0xff]
      %v3171 = vld [vmem:[%s3111] ss:$4 sm:$0xff]
      %v3172 = vld [vmem:[%s3113] ss:$4 sm:$0xff]
      %v3173 = vld [vmem:[%s3115] ss:$4 sm:$0xff]
      %v3174 = vld [vmem:[%s3117] ss:$4 sm:$0xff]
      %v3175 = vld [vmem:[%s3119] ss:$4 sm:$0xff]
      %v3176 = vld [vmem:[%s3121] ss:$4 sm:$0xff]
      %3177 = vst [vmem:[#allocation1] ss:$4 sm:$0xff] %v3110
      %s3178 = scalar_lea.vmem [#allocation1], 1
      %3179 = vst [vmem:[%s3178] ss:$4 sm:$0xff] %v3112
      %s3180 = scalar_lea.vmem [#allocation1], 2
      %3181 = vst [vmem:[%s3180] ss:$4 sm:$0xff] %v3114
      %s3182 = scalar_lea.vmem [#allocation1], 3
      %3183 = vst [vmem:[%s3182] ss:$4 sm:$0xff] %v3116
      %s3184 = scalar_lea.vmem [#allocation1], 32
      %3185 = vst [vmem:[%s3184] ss:$4 sm:$0xff] %v3118
      %s3186 = scalar_lea.vmem [#allocation1], 33
      %3187 = vst [vmem:[%s3186] ss:$4 sm:$0xff] %v3120
      %s3188 = scalar_lea.vmem [#allocation1], 34
      %3189 = vst [vmem:[%s3188] ss:$4 sm:$0xff] %v3122
      %s3190 = scalar_lea.vmem [#allocation1], 35
      %3191 = vst [vmem:[%s3190] ss:$4 sm:$0xff] %v3125
      %v3192 = vld.sshfl [vmem:[#allocation1] sm:$0xff pattern:$0x73625140]
      %v3193 = vld.sshfl [vmem:[#allocation1 + $0x20] sm:$0xff pattern:$0x73625140]
      %3194 = vst [vmem:[#allocation1] ss:$4 sm:$0xff] %v3126
      %3195 = vst [vmem:[%s3178] ss:$4 sm:$0xff] %v3127
      %3196 = vst [vmem:[%s3180] ss:$4 sm:$0xff] %v3128
      %3197 = vst [vmem:[%s3182] ss:$4 sm:$0xff] %v3129
      %3198 = vst [vmem:[%s3184] ss:$4 sm:$0xff] %v3130
      %3199 = vst [vmem:[%s3186] ss:$4 sm:$0xff] %v3131
      %3200 = vst [vmem:[%s3188] ss:$4 sm:$0xff] %v3134
      %3201 = vst [vmem:[%s3190] ss:$4 sm:$0xff] %v3135
      %v3202 = vld.sshfl [vmem:[#allocation1] sm:$0xff pattern:$0x73625140]
      %v3203 = vld.sshfl [vmem:[#allocation1 + $0x20] sm:$0xff pattern:$0x73625140]
      %3204 = vst [vmem:[#allocation1] ss:$4 sm:$0xff] %v3136
      %3205 = vst [vmem:[%s3178] ss:$4 sm:$0xff] %v3137
      %3206 = vst [vmem:[%s3180] ss:$4 sm:$0xff] %v3138
      %3207 = vst [vmem:[%s3182] ss:$4 sm:$0xff] %v3139
      %3208 = vst [vmem:[%s3184] ss:$4 sm:$0xff] %v3140
      %3209 = vst [vmem:[%s3186] ss:$4 sm:$0xff] %v3143
      %3210 = vst [vmem:[%s3188] ss:$4 sm:$0xff] %v3144
      %3211 = vst [vmem:[%s3190] ss:$4 sm:$0xff] %v3145
      %v3212 = vld.sshfl [vmem:[#allocation1] sm:$0xff pattern:$0x73625140]
      %v3213 = vld.sshfl [vmem:[#allocation1 + $0x20] sm:$0xff pattern:$0x73625140]
      %3214 = vst [vmem:[#allocation1] ss:$4 sm:$0xff] %v3146
      %3215 = vst [vmem:[%s3178] ss:$4 sm:$0xff] %v3147
      %3216 = vst [vmem:[%s3180] ss:$4 sm:$0xff] %v3148
      %3217 = vst [vmem:[%s3182] ss:$4 sm:$0xff] %v3149
      %3218 = vst [vmem:[%s3184] ss:$4 sm:$0xff] %v3152
      %3219 = vst [vmem:[%s3186] ss:$4 sm:$0xff] %v3153
      %3220 = vst [vmem:[%s3188] ss:$4 sm:$0xff] %v3154
      %3221 = vst [vmem:[%s3190] ss:$4 sm:$0xff] %v3155
      %v3222 = vld.sshfl [vmem:[#allocation1] sm:$0xff pattern:$0x73625140]
      %v3223 = vld.sshfl [vmem:[#allocation1 + $0x20] sm:$0xff pattern:$0x73625140]
      %3224 = vst [vmem:[#allocation1] ss:$4 sm:$0xff] %v3156
      %3225 = vst [vmem:[%s3178] ss:$4 sm:$0xff] %v3157
      %3226 = vst [vmem:[%s3180] ss:$4 sm:$0xff] %v3158
      %3227 = vst [vmem:[%s3182] ss:$4 sm:$0xff] %v3161
      %3228 = vst [vmem:[%s3184] ss:$4 sm:$0xff] %v3162
      %3229 = vst [vmem:[%s3186] ss:$4 sm:$0xff] %v3163
      %3230 = vst [vmem:[%s3188] ss:$4 sm:$0xff] %v3164
      %3231 = vst [vmem:[%s3190] ss:$4 sm:$0xff] %v3165
      %v3232 = vld.sshfl [vmem:[#allocation1] sm:$0xff pattern:$0x73625140]
      %v3233 = vld.sshfl [vmem:[#allocation1 + $0x20] sm:$0xff pattern:$0x73625140]
      %3234 = vst [vmem:[#allocation1] ss:$4 sm:$0xff] %v3166
      %3235 = vst [vmem:[%s3178] ss:$4 sm:$0xff] %v3167
      %3236 = vst [vmem:[%s3180] ss:$4 sm:$0xff] %v3170
      %3237 = vst [vmem:[%s3182] ss:$4 sm:$0xff] %v3171
      %3238 = vst [vmem:[%s3184] ss:$4 sm:$0xff] %v3172
      %3239 = vst [vmem:[%s3186] ss:$4 sm:$0xff] %v3173
      %3240 = vst [vmem:[%s3188] ss:$4 sm:$0xff] %v3174
      %3241 = vst [vmem:[%s3190] ss:$4 sm:$0xff] %v3175
      %v3242 = vld.sshfl [vmem:[#allocation1] sm:$0xff pattern:$0x73625140]
      %v3243 = vld.sshfl [vmem:[#allocation1 + $0x20] sm:$0xff pattern:$0x73625140]
      %3244 = vst [vmem:[#allocation1] ss:$4 sm:$0xff] %v3176
      %v3245 = vld.sshfl [vmem:[#allocation1] sm:$0xff pattern:$0x73625140]
      %3259 = vmatpush.msra.mxu0 %v3106
      %3260 = vmatpush.msra.mxu0 %v3105
      %3261 = vmatpush.msra.mxu0 %v3104
      %3262 = vmatpush.msra.mxu0 %v3103
      %3263 = vmatpush.msra.mxu0 %v3102
      %3264 = vmatpush.msra.mxu0 %v3101
      %3265 = vmatpush.msra.mxu0 %v3100
      %3266 = vmatpush.msra.mxu0 %v3099
      %3267 = vmatpush.msra.mxu0 %v3098
      %3268 = vmatpush.msra.mxu0 %v3097
      %3269 = vmatpush.msra.mxu0 %v3096
      %3270 = vmatpush.msra.mxu0 %v3095
      %3271 = vmatpush.msra.mxu0 %v3094
      %3272 = vmatpush.msra.mxu0 %v3093
      %3273 = vmatpush.msra.mxu0 %v3092
      %3274 = vmatpush.msra.mxu0 %v3091
      %3275 = vmatmul.f32.gmra.mxu0 %v3192
      %v3276 = vpop.f32.mrf.mxu0
      %v3277 = vadd.f32 0.0, %v3276
      %3278 = vmatmul.f32.gmra.mxu0 %v3193
      %v3279 = vpop.f32.mrf.mxu0
      %v3280 = vadd.f32 0.0, %v3279
      %3281 = vmatmul.f32.gmra.mxu0 %v3202
      %v3282 = vpop.f32.mrf.mxu0
      %v3283 = vadd.f32 0.0, %v3282
      %3284 = vmatmul.f32.gmra.mxu0 %v3203
      %v3285 = vpop.f32.mrf.mxu0
      %v3286 = vadd.f32 0.0, %v3285
      %3287 = vmatmul.f32.gmra.mxu0 %v3212
      %v3288 = vpop.f32.mrf.mxu0
      %v3289 = vadd.f32 0.0, %v3288
      %3290 = vmatmul.f32.gmra.mxu0 %v3213
      %v3291 = vpop.f32.mrf.mxu0
      %v3292 = vadd.f32 0.0, %v3291
      %3293 = vmatmul.f32.gmra.mxu0 %v3222
      %v3294 = vpop.f32.mrf.mxu0
      %v3295 = vadd.f32 0.0, %v3294
      %3296 = vmatmul.f32.gmra.mxu0 %v3223
      %v3297 = vpop.f32.mrf.mxu0
      %v3298 = vadd.f32 0.0, %v3297
      %3299 = vmatmul.f32.gmra.mxu0 %v3232
      %v3300 = vpop.f32.mrf.mxu0
      %v3301 = vadd.f32 0.0, %v3300
      %3302 = vmatmul.f32.gmra.mxu0 %v3233
      %v3303 = vpop.f32.mrf.mxu0
      %v3304 = vadd.f32 0.0, %v3303
      %3305 = vmatmul.f32.gmra.mxu0 %v3242
      %v3306 = vpop.f32.mrf.mxu0
      %v3307 = vadd.f32 0.0, %v3306
      %3308 = vmatmul.f32.gmra.mxu0 %v3243
      %v3309 = vpop.f32.mrf.mxu0
      %v3310 = vadd.f32 0.0, %v3309
      %3311 = vmatmul.f32.gmra.mxu0 %v3245
      %v3312 = vpop.f32.mrf.mxu0
      %v3313 = vadd.f32 0.0, %v3312
      %3314 = vdwg.mxu0
      %v3327 = vrot.slane %v3277, 2
      %v3328 = vrot.slane %v3277, 4
      %v3329 = vrot.slane %v3277, 6
      %v3330 = vrot.slane %v3280, 2
      %v3331 = vrot.slane %v3280, 4
      %v3332 = vrot.slane %v3280, 6
      %v3333 = vrot.slane %v3283, 2
      %v3334 = vrot.slane %v3283, 4
      %v3335 = vrot.slane %v3283, 6
      %v3336 = vrot.slane %v3286, 2
      %v3337 = vrot.slane %v3286, 4
      %v3338 = vrot.slane %v3286, 6
      %v3339 = vrot.slane %v3289, 2
      %v3340 = vrot.slane %v3289, 4
      %v3341 = vrot.slane %v3289, 6
      %v3342 = vrot.slane %v3292, 2
      %v3343 = vrot.slane %v3292, 4
      %v3344 = vrot.slane %v3292, 6
      %v3345 = vrot.slane %v3295, 2
      %v3346 = vrot.slane %v3295, 4
      %v3347 = vrot.slane %v3295, 6
      %v3348 = vrot.slane %v3298, 2
      %v3349 = vrot.slane %v3298, 4
      %v3350 = vrot.slane %v3298, 6
      %v3351 = vrot.slane %v3301, 2
      %v3352 = vrot.slane %v3301, 4
      %v3353 = vrot.slane %v3301, 6
      %v3354 = vrot.slane %v3304, 2
      %v3355 = vrot.slane %v3304, 4
      %v3356 = vrot.slane %v3304, 6
      %v3357 = vrot.slane %v3307, 2
      %v3358 = vrot.slane %v3307, 4
      %v3359 = vrot.slane %v3307, 6
      %v3360 = vrot.slane %v3310, 2
      %v3361 = vrot.slane %v3310, 4
      %v3362 = vrot.slane %v3310, 6
      %v3399 = vadd.f32 %v3041, %v3277
      %v3400 = vadd.f32 %v3042, %v3327
      %v3401 = vadd.f32 %v3043, %v3328
      %v3402 = vadd.f32 %v3044, %v3329
      %v3403 = vadd.f32 %v3045, %v3280
      %v3404 = vadd.f32 %v3046, %v3330
      %v3405 = vadd.f32 %v3047, %v3331
      %v3406 = vadd.f32 %v3048, %v3332
      %v3407 = vadd.f32 %v3049, %v3283
      %v3408 = vadd.f32 %v3050, %v3333
      %v3409 = vadd.f32 %v3051, %v3334
      %v3410 = vadd.f32 %v3052, %v3335
      %v3411 = vadd.f32 %v3053, %v3286
      %v3412 = vadd.f32 %v3054, %v3336
      %v3413 = vadd.f32 %v3055, %v3337
      %v3414 = vadd.f32 %v3056, %v3338
      %v3415 = vadd.f32 %v3057, %v3289
      %v3416 = vadd.f32 %v3058, %v3339
      %v3417 = vadd.f32 %v3059, %v3340
      %v3418 = vadd.f32 %v3060, %v3341
      %v3419 = vadd.f32 %v3061, %v3292
      %v3420 = vadd.f32 %v3062, %v3342
      %v3421 = vadd.f32 %v3063, %v3343
      %v3422 = vadd.f32 %v3064, %v3344
      %v3423 = vadd.f32 %v3065, %v3295
      %v3424 = vadd.f32 %v3066, %v3345
      %v3425 = vadd.f32 %v3067, %v3346
      %v3426 = vadd.f32 %v3068, %v3347
      %v3427 = vadd.f32 %v3069, %v3298
      %v3428 = vadd.f32 %v3070, %v3348
      %v3429 = vadd.f32 %v3071, %v3349
      %v3430 = vadd.f32 %v3072, %v3350
      %v3431 = vadd.f32 %v3073, %v3301
      %v3432 = vadd.f32 %v3074, %v3351
      %v3433 = vadd.f32 %v3075, %v3352
      %v3434 = vadd.f32 %v3076, %v3353
      %v3435 = vadd.f32 %v3077, %v3304
      %v3436 = vadd.f32 %v3078, %v3354
      %v3437 = vadd.f32 %v3079, %v3355
      %v3438 = vadd.f32 %v3080, %v3356
      %v3439 = vadd.f32 %v3081, %v3307
      %v3440 = vadd.f32 %v3082, %v3357
      %v3441 = vadd.f32 %v3083, %v3358
      %v3442 = vadd.f32 %v3084, %v3359
      %v3443 = vadd.f32 %v3085, %v3310
      %v3444 = vadd.f32 %v3086, %v3360
      %v3445 = vadd.f32 %v3087, %v3361
      %v3446 = vadd.f32 %v3088, %v3362
      %v3447 = vadd.f32 %v3089, %v3313
      %3497 = vst [vmem:[#allocation1] ss:$4 sm:$0xff] %v3399
      %s3498 = scalar_lea.vmem [#allocation1], 1
      %3499 = vst [vmem:[%s3498] ss:$4 sm:$0xff] %v3400
      %s3500 = scalar_lea.vmem [#allocation1], 2
      %3501 = vst [vmem:[%s3500] ss:$4 sm:$0xff] %v3401
      %s3502 = scalar_lea.vmem [#allocation1], 3
      %3503 = vst [vmem:[%s3502] ss:$4 sm:$0xff] %v3402
      %s3504 = scalar_lea.vmem [#allocation1], 32
      %3505 = vst [vmem:[%s3504] ss:$4 sm:$0xff] %v3403
      %s3506 = scalar_lea.vmem [#allocation1], 33
      %3507 = vst [vmem:[%s3506] ss:$4 sm:$0xff] %v3404
      %s3508 = scalar_lea.vmem [#allocation1], 34
      %3509 = vst [vmem:[%s3508] ss:$4 sm:$0xff] %v3405
      %v3510 = vld.sshfl [vmem:[#allocation1] sm:$0xff pattern:$0x73625140]
      %v3511 = vld.sshfl [vmem:[#allocation1 + $0x20] sm:$0xff pattern:$0x73625140]
      %3512 = vst [vmem:[#allocation1] ss:$4 sm:$0xff] %v3406
      %3513 = vst [vmem:[%s3498] ss:$4 sm:$0xff] %v3407
      %3514 = vst [vmem:[%s3500] ss:$4 sm:$0xff] %v3408
      %3515 = vst [vmem:[%s3502] ss:$4 sm:$0xff] %v3409
      %3516 = vst [vmem:[%s3504] ss:$4 sm:$0xff] %v3410
      %3517 = vst [vmem:[%s3506] ss:$4 sm:$0xff] %v3411
      %3518 = vst [vmem:[%s3508] ss:$4 sm:$0xff] %v3412
      %v3519 = vld.sshfl [vmem:[#allocation1] sm:$0xff pattern:$0x73625140]
      %v3520 = vld.sshfl [vmem:[#allocation1 + $0x20] sm:$0xff pattern:$0x73625140]
      %3521 = vst [vmem:[#allocation1] ss:$4 sm:$0xff] %v3413
      %3522 = vst [vmem:[%s3498] ss:$4 sm:$0xff] %v3414
      %3523 = vst [vmem:[%s3500] ss:$4 sm:$0xff] %v3415
      %3524 = vst [vmem:[%s3502] ss:$4 sm:$0xff] %v3416
      %3525 = vst [vmem:[%s3504] ss:$4 sm:$0xff] %v3417
      %3526 = vst [vmem:[%s3506] ss:$4 sm:$0xff] %v3418
      %3527 = vst [vmem:[%s3508] ss:$4 sm:$0xff] %v3419
      %v3528 = vld.sshfl [vmem:[#allocation1] sm:$0xff pattern:$0x73625140]
      %v3529 = vld.sshfl [vmem:[#allocation1 + $0x20] sm:$0xff pattern:$0x73625140]
      %3530 = vst [vmem:[#allocation1] ss:$4 sm:$0xff] %v3420
      %3531 = vst [vmem:[%s3498] ss:$4 sm:$0xff] %v3421
      %3532 = vst [vmem:[%s3500] ss:$4 sm:$0xff] %v3422
      %3533 = vst [vmem:[%s3502] ss:$4 sm:$0xff] %v3423
      %3534 = vst [vmem:[%s3504] ss:$4 sm:$0xff] %v3424
      %3535 = vst [vmem:[%s3506] ss:$4 sm:$0xff] %v3425
      %3536 = vst [vmem:[%s3508] ss:$4 sm:$0xff] %v3426
      %v3537 = vld.sshfl [vmem:[#allocation1] sm:$0xff pattern:$0x73625140]
      %v3538 = vld.sshfl [vmem:[#allocation1 + $0x20] sm:$0xff pattern:$0x73625140]
      %3539 = vst [vmem:[#allocation1] ss:$4 sm:$0xff] %v3427
      %3540 = vst [vmem:[%s3498] ss:$4 sm:$0xff] %v3428
      %3541 = vst [vmem:[%s3500] ss:$4 sm:$0xff] %v3429
      %3542 = vst [vmem:[%s3502] ss:$4 sm:$0xff] %v3430
      %3543 = vst [vmem:[%s3504] ss:$4 sm:$0xff] %v3431
      %3544 = vst [vmem:[%s3506] ss:$4 sm:$0xff] %v3432
      %3545 = vst [vmem:[%s3508] ss:$4 sm:$0xff] %v3433
      %v3546 = vld.sshfl [vmem:[#allocation1] sm:$0xff pattern:$0x73625140]
      %v3547 = vld.sshfl [vmem:[#allocation1 + $0x20] sm:$0xff pattern:$0x73625140]
      %3548 = vst [vmem:[#allocation1] ss:$4 sm:$0xff] %v3434
      %3549 = vst [vmem:[%s3498] ss:$4 sm:$0xff] %v3435
      %3550 = vst [vmem:[%s3500] ss:$4 sm:$0xff] %v3436
      %3551 = vst [vmem:[%s3502] ss:$4 sm:$0xff] %v3437
      %3552 = vst [vmem:[%s3504] ss:$4 sm:$0xff] %v3438
      %3553 = vst [vmem:[%s3506] ss:$4 sm:$0xff] %v3439
      %3554 = vst [vmem:[%s3508] ss:$4 sm:$0xff] %v3440
      %v3555 = vld.sshfl [vmem:[#allocation1] sm:$0xff pattern:$0x73625140]
      %v3556 = vld.sshfl [vmem:[#allocation1 + $0x20] sm:$0xff pattern:$0x73625140]
      %3557 = vst [vmem:[#allocation1] ss:$4 sm:$0xff] %v3441
      %3558 = vst [vmem:[%s3498] ss:$4 sm:$0xff] %v3442
      %3559 = vst [vmem:[%s3500] ss:$4 sm:$0xff] %v3443
      %3560 = vst [vmem:[%s3502] ss:$4 sm:$0xff] %v3444
      %3561 = vst [vmem:[%s3504] ss:$4 sm:$0xff] %v3445
      %3562 = vst [vmem:[%s3506] ss:$4 sm:$0xff] %v3446
      %3563 = vst [vmem:[%s3508] ss:$4 sm:$0xff] %v3447
      %v3564 = vld.sshfl [vmem:[#allocation1] sm:$0xff pattern:$0x73625140]
      %v3565 = vld.sshfl [vmem:[#allocation1 + $0x20] sm:$0xff pattern:$0x73625140]
      %3580 = vst [vmem:[%s462] sm:$0xff] %v3510
      %3581 = vst [vmem:[%s462 + $0x8] sm:$0x3f] %v3511
      %3582 = vst [vmem:[%s462 + $0x10] sm:$0xff] %v3519
      %3583 = vst [vmem:[%s462 + $0x18] sm:$0x3f] %v3520
      %3584 = vst [vmem:[%s462 + $0x20] sm:$0xff] %v3528
      %3585 = vst [vmem:[%s462 + $0x28] sm:$0x3f] %v3529
      %3586 = vst [vmem:[%s462 + $0x30] sm:$0xff] %v3537
      %3587 = vst [vmem:[%s462 + $0x38] sm:$0x3f] %v3538
      %3588 = vst [vmem:[%s462 + $0x40] sm:$0xff] %v3546
      %3589 = vst [vmem:[%s462 + $0x48] sm:$0x3f] %v3547
      %3590 = vst [vmem:[%s462 + $0x50] sm:$0xff] %v3555
      %3591 = vst [vmem:[%s462 + $0x58] sm:$0x3f] %v3556
      %3592 = vst [vmem:[%s462 + $0x60] sm:$0xff] %v3564
      %3593 = vst [vmem:[%s462 + $0x68] sm:$0x3f] %v3565
      %3594 = vst [vmem:[#allocation1] ss:$4 sm:$0xff] %v3399
      %s3595 = scalar_lea.vmem [#allocation1], 1
      %3596 = vst [vmem:[%s3595] ss:$4 sm:$0xff] %v3400
      %s3597 = scalar_lea.vmem [#allocation1], 2
      %3598 = vst [vmem:[%s3597] ss:$4 sm:$0xff] %v3401
      %s3599 = scalar_lea.vmem [#allocation1], 3
      %3600 = vst [vmem:[%s3599] ss:$4 sm:$0xff] %v3402
      %s3601 = scalar_lea.vmem [#allocation1], 32
      %3602 = vst [vmem:[%s3601] ss:$4 sm:$0xff] %v3403
      %s3603 = scalar_lea.vmem [#allocation1], 33
      %3604 = vst [vmem:[%s3603] ss:$4 sm:$0xff] %v3404
      %s3605 = scalar_lea.vmem [#allocation1], 34
      %3606 = vst [vmem:[%s3605] ss:$4 sm:$0xff] %v3405
      %v3607 = vld.sshfl [vmem:[#allocation1] sm:$0xff pattern:$0x73625140]
      %v3608 = vld.sshfl [vmem:[#allocation1 + $0x20] sm:$0xff pattern:$0x73625140]
      %3609 = vst [vmem:[#allocation1] ss:$4 sm:$0xff] %v3406
      %3610 = vst [vmem:[%s3595] ss:$4 sm:$0xff] %v3407
      %3611 = vst [vmem:[%s3597] ss:$4 sm:$0xff] %v3408
      %3612 = vst [vmem:[%s3599] ss:$4 sm:$0xff] %v3409
      %3613 = vst [vmem:[%s3601] ss:$4 sm:$0xff] %v3410
      %3614 = vst [vmem:[%s3603] ss:$4 sm:$0xff] %v3411
      %3615 = vst [vmem:[%s3605] ss:$4 sm:$0xff] %v3412
      %v3616 = vld.sshfl [vmem:[#allocation1] sm:$0xff pattern:$0x73625140]
      %v3617 = vld.sshfl [vmem:[#allocation1 + $0x20] sm:$0xff pattern:$0x73625140]
      %3618 = vst [vmem:[#allocation1] ss:$4 sm:$0xff] %v3413
      %3619 = vst [vmem:[%s3595] ss:$4 sm:$0xff] %v3414
      %3620 = vst [vmem:[%s3597] ss:$4 sm:$0xff] %v3415
      %3621 = vst [vmem:[%s3599] ss:$4 sm:$0xff] %v3416
      %3622 = vst [vmem:[%s3601] ss:$4 sm:$0xff] %v3417
      %3623 = vst [vmem:[%s3603] ss:$4 sm:$0xff] %v3418
      %3624 = vst [vmem:[%s3605] ss:$4 sm:$0xff] %v3419
      %v3625 = vld.sshfl [vmem:[#allocation1] sm:$0xff pattern:$0x73625140]
      %v3626 = vld.sshfl [vmem:[#allocation1 + $0x20] sm:$0xff pattern:$0x73625140]
      %3627 = vst [vmem:[#allocation1] ss:$4 sm:$0xff] %v3420
      %3628 = vst [vmem:[%s3595] ss:$4 sm:$0xff] %v3421
      %3629 = vst [vmem:[%s3597] ss:$4 sm:$0xff] %v3422
      %3630 = vst [vmem:[%s3599] ss:$4 sm:$0xff] %v3423
      %3631 = vst [vmem:[%s3601] ss:$4 sm:$0xff] %v3424
      %3632 = vst [vmem:[%s3603] ss:$4 sm:$0xff] %v3425
      %3633 = vst [vmem:[%s3605] ss:$4 sm:$0xff] %v3426
      %v3634 = vld.sshfl [vmem:[#allocation1] sm:$0xff pattern:$0x73625140]
      %v3635 = vld.sshfl [vmem:[#allocation1 + $0x20] sm:$0xff pattern:$0x73625140]
      %3636 = vst [vmem:[#allocation1] ss:$4 sm:$0xff] %v3427
      %3637 = vst [vmem:[%s3595] ss:$4 sm:$0xff] %v3428
      %3638 = vst [vmem:[%s3597] ss:$4 sm:$0xff] %v3429
      %3639 = vst [vmem:[%s3599] ss:$4 sm:$0xff] %v3430
      %3640 = vst [vmem:[%s3601] ss:$4 sm:$0xff] %v3431
      %3641 = vst [vmem:[%s3603] ss:$4 sm:$0xff] %v3432
      %3642 = vst [vmem:[%s3605] ss:$4 sm:$0xff] %v3433
      %v3643 = vld.sshfl [vmem:[#allocation1] sm:$0xff pattern:$0x73625140]
      %v3644 = vld.sshfl [vmem:[#allocation1 + $0x20] sm:$0xff pattern:$0x73625140]
      %3645 = vst [vmem:[#allocation1] ss:$4 sm:$0xff] %v3434
      %3646 = vst [vmem:[%s3595] ss:$4 sm:$0xff] %v3435
      %3647 = vst [vmem:[%s3597] ss:$4 sm:$0xff] %v3436
      %3648 = vst [vmem:[%s3599] ss:$4 sm:$0xff] %v3437
      %3649 = vst [vmem:[%s3601] ss:$4 sm:$0xff] %v3438
      %3650 = vst [vmem:[%s3603] ss:$4 sm:$0xff] %v3439
      %3651 = vst [vmem:[%s3605] ss:$4 sm:$0xff] %v3440
      %v3652 = vld.sshfl [vmem:[#allocation1] sm:$0xff pattern:$0x73625140]
      %v3653 = vld.sshfl [vmem:[#allocation1 + $0x20] sm:$0xff pattern:$0x73625140]
      %3654 = vst [vmem:[#allocation1] ss:$4 sm:$0xff] %v3441
      %3655 = vst [vmem:[%s3595] ss:$4 sm:$0xff] %v3442
      %3656 = vst [vmem:[%s3597] ss:$4 sm:$0xff] %v3443
      %3657 = vst [vmem:[%s3599] ss:$4 sm:$0xff] %v3444
      %3658 = vst [vmem:[%s3601] ss:$4 sm:$0xff] %v3445
      %3659 = vst [vmem:[%s3603] ss:$4 sm:$0xff] %v3446
      %3660 = vst [vmem:[%s3605] ss:$4 sm:$0xff] %v3447
      %v3661 = vld.sshfl [vmem:[#allocation1] sm:$0xff pattern:$0x73625140]
      %v3662 = vld.sshfl [vmem:[#allocation1 + $0x20] sm:$0xff pattern:$0x73625140]
      %vm3677 = vcmask 1045504
      %v3678 = vsel %vm3677, %v3608, 0.0
      %v3679 = vadd.f32 %v3607, %v3678
      %v3680 = vadd.f32 %v3679, %v3616
      %v3681 = vsel %vm3677, %v3617, 0.0
      %v3682 = vadd.f32 %v3680, %v3681
      %v3683 = vadd.f32 %v3682, %v3625
      %v3684 = vsel %vm3677, %v3626, 0.0
      %v3685 = vadd.f32 %v3683, %v3684
      %v3686 = vadd.f32 %v3685, %v3634
      %v3687 = vsel %vm3677, %v3635, 0.0
      %v3688 = vadd.f32 %v3686, %v3687
      %v3689 = vadd.f32 %v3688, %v3643
      %v3690 = vsel %vm3677, %v3644, 0.0
      %v3691 = vadd.f32 %v3689, %v3690
      %v3692 = vadd.f32 %v3691, %v3652
      %v3693 = vsel %vm3677, %v3653, 0.0
      %v3694 = vadd.f32 %v3692, %v3693
      %v3695 = vadd.f32 %v3694, %v3661
      %v3696 = vsel %vm3677, %v3662, 0.0
      %v3697 = vadd.f32 %v3695, %v3696
      %v3698 = vrot.slane %v3697, 4
      %v3699 = vadd.f32 %v3697, %v3698
      %v3700 = vrot.slane %v3699, 2
      %v3701 = vadd.f32 %v3699, %v3700
      %v3702 = vrot.slane %v3701, 1
      %v3703 = vadd.f32 %v3701, %v3702
      %3704 = vst [vmem:[%s469] sm:$0x1] %v3703
      %v3705 = vmul.f32 %v3399, %v3399
      %v3706 = vmul.f32 %v3400, %v3400
      %v3707 = vmul.f32 %v3401, %v3401
      %v3708 = vmul.f32 %v3402, %v3402
      %v3709 = vmul.f32 %v3403, %v3403
      %v3710 = vmul.f32 %v3404, %v3404
      %v3711 = vmul.f32 %v3405, %v3405
      %v3712 = vmul.f32 %v3406, %v3406
      %v3713 = vmul.f32 %v3407, %v3407
      %v3714 = vmul.f32 %v3408, %v3408
      %v3715 = vmul.f32 %v3409, %v3409
      %v3716 = vmul.f32 %v3410, %v3410
      %v3717 = vmul.f32 %v3411, %v3411
      %v3718 = vmul.f32 %v3412, %v3412
      %v3719 = vmul.f32 %v3413, %v3413
      %v3720 = vmul.f32 %v3414, %v3414
      %v3721 = vmul.f32 %v3415, %v3415
      %v3722 = vmul.f32 %v3416, %v3416
      %v3723 = vmul.f32 %v3417, %v3417
      %v3724 = vmul.f32 %v3418, %v3418
      %v3725 = vmul.f32 %v3419, %v3419
      %v3726 = vmul.f32 %v3420, %v3420
      %v3727 = vmul.f32 %v3421, %v3421
      %v3728 = vmul.f32 %v3422, %v3422
      %v3729 = vmul.f32 %v3423, %v3423
      %v3730 = vmul.f32 %v3424, %v3424
      %v3731 = vmul.f32 %v3425, %v3425
      %v3732 = vmul.f32 %v3426, %v3426
      %v3733 = vmul.f32 %v3427, %v3427
      %v3734 = vmul.f32 %v3428, %v3428
      %v3735 = vmul.f32 %v3429, %v3429
      %v3736 = vmul.f32 %v3430, %v3430
      %v3737 = vmul.f32 %v3431, %v3431
      %v3738 = vmul.f32 %v3432, %v3432
      %v3739 = vmul.f32 %v3433, %v3433
      %v3740 = vmul.f32 %v3434, %v3434
      %v3741 = vmul.f32 %v3435, %v3435
      %v3742 = vmul.f32 %v3436, %v3436
      %v3743 = vmul.f32 %v3437, %v3437
      %v3744 = vmul.f32 %v3438, %v3438
      %v3745 = vmul.f32 %v3439, %v3439
      %v3746 = vmul.f32 %v3440, %v3440
      %v3747 = vmul.f32 %v3441, %v3441
      %v3748 = vmul.f32 %v3442, %v3442
      %v3749 = vmul.f32 %v3443, %v3443
      %v3750 = vmul.f32 %v3444, %v3444
      %v3751 = vmul.f32 %v3445, %v3445
      %v3752 = vmul.f32 %v3446, %v3446
      %v3753 = vmul.f32 %v3447, %v3447
      %3803 = vst [vmem:[#allocation1] ss:$4 sm:$0xff] %v3705
      %s3804 = scalar_lea.vmem [#allocation1], 1
      %3805 = vst [vmem:[%s3804] ss:$4 sm:$0xff] %v3706
      %s3806 = scalar_lea.vmem [#allocation1], 2
      %3807 = vst [vmem:[%s3806] ss:$4 sm:$0xff] %v3707
      %s3808 = scalar_lea.vmem [#allocation1], 3
      %3809 = vst [vmem:[%s3808] ss:$4 sm:$0xff] %v3708
      %s3810 = scalar_lea.vmem [#allocation1], 32
      %3811 = vst [vmem:[%s3810] ss:$4 sm:$0xff] %v3709
      %s3812 = scalar_lea.vmem [#allocation1], 33
      %3813 = vst [vmem:[%s3812] ss:$4 sm:$0xff] %v3710
      %s3814 = scalar_lea.vmem [#allocation1], 34
      %3815 = vst [vmem:[%s3814] ss:$4 sm:$0xff] %v3711
      %v3816 = vld.sshfl [vmem:[#allocation1] sm:$0xff pattern:$0x73625140]
      %v3817 = vld.sshfl [vmem:[#allocation1 + $0x20] sm:$0xff pattern:$0x73625140]
      %3818 = vst [vmem:[#allocation1] ss:$4 sm:$0xff] %v3712
      %3819 = vst [vmem:[%s3804] ss:$4 sm:$0xff] %v3713
      %3820 = vst [vmem:[%s3806] ss:$4 sm:$0xff] %v3714
      %3821 = vst [vmem:[%s3808] ss:$4 sm:$0xff] %v3715
      %3822 = vst [vmem:[%s3810] ss:$4 sm:$0xff] %v3716
      %3823 = vst [vmem:[%s3812] ss:$4 sm:$0xff] %v3717
      %3824 = vst [vmem:[%s3814] ss:$4 sm:$0xff] %v3718
      %v3825 = vld.sshfl [vmem:[#allocation1] sm:$0xff pattern:$0x73625140]
      %v3826 = vld.sshfl [vmem:[#allocation1 + $0x20] sm:$0xff pattern:$0x73625140]
      %3827 = vst [vmem:[#allocation1] ss:$4 sm:$0xff] %v3719
      %3828 = vst [vmem:[%s3804] ss:$4 sm:$0xff] %v3720
      %3829 = vst [vmem:[%s3806] ss:$4 sm:$0xff] %v3721
      %3830 = vst [vmem:[%s3808] ss:$4 sm:$0xff] %v3722
      %3831 = vst [vmem:[%s3810] ss:$4 sm:$0xff] %v3723
      %3832 = vst [vmem:[%s3812] ss:$4 sm:$0xff] %v3724
      %3833 = vst [vmem:[%s3814] ss:$4 sm:$0xff] %v3725
      %v3834 = vld.sshfl [vmem:[#allocation1] sm:$0xff pattern:$0x73625140]
      %v3835 = vld.sshfl [vmem:[#allocation1 + $0x20] sm:$0xff pattern:$0x73625140]
      %3836 = vst [vmem:[#allocation1] ss:$4 sm:$0xff] %v3726
      %3837 = vst [vmem:[%s3804] ss:$4 sm:$0xff] %v3727
      %3838 = vst [vmem:[%s3806] ss:$4 sm:$0xff] %v3728
      %3839 = vst [vmem:[%s3808] ss:$4 sm:$0xff] %v3729
      %3840 = vst [vmem:[%s3810] ss:$4 sm:$0xff] %v3730
      %3841 = vst [vmem:[%s3812] ss:$4 sm:$0xff] %v3731
      %3842 = vst [vmem:[%s3814] ss:$4 sm:$0xff] %v3732
      %v3843 = vld.sshfl [vmem:[#allocation1] sm:$0xff pattern:$0x73625140]
      %v3844 = vld.sshfl [vmem:[#allocation1 + $0x20] sm:$0xff pattern:$0x73625140]
      %3845 = vst [vmem:[#allocation1] ss:$4 sm:$0xff] %v3733
      %3846 = vst [vmem:[%s3804] ss:$4 sm:$0xff] %v3734
      %3847 = vst [vmem:[%s3806] ss:$4 sm:$0xff] %v3735
      %3848 = vst [vmem:[%s3808] ss:$4 sm:$0xff] %v3736
      %3849 = vst [vmem:[%s3810] ss:$4 sm:$0xff] %v3737
      %3850 = vst [vmem:[%s3812] ss:$4 sm:$0xff] %v3738
      %3851 = vst [vmem:[%s3814] ss:$4 sm:$0xff] %v3739
      %v3852 = vld.sshfl [vmem:[#allocation1] sm:$0xff pattern:$0x73625140]
      %v3853 = vld.sshfl [vmem:[#allocation1 + $0x20] sm:$0xff pattern:$0x73625140]
      %3854 = vst [vmem:[#allocation1] ss:$4 sm:$0xff] %v3740
      %3855 = vst [vmem:[%s3804] ss:$4 sm:$0xff] %v3741
      %3856 = vst [vmem:[%s3806] ss:$4 sm:$0xff] %v3742
      %3857 = vst [vmem:[%s3808] ss:$4 sm:$0xff] %v3743
      %3858 = vst [vmem:[%s3810] ss:$4 sm:$0xff] %v3744
      %3859 = vst [vmem:[%s3812] ss:$4 sm:$0xff] %v3745
      %3860 = vst [vmem:[%s3814] ss:$4 sm:$0xff] %v3746
      %v3861 = vld.sshfl [vmem:[#allocation1] sm:$0xff pattern:$0x73625140]
      %v3862 = vld.sshfl [vmem:[#allocation1 + $0x20] sm:$0xff pattern:$0x73625140]
      %3863 = vst [vmem:[#allocation1] ss:$4 sm:$0xff] %v3747
      %3864 = vst [vmem:[%s3804] ss:$4 sm:$0xff] %v3748
      %3865 = vst [vmem:[%s3806] ss:$4 sm:$0xff] %v3749
      %3866 = vst [vmem:[%s3808] ss:$4 sm:$0xff] %v3750
      %3867 = vst [vmem:[%s3810] ss:$4 sm:$0xff] %v3751
      %3868 = vst [vmem:[%s3812] ss:$4 sm:$0xff] %v3752
      %3869 = vst [vmem:[%s3814] ss:$4 sm:$0xff] %v3753
      %v3870 = vld.sshfl [vmem:[#allocation1] sm:$0xff pattern:$0x73625140]
      %v3871 = vld.sshfl [vmem:[#allocation1 + $0x20] sm:$0xff pattern:$0x73625140]
      %v3886 = vsel %vm3677, %v3817, 0.0
      %v3887 = vadd.f32 %v3816, %v3886
      %v3888 = vadd.f32 %v3887, %v3825
      %v3889 = vsel %vm3677, %v3826, 0.0
      %v3890 = vadd.f32 %v3888, %v3889
      %v3891 = vadd.f32 %v3890, %v3834
      %v3892 = vsel %vm3677, %v3835, 0.0
      %v3893 = vadd.f32 %v3891, %v3892
      %v3894 = vadd.f32 %v3893, %v3843
      %v3895 = vsel %vm3677, %v3844, 0.0
      %v3896 = vadd.f32 %v3894, %v3895
      %v3897 = vadd.f32 %v3896, %v3852
      %v3898 = vsel %vm3677, %v3853, 0.0
      %v3899 = vadd.f32 %v3897, %v3898
      %v3900 = vadd.f32 %v3899, %v3861
      %v3901 = vsel %vm3677, %v3862, 0.0
      %v3902 = vadd.f32 %v3900, %v3901
      %v3903 = vadd.f32 %v3902, %v3870
      %v3904 = vsel %vm3677, %v3871, 0.0
      %v3905 = vadd.f32 %v3903, %v3904
      %v3906 = vrot.slane %v3905, 4
      %v3907 = vadd.f32 %v3905, %v3906
      %v3908 = vrot.slane %v3907, 2
      %v3909 = vadd.f32 %v3907, %v3908
      %v3910 = vrot.slane %v3909, 1
      %v3911 = vadd.f32 %v3909, %v3910
      %3912 = vst [vmem:[%s469 + $0x1] sm:$0x1] %v3911
      %s3913 = smul.u32 7, %s24
      %p3914 = scmp.lt.s32.totalorder %s23, 1
      %s3915 = scalar_select %p3914, %s23, 1
      %p3916 = scmp.lt.s32.totalorder %s3913, 13
      %s3917 = scalar_select %p3916, %s3913, 13
      %s3918 = smul.addr %s3917, 2
      %s3919 = smul.addr %s3915, 28
      %s3920 = sadd.s32 %s3918, %s3919
      %s3921 = smul.addr %s3920, 8
      %s3922 = scalar_lea.vmem %s6, %s3921
      %s3923 = smul.u32 %s23, 2
      %s3924 = sadd.s32 %s3923, %s24
      %p3925 = scmp.lt.s32.totalorder %s3924, 3
      %s3926 = scalar_select %p3925, %s3924, 3
      %s3927 = smul.addr %s3926, 2
      %s3928 = scalar_lea.vmem %s7, %s3927
      // Predicated region
      $region45: #{bottleneck_block_forward.4} parent=43 // pred_check
        %p3929 = pneg %p208
      $region46: #{bottleneck_block_forward.4} parent=43 // pred_check_branch
        %3931 = sbr.rel (%p3929) target = $region48
      $region47: #{bottleneck_block_forward.4} parent=43 // pred_region
        %s3932 = smul.u32 7, %s24
      $region48: #{bottleneck_block_forward.4} parent=43 // pred_fallthru
        _
      // Predicated region
      $region49: #{bottleneck_block_forward.4} parent=43 // pred_check
        %p3933 = pneg %p238
      $region50: #{bottleneck_block_forward.4} parent=43 // pred_check_branch
        %3935 = sbr.rel (%p3933) target = $region52
      $region51: #{bottleneck_block_forward.4} parent=43 // pred_region
        %s3936 = smul.u32 %s23, 2
        %s3937 = sadd.s32 %s3936, %s24
      $region52: #{bottleneck_block_forward.4} parent=43 // pred_fallthru
        _
    $region44: #{bottleneck_block_forward.4} parent=5 // pred_fallthru
      _
    %p3938 = scmp.le.s32.totalorder 2, %s14
    // Predicated region
    $region53: #{bottleneck_block_forward.4} parent=5 // pred_check
      %p3939 = pneg %p3938
    $region54: #{bottleneck_block_forward.4} parent=5 // pred_check_branch
      %3941 = sbr.rel (%p3939) target = $region56
    $region55: #{bottleneck_block_forward.4} parent=5 // pred_region
      %s3942 = ssub.s32 %s14, 2
      // Predicated region
      $region57: #{bottleneck_block_forward.4} parent=55 // pred_check
        %p3943 = pneg %p214
      $region58: #{bottleneck_block_forward.4} parent=55 // pred_check_branch
        %3945 = sbr.rel (%p3943) target = $region60
      $region59: #{bottleneck_block_forward.4} parent=55 // pred_region
        %s3946 = smul.u32 7, %s26
        %p3947 = scmp.lt.s32.totalorder %s25, 1
        %s3948 = scalar_select %p3947, %s25, 1
        %p3949 = scmp.lt.s32.totalorder %s3946, 13
        %s3950 = scalar_select %p3949, %s3946, 13
        %s3951 = smul.addr %s3950, 2
        %s3952 = smul.addr %s3948, 28
        %s3953 = sadd.s32 %s3951, %s3952
        %s3954 = smul.addr %s3953, 8
        %s3955 = scalar_lea.vmem %s6, %s3954
      $region60: #{bottleneck_block_forward.4} parent=55 // pred_fallthru
        _
      // Predicated region
      $region61: #{bottleneck_block_forward.4} parent=55 // pred_check
        %p3956 = pneg %p244
      $region62: #{bottleneck_block_forward.4} parent=55 // pred_check_branch
        %3958 = sbr.rel (%p3956) target = $region64
      $region63: #{bottleneck_block_forward.4} parent=55 // pred_region
        %s3959 = smul.u32 %s25, 2
        %s3960 = sadd.s32 %s3959, %s26
        %p3961 = scmp.lt.s32.totalorder %s3960, 3
        %s3962 = scalar_select %p3961, %s3960, 3
        %s3963 = smul.addr %s3962, 2
        %s3964 = scalar_lea.vmem %s7, %s3963
      $region64: #{bottleneck_block_forward.4} parent=55 // pred_fallthru
        _
    $region56: #{bottleneck_block_forward.4} parent=5 // pred_fallthru
      _
  $region6: #{bottleneck_block_forward.4} parent=0 // loop_footer
    %s18 = sadd.s32 1, %s14
  $region7: #{bottleneck_block_forward.4} parent=0 // loop_footer_branch
    %13 = sbr.rel target = $region3
  $region8: #{bottleneck_block_forward.4} parent=0 // loop_exit
    _

</llo_original>
